<compile_context>
chip_gen: v5e
topology: v5e:2x2
jax: 0.10.0
libtpu: 0.0.40
codegen_flags: <defaults>
</compile_context>

<pallas_src>
import functools

import jax
import jax.numpy as jnp
import numpy as np
from jax.experimental import pallas as pl
from jax.experimental.pallas import tpu as pltpu


# ---------------------------------------------------------------------------
# Kernel 1: ChannelAttention  (global avg+max pool -> FC (MXU) -> sigmoid
#           -> scale x).  Gridded over batch blocks, "parallel" for megacore.
# ---------------------------------------------------------------------------
def _ca_kernel(x_ref, w1_ref, w2_ref, gate_ref, xs_ref):
    x = x_ref[...]                                    # [Bt, C, HW]
    w1 = w1_ref[...]                                  # [C, C//2]
    w2 = w2_ref[...]                                  # [C//2, C]

    avg = jnp.mean(x, axis=-1)                        # [Bt, C]
    mx = jnp.max(x, axis=-1)                          # [Bt, C]

    def fc(v):                                        # tiny FCs on the MXU
        h = jnp.maximum(jnp.dot(v, w1, preferred_element_type=jnp.float32), 0.0)
        return jnp.dot(h, w2, preferred_element_type=jnp.float32)

    gate = jax.nn.sigmoid(fc(avg) + fc(mx))           # [Bt, C]
    gate_ref[...] = gate[:, :, None]                  # [Bt, C, 1]
    xs_ref[...] = x * gate[:, :, None]                # x * num_list


def channel_attention(x, w1, w2):
    B, C, H, W = x.shape
    HW = H * W
    xf = x.reshape(B, C, HW)

    # Block several samples per grid step when possible (FC M = bt), but keep
    # >= 2 grid steps so v7x can shard the "parallel" axis across both TCs.
    bt = B // 2 if (B >= 4 and B % (B // 2) == 0) else 1

    gate, xs = pl.pallas_call(
        _ca_kernel,
        grid=(B // bt,),
        in_specs=[pl.BlockSpec((bt, C, HW), lambda b: (b, 0, 0)),
                  pl.BlockSpec((C, C // 2), lambda b: (0, 0)),
                  pl.BlockSpec((C // 2, C), lambda b: (0, 0))],
        out_specs=[pl.BlockSpec((bt, C, 1), lambda b: (b, 0, 0)),
                   pl.BlockSpec((bt, C, HW), lambda b: (b, 0, 0))],
        out_shape=(jax.ShapeDtypeStruct((B, C, 1), jnp.float32),
                   jax.ShapeDtypeStruct((B, C, HW), jnp.float32)),
        compiler_params=pltpu.CompilerParams(
            dimension_semantics=("parallel",),
            vmem_limit_bytes=32 * 1024 * 1024),
    )(xf, w1, w2)
    return gate[:, :, 0], xs.reshape(B, C, H, W)


# ---------------------------------------------------------------------------
# Kernel 2: fused 6-op branch + pool/BN epilogues + AttentionModule gate
#           + 6-group sum.  Everything stays in VMEM; the concatenated
#           [B, 6*c4, H, W] tensor never exists in HBM.
# ---------------------------------------------------------------------------
def _branches_attn_kernel(x_ref, maskh_ref, w1_ref, w3_ref, wd_ref,
                          aw1_ref, aw2_ref, gate_ref, out_ref,
                          xpad_ref, stk1_ref, stk2_ref, *, H, W):
    B, c4, HW = x_ref.shape
    Hp, Wp = H + 4, W + 4
    F = Hp * Wp                                       # padded frame length
    G = 2 * Wp + 2                                    # lane halo (max tap shift)
    NEG = jnp.float32(-1e30)

    # ---- in-kernel halo / zero-pad construction (no wrapper pads) ----------
    xpad_ref[...] = jnp.zeros(xpad_ref.shape, xpad_ref.dtype)
    for r in range(H):
        dst = G + (2 + r) * Wp + 2
        xpad_ref[:, :, dst:dst + W] = x_ref[:, :, r * W:(r + 1) * W]

    maskh = maskh_ref[...]                            # [1, 1, F + 2G]

    # ---- shared shifted views: each unique tap offset is sliced ONCE (f32) --
    slc = {}

    def tap(d):
        if d not in slc:
            slc[d] = xpad_ref[:, :, G + d:G + d + F]  # [B, c4, F] f32
        return slc[d]

    def mtap(d):
        return maskh[:, :, G + d:G + d + F]           # [1, 1, F]

    mask0 = mtap(0)                                   # valid-pixel mask

    # ---- branch 0: skip_connect (zero-padded frame is already masked) ------
    skip = tap(0)

    # ---- pools (f32, d=1 taps) + bf16 im2col stacks for the MXU convs ------
    mp = jnp.full((B, c4, F), NEG, jnp.float32)
    ap = jnp.zeros((B, c4, F), jnp.float32)
    for kh in range(3):
        for kw in range(3):
            t = kh * 3 + kw
            d1 = (kh - 1) * Wp + (kw - 1)             # dilation-1 tap offset
            d2 = 2 * (kh - 1) * Wp + 2 * (kw - 1)     # dilation-2 tap offset
            s1 = tap(d1)                              # f32 slice (shared)
            s2 = tap(d2)
            m1 = mtap(d1)
            # max pool: only taps that read a valid pixel participate
            mp = jnp.maximum(mp, jnp.where(m1 > 0.5, s1, NEG))
            # avg pool: zero pad => count_include_pad=True
            ap = ap + s1
            # im2col stacks (bf16 operands for the MXU, f32 accumulation)
            stk1_ref[:, t * c4:(t + 1) * c4, :] = s1.astype(jnp.bfloat16)
            stk2_ref[:, t * c4:(t + 1) * c4, :] = s2.astype(jnp.bfloat16)
    ap = ap * (1.0 / 9.0)

    # ---- branches 1-3: weight-stationary MXU matmuls, K = 9*c4 -------------
    w1 = w1_ref[...]                                  # [c4, c4]     bf16
    w3 = w3_ref[...]                                  # [c4, 9*c4]   bf16
    wd = wd_ref[...]                                  # [c4, 9*c4]   bf16
    c1_l, c3_l, cd_l = [], [], []
    for b in range(B):
        st1 = stk1_ref[b]                             # [9*c4, F] bf16
        st2 = stk2_ref[b]
        ctr = st1[4 * c4:5 * c4, :]                   # center tap = 1x1 input
        c3_l.append(jnp.dot(w3, st1, preferred_element_type=jnp.float32))
        cd_l.append(jnp.dot(wd, st2, preferred_element_type=jnp.float32))
        c1_l.append(jnp.dot(w1, ctr, preferred_element_type=jnp.float32))
    conv1 = jnp.stack(c1_l, axis=0) * mask0           # [B, c4, F]
    conv3 = jnp.stack(c3_l, axis=0) * mask0
    convd = jnp.stack(cd_l, axis=0) * mask0

    # ---- pool BatchNorm (affine=False, batch stats) — single masked pass ----
    n = B * H * W

    def bn(v):
        vm = v * mask0
        s1 = jnp.sum(vm, axis=(0, 2), keepdims=True)
        s2 = jnp.sum(vm * vm, axis=(0, 2), keepdims=True)
        mean = s1 * (1.0 / n)
        var = s2 * (1.0 / n) - mean * mean
        return (vm - mean) * jax.lax.rsqrt(var + 1e-5) * mask0

    mpool = bn(mp)
    apool = bn(ap)

    branches = (skip, conv1, conv3, convd, mpool, apool)

    # ---- AttentionModule: global avg pool -> one FC pair (MXU) -> sigmoid ---
    inv_hw = 1.0 / (H * W)
    ys = [jnp.sum(br, axis=2) * inv_hw for br in branches]      # 6 x [B, c4]
    y_cat = jnp.concatenate(ys, axis=1)                         # [B, 6*c4]
    h = jnp.maximum(jnp.dot(y_cat, aw1_ref[...],
                            preferred_element_type=jnp.float32), 0.0)
    g = jax.nn.sigmoid(jnp.dot(h, aw2_ref[...],
                               preferred_element_type=jnp.float32))  # [B, 6*c4]
    gate_ref[...] = g

    out = jnp.zeros((B, c4, F), jnp.float32)
    for i in range(6):
        out = out + branches[i] * g[:, i * c4:(i + 1) * c4][:, :, None]

    # ---- de-padded output: write only the H*W valid pixels -----------------
    for r in range(H):
        src = (2 + r) * Wp + 2
        out_ref[:, :, r * W:(r + 1) * W] = out[:, :, src:src + W]


def branches_and_attention(xtemp, params):
    """xtemp: [B, c4, H, W] selected channels -> (gate [B,6*c4], out [B,c4,H,W])."""
    B, c4, H, W = xtemp.shape
    Hp, Wp = H + 4, W + 4
    F = Hp * Wp
    G = 2 * Wp + 2
    Fh = F + 2 * G
    HW = H * W

    xflat = xtemp.reshape(B, c4, HW)                  # free (contiguous)

    # validity mask over the haloed padded frame (tiny constant)
    mask2d = np.zeros((Hp, Wp), np.float32)
    mask2d[2:2 + H, 2:2 + W] = 1.0
    maskh_np = np.zeros((1, 1, Fh), np.float32)
    maskh_np[0, 0, G:G + F] = mask2d.reshape(-1)
    maskh = jnp.asarray(maskh_np)

    # weight-stationary conv matrices, tap-major columns (t = kh*3 + kw).
    w1 = params["w_conv1"][:, :, 0, 0].astype(jnp.bfloat16)                    # [c4, c4]
    w3 = params["w_conv3"].transpose(0, 2, 3, 1).reshape(c4, 9 * c4).astype(jnp.bfloat16)
    wd = params["w_dil3"].transpose(0, 2, 3, 1).reshape(c4, 9 * c4).astype(jnp.bfloat16)

    at_w1 = params["at_w1"]                           # [6*c4, hid] f32
    at_w2 = params["at_w2"]                           # [hid, 6*c4] f32

    gate, out = pl.pallas_call(
        functools.partial(_branches_attn_kernel, H=H, W=W),
        out_shape=(jax.ShapeDtypeStruct((B, 6 * c4), jnp.float32),
                   jax.ShapeDtypeStruct((B, c4, HW), jnp.float32)),
        scratch_shapes=[
            pltpu.VMEM((B, c4, Fh), jnp.float32),      # zero-padded haloed frame
            pltpu.VMEM((B, 9 * c4, F), jnp.bfloat16),  # d=1 im2col stack
            pltpu.VMEM((B, 9 * c4, F), jnp.bfloat16),  # d=2 im2col stack
        ],
        compiler_params=pltpu.CompilerParams(
            vmem_limit_bytes=48 * 1024 * 1024),
    )(xflat, maskh, w1, w3, wd, at_w1, at_w2)
    return gate, out.reshape(B, c4, H, W)


# ---------------------------------------------------------------------------
# MixedOp forward (jittable; op_attention returned as one device array)
# ---------------------------------------------------------------------------
def mixed_op_forward(x, params, k=4):
    B, C, H, W = x.shape
    c4 = C // k

    # ChannelAttention + x * num_list
    gate, xs = channel_attention(x, params["ca_w1"], params["ca_w2"])

    # topk over summed gates, gather selected channels
    slist = jnp.sum(gate, axis=0)                     # [C]
    _, idx = jax.lax.top_k(slist, c4)                 # sorted descending
    xtemp = jnp.take(xs, idx, axis=1)                 # [B, c4, H, W]
    # TODO(synk): fuse this gather (scalar-prefetch idx) and the final scatter
    # (input_output_aliases on xs) into the branches kernel to save about one
    # activation HBM pass per forward.

    # fused: 6 candidate ops + pool BN + AttentionModule gate + group sum
    gate2, out = branches_and_attention(xtemp, params)   # [B,6c4], [B,c4,H,W]

    # op_attention: one fused device-side expression (single host transfer later)
    g6 = gate2.reshape(B, 6, c4)
    n = B * c4
    sums = jnp.sum(g6, axis=(0, 2))                   # [6]
    mean = sums / n
    var = jnp.sum((g6 - mean[None, :, None]) ** 2, axis=(0, 2)) / (n - 1)
    op_attention = sums - jnp.sqrt(var)               # [6]

    # scatter the mixed output back into the selected channels
    # (stride=1 path: spatial sizes match, no extra MaxPool2d(2,2))
    x_out = xs.at[:, idx, :, :].set(out)
    return x_out, op_attention


# ---------------------------------------------------------------------------
# Demo
# ---------------------------------------------------------------------------
if __name__ == "__main__":
    B, C, H, W = 2, 16, 8, 8
    k = 4
    c4 = C // k
    C6 = 6 * c4                                       # AttentionModule channels = 24
    ratio = 8

    key = jax.random.PRNGKey(0)
    ks = jax.random.split(key, 8)
    x = jax.random.normal(ks[0], (B, C, H, W), jnp.float32)

    params = {
        "ca_w1": 0.2 * jax.random.normal(ks[1], (C, C // 2), jnp.float32),
        "ca_w2": 0.2 * jax.random.normal(ks[2], (C // 2, C), jnp.float32),
        "w_conv1": 0.2 * jax.random.normal(ks[3], (c4, c4, 1, 1), jnp.float32),
        "w_conv3": 0.1 * jax.random.normal(ks[4], (c4, c4, 3, 3), jnp.float32),
        "w_dil3": 0.1 * jax.random.normal(ks[5], (c4, c4, 3, 3), jnp.float32),
        "at_w1": 0.2 * jax.random.normal(ks[6], (C6, C6 // ratio), jnp.float32),
        "at_w2": 0.2 * jax.random.normal(ks[7], (C6 // ratio, C6), jnp.float32),
    }

    fwd = jax.jit(functools.partial(mixed_op_forward, k=k))
    x_out, op_att = fwd(x, params)
    jax.block_until_ready(x_out)
    jax.block_until_ready(op_att)

    op_attention = [float(v) for v in jax.device_get(op_att)]  # one transfer
    assert x_out.shape == (B, C, H, W)
    assert len(op_attention) == 6
    assert bool(jnp.all(jnp.isfinite(x_out)))
    print("KERNEL_OK")
</pallas_src>

<mosaic_0001>
module attributes {stable_mosaic.version = 11 : i64} {
  func.func @_ca_kernel(%arg0: i32, %arg1: memref<1x16x64xf32, #tpu.memory_space<vmem>>, %arg2: memref<16x8xf32, #tpu.memory_space<vmem>>, %arg3: memref<8x16xf32, #tpu.memory_space<vmem>>, %arg4: memref<1x16x1xf32, #tpu.memory_space<vmem>>, %arg5: memref<1x16x64xf32, #tpu.memory_space<vmem>>) attributes {dimension_semantics = [#tpu.dimension_semantics<parallel>], iteration_bounds = array<i64: 2>, scalar_prefetch = 0 : i64, scratch_operands = 0 : i64, tpu.core_type = #tpu.core_type<tc>, window_params = [{transform_indices = @transform_0, window_bounds = array<i64: 1, 16, 64>}, {pipeline_mode = #tpu.pipeline_mode<synchronous>, transform_indices = @transform_1, window_bounds = array<i64: 16, 8>}, {pipeline_mode = #tpu.pipeline_mode<synchronous>, transform_indices = @transform_2, window_bounds = array<i64: 8, 16>}, {transform_indices = @transform_3, window_bounds = array<i64: 1, 16, 1>}, {transform_indices = @transform_4, window_bounds = array<i64: 1, 16, 64>}]} {
    %c0 = arith.constant 0 : index
    %c0_0 = arith.constant 0 : index
    %c0_1 = arith.constant 0 : index
    %0 = vector.load %arg1[%c0, %c0_0, %c0_1] : memref<1x16x64xf32, #tpu.memory_space<vmem>>, vector<1x16x64xf32>
    %c0_2 = arith.constant 0 : index
    %c0_3 = arith.constant 0 : index
    %1 = vector.load %arg2[%c0_2, %c0_3] : memref<16x8xf32, #tpu.memory_space<vmem>>, vector<16x8xf32>
    %c0_4 = arith.constant 0 : index
    %c0_5 = arith.constant 0 : index
    %2 = vector.load %arg3[%c0_4, %c0_5] : memref<8x16xf32, #tpu.memory_space<vmem>>, vector<8x16xf32>
    %cst = arith.constant dense<0.000000e+00> : vector<1x16xf32>
    %3 = vector.multi_reduction <add>, %0, %cst [2] : vector<1x16x64xf32> to vector<1x16xf32>
    %cst_6 = arith.constant 6.400000e+01 : f32
    %4 = vector.broadcast %cst_6 : f32 to vector<1x16xf32>
    %5 = arith.divf %3, %4 : vector<1x16xf32>
    %cst_7 = arith.constant dense<0xFF800000> : vector<1x16xf32>
    %6 = vector.multi_reduction <maximumf>, %0, %cst_7 [2] : vector<1x16x64xf32> to vector<1x16xf32>
    %cst_8 = arith.constant dense<0.000000e+00> : vector<1x8xf32>
    %7 = tpu.matmul %5, %1, %cst_8 {dimension_numbers = #tpu.dot_dimension_numbers<[1], [0], [0], [1], [0, 0, 1, 1], [], []>} : vector<1x16xf32>, vector<16x8xf32>, vector<1x8xf32> -> vector<1x8xf32>
    %cst_9 = arith.constant 0.000000e+00 : f32
    %8 = vector.broadcast %cst_9 : f32 to vector<1x8xf32>
    %9 = arith.maximumf %7, %8 : vector<1x8xf32>
    %cst_10 = arith.constant dense<0.000000e+00> : vector<1x16xf32>
    %10 = tpu.matmul %9, %2, %cst_10 {dimension_numbers = #tpu.dot_dimension_numbers<[1], [0], [0], [1], [0, 0, 1, 1], [], []>} : vector<1x8xf32>, vector<8x16xf32>, vector<1x16xf32> -> vector<1x16xf32>
    %cst_11 = arith.constant dense<0.000000e+00> : vector<1x8xf32>
    %11 = tpu.matmul %6, %1, %cst_11 {dimension_numbers = #tpu.dot_dimension_numbers<[1], [0], [0], [1], [0, 0, 1, 1], [], []>} : vector<1x16xf32>, vector<16x8xf32>, vector<1x8xf32> -> vector<1x8xf32>
    %cst_12 = arith.constant 0.000000e+00 : f32
    %12 = vector.broadcast %cst_12 : f32 to vector<1x8xf32>
    %13 = arith.maximumf %11, %12 : vector<1x8xf32>
    %cst_13 = arith.constant dense<0.000000e+00> : vector<1x16xf32>
    %14 = tpu.matmul %13, %2, %cst_13 {dimension_numbers = #tpu.dot_dimension_numbers<[1], [0], [0], [1], [0, 0, 1, 1], [], []>} : vector<1x8xf32>, vector<8x16xf32>, vector<1x16xf32> -> vector<1x16xf32>
    %15 = arith.addf %10, %14 : vector<1x16xf32>
    %16 = arith.negf %15 : vector<1x16xf32>
    %17 = math.exp %16 : vector<1x16xf32>
    %cst_14 = arith.constant 1.000000e+00 : f32
    %18 = vector.broadcast %cst_14 : f32 to vector<1x16xf32>
    %19 = arith.addf %18, %17 : vector<1x16xf32>
    %20 = arith.divf %18, %19 : vector<1x16xf32>
    %21 = vector.shape_cast %20 : vector<1x16xf32> to vector<1x16x1xf32>
    %c0_15 = arith.constant 0 : index
    %c0_16 = arith.constant 0 : index
    %c0_17 = arith.constant 0 : index
    %22 = vector.load %arg4[%c0_15, %c0_16, %c0_17] : memref<1x16x1xf32, #tpu.memory_space<vmem>>, vector<1x16x1xf32>
    tpu.vector_store %arg4[%c0_15, %c0_16, %c0_17], %21 {strides = array<i32>} : memref<1x16x1xf32, #tpu.memory_space<vmem>>, vector<1x16x1xf32>,
    %23 = vector.shape_cast %20 : vector<1x16xf32> to vector<1x16x1xf32>
    %24 = vector.broadcast %23 : vector<1x16x1xf32> to vector<1x16x64xf32>
    %25 = arith.mulf %0, %24 : vector<1x16x64xf32>
    %c0_18 = arith.constant 0 : index
    %c0_19 = arith.constant 0 : index
    %c0_20 = arith.constant 0 : index
    %26 = vector.load %arg5[%c0_18, %c0_19, %c0_20] : memref<1x16x64xf32, #tpu.memory_space<vmem>>, vector<1x16x64xf32>
    tpu.vector_store %arg5[%c0_18, %c0_19, %c0_20], %25 {strides = array<i32>} : memref<1x16x64xf32, #tpu.memory_space<vmem>>, vector<1x16x64xf32>,
    return
  }
  func.func @transform_0(%arg0: i32) -> (i32, i32, i32) {
    %c0_i32 = arith.constant 0 : i32
    %c0_i32_0 = arith.constant 0 : i32
    %c0_i32_1 = arith.constant 0 : i32
    return %arg0, %c0_i32, %c0_i32_0 : i32, i32, i32
  }
  func.func @transform_1(%arg0: i32) -> (i32, i32) {
    %c0_i32 = arith.constant 0 : i32
    %c0_i32_0 = arith.constant 0 : i32
    %c0_i32_1 = arith.constant 0 : i32
    return %c0_i32, %c0_i32_0 : i32, i32
  }
  func.func @transform_2(%arg0: i32) -> (i32, i32) {
    %c0_i32 = arith.constant 0 : i32
    %c0_i32_0 = arith.constant 0 : i32
    %c0_i32_1 = arith.constant 0 : i32
    return %c0_i32, %c0_i32_0 : i32, i32
  }
  func.func @transform_3(%arg0: i32) -> (i32, i32, i32) {
    %c0_i32 = arith.constant 0 : i32
    %c0_i32_0 = arith.constant 0 : i32
    %c0_i32_1 = arith.constant 0 : i32
    return %arg0, %c0_i32, %c0_i32_0 : i32, i32, i32
  }
  func.func @transform_4(%arg0: i32) -> (i32, i32, i32) {
    %c0_i32 = arith.constant 0 : i32
    %c0_i32_0 = arith.constant 0 : i32
    %c0_i32_1 = arith.constant 0 : i32
    return %arg0, %c0_i32, %c0_i32_0 : i32, i32, i32
  }
}

module attributes {stable_mosaic.version = 11 : i64} {
  func.func @_branches_attn_kernel(%arg0: memref<2x4x64xf32, #tpu.memory_space<vmem>>, %arg1: memref<1x1x196xf32, #tpu.memory_space<vmem>>, %arg2: memref<4x4xbf16, #tpu.memory_space<vmem>>, %arg3: memref<4x36xbf16, #tpu.memory_space<vmem>>, %arg4: memref<4x36xbf16, #tpu.memory_space<vmem>>, %arg5: memref<24x3xf32, #tpu.memory_space<vmem>>, %arg6: memref<3x24xf32, #tpu.memory_space<vmem>>, %arg7: memref<2x24xf32, #tpu.memory_space<vmem>>, %arg8: memref<2x4x64xf32, #tpu.memory_space<vmem>>, %arg9: memref<2x4x196xf32, #tpu.memory_space<vmem>>, %arg10: memref<2x36x144xbf16, #tpu.memory_space<vmem>>, %arg11: memref<2x36x144xbf16, #tpu.memory_space<vmem>>) attributes {dimension_semantics = [], scalar_prefetch = 0 : i64, scratch_operands = 3 : i64, tpu.core_type = #tpu.core_type<tc>} {
    %cst = arith.constant 0.000000e+00 : f32
    %0 = vector.broadcast %cst : f32 to vector<2x4x196xf32>
    %c0 = arith.constant 0 : index
    %c0_0 = arith.constant 0 : index
    %c0_1 = arith.constant 0 : index
    %1 = vector.load %arg9[%c0, %c0_0, %c0_1] : memref<2x4x196xf32, #tpu.memory_space<vmem>>, vector<2x4x196xf32>
    tpu.vector_store %arg9[%c0, %c0_0, %c0_1], %0 {strides = array<i32>} : memref<2x4x196xf32, #tpu.memory_space<vmem>>, vector<2x4x196xf32>,
    %c0_2 = arith.constant 0 : index
    %c0_3 = arith.constant 0 : index
    %c0_4 = arith.constant 0 : index
    %2 = vector.load %arg0[%c0_2, %c0_3, %c0_4] : memref<2x4x64xf32, #tpu.memory_space<vmem>>, vector<2x4x8xf32>
    %c0_5 = arith.constant 0 : index
    %c0_6 = arith.constant 0 : index
    %c52 = arith.constant 52 : index
    %3 = vector.load %arg9[%c0_5, %c0_6, %c52] : memref<2x4x196xf32, #tpu.memory_space<vmem>>, vector<2x4x8xf32>
    tpu.vector_store %arg9[%c0_5, %c0_6, %c52], %2 {strides = array<i32>} : memref<2x4x196xf32, #tpu.memory_space<vmem>>, vector<2x4x8xf32>,
    %c0_7 = arith.constant 0 : index
    %c0_8 = arith.constant 0 : index
    %c8 = arith.constant 8 : index
    %4 = vector.load %arg0[%c0_7, %c0_8, %c8] : memref<2x4x64xf32, #tpu.memory_space<vmem>>, vector<2x4x8xf32>
    %c0_9 = arith.constant 0 : index
    %c0_10 = arith.constant 0 : index
    %c64 = arith.constant 64 : index
    %5 = vector.load %arg9[%c0_9, %c0_10, %c64] : memref<2x4x196xf32, #tpu.memory_space<vmem>>, vector<2x4x8xf32>
    tpu.vector_store %arg9[%c0_9, %c0_10, %c64], %4 {strides = array<i32>} : memref<2x4x196xf32, #tpu.memory_space<vmem>>, vector<2x4x8xf32>,
    %c0_11 = arith.constant 0 : index
    %c0_12 = arith.constant 0 : index
    %c16 = arith.constant 16 : index
    %6 = vector.load %arg0[%c0_11, %c0_12, %c16] : memref<2x4x64xf32, #tpu.memory_space<vmem>>, vector<2x4x8xf32>
    %c0_13 = arith.constant 0 : index
    %c0_14 = arith.constant 0 : index
    %c76 = arith.constant 76 : index
    %7 = vector.load %arg9[%c0_13, %c0_14, %c76] : memref<2x4x196xf32, #tpu.memory_space<vmem>>, vector<2x4x8xf32>
    tpu.vector_store %arg9[%c0_13, %c0_14, %c76], %6 {strides = array<i32>} : memref<2x4x196xf32, #tpu.memory_space<vmem>>, vector<2x4x8xf32>,
    %c0_15 = arith.constant 0 : index
    %c0_16 = arith.constant 0 : index
    %c24 = arith.constant 24 : index
    %8 = vector.load %arg0[%c0_15, %c0_16, %c24] : memref<2x4x64xf32, #tpu.memory_space<vmem>>, vector<2x4x8xf32>
    %c0_17 = arith.constant 0 : index
    %c0_18 = arith.constant 0 : index
    %c88 = arith.constant 88 : index
    %9 = vector.load %arg9[%c0_17, %c0_18, %c88] : memref<2x4x196xf32, #tpu.memory_space<vmem>>, vector<2x4x8xf32>
    tpu.vector_store %arg9[%c0_17, %c0_18, %c88], %8 {strides = array<i32>} : memref<2x4x196xf32, #tpu.memory_space<vmem>>, vector<2x4x8xf32>,
    %c0_19 = arith.constant 0 : index
    %c0_20 = arith.constant 0 : index
    %c32 = arith.constant 32 : index
    %10 = vector.load %arg0[%c0_19, %c0_20, %c32] : memref<2x4x64xf32, #tpu.memory_space<vmem>>, vector<2x4x8xf32>
    %c0_21 = arith.constant 0 : index
    %c0_22 = arith.constant 0 : index
    %c100 = arith.constant 100 : index
    %11 = vector.load %arg9[%c0_21, %c0_22, %c100] : memref<2x4x196xf32, #tpu.memory_space<vmem>>, vector<2x4x8xf32>
    tpu.vector_store %arg9[%c0_21, %c0_22, %c100], %10 {strides = array<i32>} : memref<2x4x196xf32, #tpu.memory_space<vmem>>, vector<2x4x8xf32>,
    %c0_23 = arith.constant 0 : index
    %c0_24 = arith.constant 0 : index
    %c40 = arith.constant 40 : index
    %12 = vector.load %arg0[%c0_23, %c0_24, %c40] : memref<2x4x64xf32, #tpu.memory_space<vmem>>, vector<2x4x8xf32>
    %c0_25 = arith.constant 0 : index
    %c0_26 = arith.constant 0 : index
    %c112 = arith.constant 112 : index
    %13 = vector.load %arg9[%c0_25, %c0_26, %c112] : memref<2x4x196xf32, #tpu.memory_space<vmem>>, vector<2x4x8xf32>
    tpu.vector_store %arg9[%c0_25, %c0_26, %c112], %12 {strides = array<i32>} : memref<2x4x196xf32, #tpu.memory_space<vmem>>, vector<2x4x8xf32>,
    %c0_27 = arith.constant 0 : index
    %c0_28 = arith.constant 0 : index
    %c48 = arith.constant 48 : index
    %14 = vector.load %arg0[%c0_27, %c0_28, %c48] : memref<2x4x64xf32, #tpu.memory_space<vmem>>, vector<2x4x8xf32>
    %c0_29 = arith.constant 0 : index
    %c0_30 = arith.constant 0 : index
    %c124 = arith.constant 124 : index
    %15 = vector.load %arg9[%c0_29, %c0_30, %c124] : memref<2x4x196xf32, #tpu.memory_space<vmem>>, vector<2x4x8xf32>
    tpu.vector_store %arg9[%c0_29, %c0_30, %c124], %14 {strides = array<i32>} : memref<2x4x196xf32, #tpu.memory_space<vmem>>, vector<2x4x8xf32>,
    %c0_31 = arith.constant 0 : index
    %c0_32 = arith.constant 0 : index
    %c56 = arith.constant 56 : index
    %16 = vector.load %arg0[%c0_31, %c0_32, %c56] : memref<2x4x64xf32, #tpu.memory_space<vmem>>, vector<2x4x8xf32>
    %c0_33 = arith.constant 0 : index
    %c0_34 = arith.constant 0 : index
    %c136 = arith.constant 136 : index
    %17 = vector.load %arg9[%c0_33, %c0_34, %c136] : memref<2x4x196xf32, #tpu.memory_space<vmem>>, vector<2x4x8xf32>
    tpu.vector_store %arg9[%c0_33, %c0_34, %c136], %16 {strides = array<i32>} : memref<2x4x196xf32, #tpu.memory_space<vmem>>, vector<2x4x8xf32>,
    %c0_35 = arith.constant 0 : index
    %c0_36 = arith.constant 0 : index
    %c0_37 = arith.constant 0 : index
    %18 = vector.load %arg1[%c0_35, %c0_36, %c0_37] : memref<1x1x196xf32, #tpu.memory_space<vmem>>, vector<1x1x196xf32>
    %19 = vector.extract_strided_slice %18 {offsets = [0, 0, 26], sizes = [1, 1, 144], strides = [1, 1, 1]} : vector<1x1x196xf32> to vector<1x1x144xf32>
    %c0_38 = arith.constant 0 : index
    %c0_39 = arith.constant 0 : index
    %c26 = arith.constant 26 : index
    %20 = vector.load %arg9[%c0_38, %c0_39, %c26] : memref<2x4x196xf32, #tpu.memory_space<vmem>>, vector<2x4x144xf32>
    %cst_40 = arith.constant -1.000000e+30 : f32
    %21 = vector.broadcast %cst_40 : f32 to vector<2x4x144xf32>
    %cst_41 = arith.constant 0.000000e+00 : f32
    %22 = vector.broadcast %cst_41 : f32 to vector<2x4x144xf32>
    %c0_42 = arith.constant 0 : index
    %c0_43 = arith.constant 0 : index
    %c13 = arith.constant 13 : index
    %23 = vector.load %arg9[%c0_42, %c0_43, %c13] : memref<2x4x196xf32, #tpu.memory_space<vmem>>, vector<2x4x144xf32>
    %c0_44 = arith.constant 0 : index
    %c0_45 = arith.constant 0 : index
    %c0_46 = arith.constant 0 : index
    %24 = vector.load %arg9[%c0_44, %c0_45, %c0_46] : memref<2x4x196xf32, #tpu.memory_space<vmem>>, vector<2x4x144xf32>
    %25 = vector.extract_strided_slice %18 {offsets = [0, 0, 13], sizes = [1, 1, 144], strides = [1, 1, 1]} : vector<1x1x196xf32> to vector<1x1x144xf32>
    %cst_47 = arith.constant 5.000000e-01 : f32
    %26 = vector.broadcast %cst_47 : f32 to vector<1x1x144xf32>
    %27 = arith.cmpf ogt, %25, %26 : vector<1x1x144xf32>
    %cst_48 = arith.constant -1.000000e+30 : f32
    %28 = vector.shape_cast %27 : vector<1x1x144xi1> to vector<1x1x144xi1>
    %29 = vector.broadcast %28 : vector<1x1x144xi1> to vector<2x4x144xi1>
    %30 = vector.broadcast %cst_48 : f32 to vector<2x4x144xf32>
    %31 = arith.select %29, %23, %30 : vector<2x4x144xi1>, vector<2x4x144xf32>
    %32 = arith.maximumf %21, %31 : vector<2x4x144xf32>
    %33 = arith.addf %22, %23 : vector<2x4x144xf32>
    %34 = arith.truncf %23 : vector<2x4x144xf32> to vector<2x4x144xbf16>
    %c0_49 = arith.constant 0 : index
    %c0_50 = arith.constant 0 : index
    %c0_51 = arith.constant 0 : index
    %35 = vector.load %arg10[%c0_49, %c0_50, %c0_51] : memref<2x36x144xbf16, #tpu.memory_space<vmem>>, vector<2x4x144xbf16>
    tpu.vector_store %arg10[%c0_49, %c0_50, %c0_51], %34 {strides = array<i32>} : memref<2x36x144xbf16, #tpu.memory_space<vmem>>, vector<2x4x144xbf16>,
    %36 = arith.truncf %24 : vector<2x4x144xf32> to vector<2x4x144xbf16>
    %c0_52 = arith.constant 0 : index
    %c0_53 = arith.constant 0 : index
    %c0_54 = arith.constant 0 : index
    %37 = vector.load %arg11[%c0_52, %c0_53, %c0_54] : memref<2x36x144xbf16, #tpu.memory_space<vmem>>, vector<2x4x144xbf16>
    tpu.vector_store %arg11[%c0_52, %c0_53, %c0_54], %36 {strides = array<i32>} : memref<2x36x144xbf16, #tpu.memory_space<vmem>>, vector<2x4x144xbf16>,
    %c0_55 = arith.constant 0 : index
    %c0_56 = arith.constant 0 : index
    %c14 = arith.constant 14 : index
    %38 = vector.load %arg9[%c0_55, %c0_56, %c14] : memref<2x4x196xf32, #tpu.memory_space<vmem>>, vector<2x4x144xf32>
    %c0_57 = arith.constant 0 : index
    %c0_58 = arith.constant 0 : index
    %c2 = arith.constant 2 : index
    %39 = vector.load %arg9[%c0_57, %c0_58, %c2] : memref<2x4x196xf32, #tpu.memory_space<vmem>>, vector<2x4x144xf32>
    %40 = vector.extract_strided_slice %18 {offsets = [0, 0, 14], sizes = [1, 1, 144], strides = [1, 1, 1]} : vector<1x1x196xf32> to vector<1x1x144xf32>
    %cst_59 = arith.constant 5.000000e-01 : f32
    %41 = vector.broadcast %cst_59 : f32 to vector<1x1x144xf32>
    %42 = arith.cmpf ogt, %40, %41 : vector<1x1x144xf32>
    %cst_60 = arith.constant -1.000000e+30 : f32
    %43 = vector.shape_cast %42 : vector<1x1x144xi1> to vector<1x1x144xi1>
    %44 = vector.broadcast %43 : vector<1x1x144xi1> to vector<2x4x144xi1>
    %45 = vector.broadcast %cst_60 : f32 to vector<2x4x144xf32>
    %46 = arith.select %44, %38, %45 : vector<2x4x144xi1>, vector<2x4x144xf32>
    %47 = arith.maximumf %32, %46 : vector<2x4x144xf32>
    %48 = arith.addf %33, %38 : vector<2x4x144xf32>
    %49 = arith.truncf %38 : vector<2x4x144xf32> to vector<2x4x144xbf16>
    %c0_61 = arith.constant 0 : index
    %c4 = arith.constant 4 : index
    %c0_62 = arith.constant 0 : index
    %50 = vector.load %arg10[%c0_61, %c4, %c0_62] : memref<2x36x144xbf16, #tpu.memory_space<vmem>>, vector<2x4x144xbf16>
    tpu.vector_store %arg10[%c0_61, %c4, %c0_62], %49 {strides = array<i32>} : memref<2x36x144xbf16, #tpu.memory_space<vmem>>, vector<2x4x144xbf16>,
    %51 = arith.truncf %39 : vector<2x4x144xf32> to vector<2x4x144xbf16>
    %c0_63 = arith.constant 0 : index
    %c4_64 = arith.constant 4 : index
    %c0_65 = arith.constant 0 : index
    %52 = vector.load %arg11[%c0_63, %c4_64, %c0_65] : memref<2x36x144xbf16, #tpu.memory_space<vmem>>, vector<2x4x144xbf16>
    tpu.vector_store %arg11[%c0_63, %c4_64, %c0_65], %51 {strides = array<i32>} : memref<2x36x144xbf16, #tpu.memory_space<vmem>>, vector<2x4x144xbf16>,
    %c0_66 = arith.constant 0 : index
    %c0_67 = arith.constant 0 : index
    %c15 = arith.constant 15 : index
    %53 = vector.load %arg9[%c0_66, %c0_67, %c15] : memref<2x4x196xf32, #tpu.memory_space<vmem>>, vector<2x4x144xf32>
    %c0_68 = arith.constant 0 : index
    %c0_69 = arith.constant 0 : index
    %c4_70 = arith.constant 4 : index
    %54 = vector.load %arg9[%c0_68, %c0_69, %c4_70] : memref<2x4x196xf32, #tpu.memory_space<vmem>>, vector<2x4x144xf32>
    %55 = vector.extract_strided_slice %18 {offsets = [0, 0, 15], sizes = [1, 1, 144], strides = [1, 1, 1]} : vector<1x1x196xf32> to vector<1x1x144xf32>
    %cst_71 = arith.constant 5.000000e-01 : f32
    %56 = vector.broadcast %cst_71 : f32 to vector<1x1x144xf32>
    %57 = arith.cmpf ogt, %55, %56 : vector<1x1x144xf32>
    %cst_72 = arith.constant -1.000000e+30 : f32
    %58 = vector.shape_cast %57 : vector<1x1x144xi1> to vector<1x1x144xi1>
    %59 = vector.broadcast %58 : vector<1x1x144xi1> to vector<2x4x144xi1>
    %60 = vector.broadcast %cst_72 : f32 to vector<2x4x144xf32>
    %61 = arith.select %59, %53, %60 : vector<2x4x144xi1>, vector<2x4x144xf32>
    %62 = arith.maximumf %47, %61 : vector<2x4x144xf32>
    %63 = arith.addf %48, %53 : vector<2x4x144xf32>
    %64 = arith.truncf %53 : vector<2x4x144xf32> to vector<2x4x144xbf16>
    %c0_73 = arith.constant 0 : index
    %c8_74 = arith.constant 8 : index
    %c0_75 = arith.constant 0 : index
    %65 = vector.load %arg10[%c0_73, %c8_74, %c0_75] : memref<2x36x144xbf16, #tpu.memory_space<vmem>>, vector<2x4x144xbf16>
    tpu.vector_store %arg10[%c0_73, %c8_74, %c0_75], %64 {strides = array<i32>} : memref<2x36x144xbf16, #tpu.memory_space<vmem>>, vector<2x4x144xbf16>,
    %66 = arith.truncf %54 : vector<2x4x144xf32> to vector<2x4x144xbf16>
    %c0_76 = arith.constant 0 : index
    %c8_77 = arith.constant 8 : index
    %c0_78 = arith.constant 0 : index
    %67 = vector.load %arg11[%c0_76, %c8_77, %c0_78] : memref<2x36x144xbf16, #tpu.memory_space<vmem>>, vector<2x4x144xbf16>
    tpu.vector_store %arg11[%c0_76, %c8_77, %c0_78], %66 {strides = array<i32>} : memref<2x36x144xbf16, #tpu.memory_space<vmem>>, vector<2x4x144xbf16>,
    %c0_79 = arith.constant 0 : index
    %c0_80 = arith.constant 0 : index
    %c25 = arith.constant 25 : index
    %68 = vector.load %arg9[%c0_79, %c0_80, %c25] : memref<2x4x196xf32, #tpu.memory_space<vmem>>, vector<2x4x144xf32>
    %c0_81 = arith.constant 0 : index
    %c0_82 = arith.constant 0 : index
    %c24_83 = arith.constant 24 : index
    %69 = vector.load %arg9[%c0_81, %c0_82, %c24_83] : memref<2x4x196xf32, #tpu.memory_space<vmem>>, vector<2x4x144xf32>
    %70 = vector.extract_strided_slice %18 {offsets = [0, 0, 25], sizes = [1, 1, 144], strides = [1, 1, 1]} : vector<1x1x196xf32> to vector<1x1x144xf32>
    %cst_84 = arith.constant 5.000000e-01 : f32
    %71 = vector.broadcast %cst_84 : f32 to vector<1x1x144xf32>
    %72 = arith.cmpf ogt, %70, %71 : vector<1x1x144xf32>
    %cst_85 = arith.constant -1.000000e+30 : f32
    %73 = vector.shape_cast %72 : vector<1x1x144xi1> to vector<1x1x144xi1>
    %74 = vector.broadcast %73 : vector<1x1x144xi1> to vector<2x4x144xi1>
    %75 = vector.broadcast %cst_85 : f32 to vector<2x4x144xf32>
    %76 = arith.select %74, %68, %75 : vector<2x4x144xi1>, vector<2x4x144xf32>
    %77 = arith.maximumf %62, %76 : vector<2x4x144xf32>
    %78 = arith.addf %63, %68 : vector<2x4x144xf32>
    %79 = arith.truncf %68 : vector<2x4x144xf32> to vector<2x4x144xbf16>
    %c0_86 = arith.constant 0 : index
    %c12 = arith.constant 12 : index
    %c0_87 = arith.constant 0 : index
    %80 = vector.load %arg10[%c0_86, %c12, %c0_87] : memref<2x36x144xbf16, #tpu.memory_space<vmem>>, vector<2x4x144xbf16>
    tpu.vector_store %arg10[%c0_86, %c12, %c0_87], %79 {strides = array<i32>} : memref<2x36x144xbf16, #tpu.memory_space<vmem>>, vector<2x4x144xbf16>,
    %81 = arith.truncf %69 : vector<2x4x144xf32> to vector<2x4x144xbf16>
    %c0_88 = arith.constant 0 : index
    %c12_89 = arith.constant 12 : index
    %c0_90 = arith.constant 0 : index
    %82 = vector.load %arg11[%c0_88, %c12_89, %c0_90] : memref<2x36x144xbf16, #tpu.memory_space<vmem>>, vector<2x4x144xbf16>
    tpu.vector_store %arg11[%c0_88, %c12_89, %c0_90], %81 {strides = array<i32>} : memref<2x36x144xbf16, #tpu.memory_space<vmem>>, vector<2x4x144xbf16>,
    %83 = vector.extract_strided_slice %18 {offsets = [0, 0, 26], sizes = [1, 1, 144], strides = [1, 1, 1]} : vector<1x1x196xf32> to vector<1x1x144xf32>
    %cst_91 = arith.constant 5.000000e-01 : f32
    %84 = vector.broadcast %cst_91 : f32 to vector<1x1x144xf32>
    %85 = arith.cmpf ogt, %83, %84 : vector<1x1x144xf32>
    %cst_92 = arith.constant -1.000000e+30 : f32
    %86 = vector.shape_cast %85 : vector<1x1x144xi1> to vector<1x1x144xi1>
    %87 = vector.broadcast %86 : vector<1x1x144xi1> to vector<2x4x144xi1>
    %88 = vector.broadcast %cst_92 : f32 to vector<2x4x144xf32>
    %89 = arith.select %87, %20, %88 : vector<2x4x144xi1>, vector<2x4x144xf32>
    %90 = arith.maximumf %77, %89 : vector<2x4x144xf32>
    %91 = arith.addf %78, %20 : vector<2x4x144xf32>
    %92 = arith.truncf %20 : vector<2x4x144xf32> to vector<2x4x144xbf16>
    %c0_93 = arith.constant 0 : index
    %c16_94 = arith.constant 16 : index
    %c0_95 = arith.constant 0 : index
    %93 = vector.load %arg10[%c0_93, %c16_94, %c0_95] : memref<2x36x144xbf16, #tpu.memory_space<vmem>>, vector<2x4x144xbf16>
    tpu.vector_store %arg10[%c0_93, %c16_94, %c0_95], %92 {strides = array<i32>} : memref<2x36x144xbf16, #tpu.memory_space<vmem>>, vector<2x4x144xbf16>,
    %94 = arith.truncf %20 : vector<2x4x144xf32> to vector<2x4x144xbf16>
    %c0_96 = arith.constant 0 : index
    %c16_97 = arith.constant 16 : index
    %c0_98 = arith.constant 0 : index
    %95 = vector.load %arg11[%c0_96, %c16_97, %c0_98] : memref<2x36x144xbf16, #tpu.memory_space<vmem>>, vector<2x4x144xbf16>
    tpu.vector_store %arg11[%c0_96, %c16_97, %c0_98], %94 {strides = array<i32>} : memref<2x36x144xbf16, #tpu.memory_space<vmem>>, vector<2x4x144xbf16>,
    %c0_99 = arith.constant 0 : index
    %c0_100 = arith.constant 0 : index
    %c27 = arith.constant 27 : index
    %96 = vector.load %arg9[%c0_99, %c0_100, %c27] : memref<2x4x196xf32, #tpu.memory_space<vmem>>, vector<2x4x144xf32>
    %c0_101 = arith.constant 0 : index
    %c0_102 = arith.constant 0 : index
    %c28 = arith.constant 28 : index
    %97 = vector.load %arg9[%c0_101, %c0_102, %c28] : memref<2x4x196xf32, #tpu.memory_space<vmem>>, vector<2x4x144xf32>
    %98 = vector.extract_strided_slice %18 {offsets = [0, 0, 27], sizes = [1, 1, 144], strides = [1, 1, 1]} : vector<1x1x196xf32> to vector<1x1x144xf32>
    %cst_103 = arith.constant 5.000000e-01 : f32
    %99 = vector.broadcast %cst_103 : f32 to vector<1x1x144xf32>
    %100 = arith.cmpf ogt, %98, %99 : vector<1x1x144xf32>
    %cst_104 = arith.constant -1.000000e+30 : f32
    %101 = vector.shape_cast %100 : vector<1x1x144xi1> to vector<1x1x144xi1>
    %102 = vector.broadcast %101 : vector<1x1x144xi1> to vector<2x4x144xi1>
    %103 = vector.broadcast %cst_104 : f32 to vector<2x4x144xf32>
    %104 = arith.select %102, %96, %103 : vector<2x4x144xi1>, vector<2x4x144xf32>
    %105 = arith.maximumf %90, %104 : vector<2x4x144xf32>
    %106 = arith.addf %91, %96 : vector<2x4x144xf32>
    %107 = arith.truncf %96 : vector<2x4x144xf32> to vector<2x4x144xbf16>
    %c0_105 = arith.constant 0 : index
    %c20 = arith.constant 20 : index
    %c0_106 = arith.constant 0 : index
    %108 = vector.load %arg10[%c0_105, %c20, %c0_106] : memref<2x36x144xbf16, #tpu.memory_space<vmem>>, vector<2x4x144xbf16>
    tpu.vector_store %arg10[%c0_105, %c20, %c0_106], %107 {strides = array<i32>} : memref<2x36x144xbf16, #tpu.memory_space<vmem>>, vector<2x4x144xbf16>,
    %109 = arith.truncf %97 : vector<2x4x144xf32> to vector<2x4x144xbf16>
    %c0_107 = arith.constant 0 : index
    %c20_108 = arith.constant 20 : index
    %c0_109 = arith.constant 0 : index
    %110 = vector.load %arg11[%c0_107, %c20_108, %c0_109] : memref<2x36x144xbf16, #tpu.memory_space<vmem>>, vector<2x4x144xbf16>
    tpu.vector_store %arg11[%c0_107, %c20_108, %c0_109], %109 {strides = array<i32>} : memref<2x36x144xbf16, #tpu.memory_space<vmem>>, vector<2x4x144xbf16>,
    %c0_110 = arith.constant 0 : index
    %c0_111 = arith.constant 0 : index
    %c37 = arith.constant 37 : index
    %111 = vector.load %arg9[%c0_110, %c0_111, %c37] : memref<2x4x196xf32, #tpu.memory_space<vmem>>, vector<2x4x144xf32>
    %c0_112 = arith.constant 0 : index
    %c0_113 = arith.constant 0 : index
    %c48_114 = arith.constant 48 : index
    %112 = vector.load %arg9[%c0_112, %c0_113, %c48_114] : memref<2x4x196xf32, #tpu.memory_space<vmem>>, vector<2x4x144xf32>
    %113 = vector.extract_strided_slice %18 {offsets = [0, 0, 37], sizes = [1, 1, 144], strides = [1, 1, 1]} : vector<1x1x196xf32> to vector<1x1x144xf32>
    %cst_115 = arith.constant 5.000000e-01 : f32
    %114 = vector.broadcast %cst_115 : f32 to vector<1x1x144xf32>
    %115 = arith.cmpf ogt, %113, %114 : vector<1x1x144xf32>
    %cst_116 = arith.constant -1.000000e+30 : f32
    %116 = vector.shape_cast %115 : vector<1x1x144xi1> to vector<1x1x144xi1>
    %117 = vector.broadcast %116 : vector<1x1x144xi1> to vector<2x4x144xi1>
    %118 = vector.broadcast %cst_116 : f32 to vector<2x4x144xf32>
    %119 = arith.select %117, %111, %118 : vector<2x4x144xi1>, vector<2x4x144xf32>
    %120 = arith.maximumf %105, %119 : vector<2x4x144xf32>
    %121 = arith.addf %106, %111 : vector<2x4x144xf32>
    %122 = arith.truncf %111 : vector<2x4x144xf32> to vector<2x4x144xbf16>
    %c0_117 = arith.constant 0 : index
    %c24_118 = arith.constant 24 : index
    %c0_119 = arith.constant 0 : index
    %123 = vector.load %arg10[%c0_117, %c24_118, %c0_119] : memref<2x36x144xbf16, #tpu.memory_space<vmem>>, vector<2x4x144xbf16>
    tpu.vector_store %arg10[%c0_117, %c24_118, %c0_119], %122 {strides = array<i32>} : memref<2x36x144xbf16, #tpu.memory_space<vmem>>, vector<2x4x144xbf16>,
    %124 = arith.truncf %112 : vector<2x4x144xf32> to vector<2x4x144xbf16>
    %c0_120 = arith.constant 0 : index
    %c24_121 = arith.constant 24 : index
    %c0_122 = arith.constant 0 : index
    %125 = vector.load %arg11[%c0_120, %c24_121, %c0_122] : memref<2x36x144xbf16, #tpu.memory_space<vmem>>, vector<2x4x144xbf16>
    tpu.vector_store %arg11[%c0_120, %c24_121, %c0_122], %124 {strides = array<i32>} : memref<2x36x144xbf16, #tpu.memory_space<vmem>>, vector<2x4x144xbf16>,
    %c0_123 = arith.constant 0 : index
    %c0_124 = arith.constant 0 : index
    %c38 = arith.constant 38 : index
    %126 = vector.load %arg9[%c0_123, %c0_124, %c38] : memref<2x4x196xf32, #tpu.memory_space<vmem>>, vector<2x4x144xf32>
    %c0_125 = arith.constant 0 : index
    %c0_126 = arith.constant 0 : index
    %c50 = arith.constant 50 : index
    %127 = vector.load %arg9[%c0_125, %c0_126, %c50] : memref<2x4x196xf32, #tpu.memory_space<vmem>>, vector<2x4x144xf32>
    %128 = vector.extract_strided_slice %18 {offsets = [0, 0, 38], sizes = [1, 1, 144], strides = [1, 1, 1]} : vector<1x1x196xf32> to vector<1x1x144xf32>
    %cst_127 = arith.constant 5.000000e-01 : f32
    %129 = vector.broadcast %cst_127 : f32 to vector<1x1x144xf32>
    %130 = arith.cmpf ogt, %128, %129 : vector<1x1x144xf32>
    %cst_128 = arith.constant -1.000000e+30 : f32
    %131 = vector.shape_cast %130 : vector<1x1x144xi1> to vector<1x1x144xi1>
    %132 = vector.broadcast %131 : vector<1x1x144xi1> to vector<2x4x144xi1>
    %133 = vector.broadcast %cst_128 : f32 to vector<2x4x144xf32>
    %134 = arith.select %132, %126, %133 : vector<2x4x144xi1>, vector<2x4x144xf32>
    %135 = arith.maximumf %120, %134 : vector<2x4x144xf32>
    %136 = arith.addf %121, %126 : vector<2x4x144xf32>
    %137 = arith.truncf %126 : vector<2x4x144xf32> to vector<2x4x144xbf16>
    %c0_129 = arith.constant 0 : index
    %c28_130 = arith.constant 28 : index
    %c0_131 = arith.constant 0 : index
    %138 = vector.load %arg10[%c0_129, %c28_130, %c0_131] : memref<2x36x144xbf16, #tpu.memory_space<vmem>>, vector<2x4x144xbf16>
    tpu.vector_store %arg10[%c0_129, %c28_130, %c0_131], %137 {strides = array<i32>} : memref<2x36x144xbf16, #tpu.memory_space<vmem>>, vector<2x4x144xbf16>,
    %139 = arith.truncf %127 : vector<2x4x144xf32> to vector<2x4x144xbf16>
    %c0_132 = arith.constant 0 : index
    %c28_133 = arith.constant 28 : index
    %c0_134 = arith.constant 0 : index
    %140 = vector.load %arg11[%c0_132, %c28_133, %c0_134] : memref<2x36x144xbf16, #tpu.memory_space<vmem>>, vector<2x4x144xbf16>
    tpu.vector_store %arg11[%c0_132, %c28_133, %c0_134], %139 {strides = array<i32>} : memref<2x36x144xbf16, #tpu.memory_space<vmem>>, vector<2x4x144xbf16>,
    %c0_135 = arith.constant 0 : index
    %c0_136 = arith.constant 0 : index
    %c39 = arith.constant 39 : index
    %141 = vector.load %arg9[%c0_135, %c0_136, %c39] : memref<2x4x196xf32, #tpu.memory_space<vmem>>, vector<2x4x144xf32>
    %c0_137 = arith.constant 0 : index
    %c0_138 = arith.constant 0 : index
    %c52_139 = arith.constant 52 : index
    %142 = vector.load %arg9[%c0_137, %c0_138, %c52_139] : memref<2x4x196xf32, #tpu.memory_space<vmem>>, vector<2x4x144xf32>
    %143 = vector.extract_strided_slice %18 {offsets = [0, 0, 39], sizes = [1, 1, 144], strides = [1, 1, 1]} : vector<1x1x196xf32> to vector<1x1x144xf32>
    %cst_140 = arith.constant 5.000000e-01 : f32
    %144 = vector.broadcast %cst_140 : f32 to vector<1x1x144xf32>
    %145 = arith.cmpf ogt, %143, %144 : vector<1x1x144xf32>
    %cst_141 = arith.constant -1.000000e+30 : f32
    %146 = vector.shape_cast %145 : vector<1x1x144xi1> to vector<1x1x144xi1>
    %147 = vector.broadcast %146 : vector<1x1x144xi1> to vector<2x4x144xi1>
    %148 = vector.broadcast %cst_141 : f32 to vector<2x4x144xf32>
    %149 = arith.select %147, %141, %148 : vector<2x4x144xi1>, vector<2x4x144xf32>
    %150 = arith.maximumf %135, %149 : vector<2x4x144xf32>
    %151 = arith.addf %136, %141 : vector<2x4x144xf32>
    %152 = arith.truncf %141 : vector<2x4x144xf32> to vector<2x4x144xbf16>
    %c0_142 = arith.constant 0 : index
    %c32_143 = arith.constant 32 : index
    %c0_144 = arith.constant 0 : index
    %153 = vector.load %arg10[%c0_142, %c32_143, %c0_144] : memref<2x36x144xbf16, #tpu.memory_space<vmem>>, vector<2x4x144xbf16>
    tpu.vector_store %arg10[%c0_142, %c32_143, %c0_144], %152 {strides = array<i32>} : memref<2x36x144xbf16, #tpu.memory_space<vmem>>, vector<2x4x144xbf16>,
    %154 = arith.truncf %142 : vector<2x4x144xf32> to vector<2x4x144xbf16>
    %c0_145 = arith.constant 0 : index
    %c32_146 = arith.constant 32 : index
    %c0_147 = arith.constant 0 : index
    %155 = vector.load %arg11[%c0_145, %c32_146, %c0_147] : memref<2x36x144xbf16, #tpu.memory_space<vmem>>, vector<2x4x144xbf16>
    tpu.vector_store %arg11[%c0_145, %c32_146, %c0_147], %154 {strides = array<i32>} : memref<2x36x144xbf16, #tpu.memory_space<vmem>>, vector<2x4x144xbf16>,
    %cst_148 = arith.constant 0.111111112 : f32
    %156 = vector.broadcast %cst_148 : f32 to vector<2x4x144xf32>
    %157 = arith.mulf %151, %156 : vector<2x4x144xf32>
    %c0_149 = arith.constant 0 : index
    %c0_150 = arith.constant 0 : index
    %158 = vector.load %arg2[%c0_149, %c0_150] : memref<4x4xbf16, #tpu.memory_space<vmem>>, vector<4x4xbf16>
    %c0_151 = arith.constant 0 : index
    %c0_152 = arith.constant 0 : index
    %159 = vector.load %arg3[%c0_151, %c0_152] : memref<4x36xbf16, #tpu.memory_space<vmem>>, vector<4x36xbf16>
    %c0_153 = arith.constant 0 : index
    %c0_154 = arith.constant 0 : index
    %160 = vector.load %arg4[%c0_153, %c0_154] : memref<4x36xbf16, #tpu.memory_space<vmem>>, vector<4x36xbf16>
    %c0_155 = arith.constant 0 : index
    %c0_156 = arith.constant 0 : index
    %c0_157 = arith.constant 0 : index
    %161 = vector.load %arg10[%c0_155, %c0_156, %c0_157] : memref<2x36x144xbf16, #tpu.memory_space<vmem>>, vector<1x36x144xbf16>
    %162 = vector.shape_cast %161 : vector<1x36x144xbf16> to vector<36x144xbf16>
    %c0_158 = arith.constant 0 : index
    %c0_159 = arith.constant 0 : index
    %c0_160 = arith.constant 0 : index
    %163 = vector.load %arg11[%c0_158, %c0_159, %c0_160] : memref<2x36x144xbf16, #tpu.memory_space<vmem>>, vector<1x36x144xbf16>
    %164 = vector.shape_cast %163 : vector<1x36x144xbf16> to vector<36x144xbf16>
    %165 = vector.extract_strided_slice %162 {offsets = [16, 0], sizes = [4, 144], strides = [1, 1]} : vector<36x144xbf16> to vector<4x144xbf16>
    %cst_161 = arith.constant dense<0.000000e+00> : vector<4x144xf32>
    %166 = tpu.matmul %159, %162, %cst_161 {dimension_numbers = #tpu.dot_dimension_numbers<[1], [0], [0], [1], [0, 0, 1, 1], [], []>} : vector<4x36xbf16>, vector<36x144xbf16>, vector<4x144xf32> -> vector<4x144xf32>
    %cst_162 = arith.constant dense<0.000000e+00> : vector<4x144xf32>
    %167 = tpu.matmul %160, %164, %cst_162 {dimension_numbers = #tpu.dot_dimension_numbers<[1], [0], [0], [1], [0, 0, 1, 1], [], []>} : vector<4x36xbf16>, vector<36x144xbf16>, vector<4x144xf32> -> vector<4x144xf32>
    %cst_163 = arith.constant dense<0.000000e+00> : vector<4x144xf32>
    %168 = tpu.matmul %158, %165, %cst_163 {dimension_numbers = #tpu.dot_dimension_numbers<[1], [0], [0], [1], [0, 0, 1, 1], [], []>} : vector<4x4xbf16>, vector<4x144xbf16>, vector<4x144xf32> -> vector<4x144xf32>
    %c1 = arith.constant 1 : index
    %c0_164 = arith.constant 0 : index
    %c0_165 = arith.constant 0 : index
    %169 = vector.load %arg10[%c1, %c0_164, %c0_165] : memref<2x36x144xbf16, #tpu.memory_space<vmem>>, vector<1x36x144xbf16>
    %170 = vector.shape_cast %169 : vector<1x36x144xbf16> to vector<36x144xbf16>
    %c1_166 = arith.constant 1 : index
    %c0_167 = arith.constant 0 : index
    %c0_168 = arith.constant 0 : index
    %171 = vector.load %arg11[%c1_166, %c0_167, %c0_168] : memref<2x36x144xbf16, #tpu.memory_space<vmem>>, vector<1x36x144xbf16>
    %172 = vector.shape_cast %171 : vector<1x36x144xbf16> to vector<36x144xbf16>
    %173 = vector.extract_strided_slice %170 {offsets = [16, 0], sizes = [4, 144], strides = [1, 1]} : vector<36x144xbf16> to vector<4x144xbf16>
    %cst_169 = arith.constant dense<0.000000e+00> : vector<4x144xf32>
    %174 = tpu.matmul %159, %170, %cst_169 {dimension_numbers = #tpu.dot_dimension_numbers<[1], [0], [0], [1], [0, 0, 1, 1], [], []>} : vector<4x36xbf16>, vector<36x144xbf16>, vector<4x144xf32> -> vector<4x144xf32>
    %cst_170 = arith.constant dense<0.000000e+00> : vector<4x144xf32>
    %175 = tpu.matmul %160, %172, %cst_170 {dimension_numbers = #tpu.dot_dimension_numbers<[1], [0], [0], [1], [0, 0, 1, 1], [], []>} : vector<4x36xbf16>, vector<36x144xbf16>, vector<4x144xf32> -> vector<4x144xf32>
    %cst_171 = arith.constant dense<0.000000e+00> : vector<4x144xf32>
    %176 = tpu.matmul %158, %173, %cst_171 {dimension_numbers = #tpu.dot_dimension_numbers<[1], [0], [0], [1], [0, 0, 1, 1], [], []>} : vector<4x4xbf16>, vector<4x144xbf16>, vector<4x144xf32> -> vector<4x144xf32>
    %177 = vector.shape_cast %168 : vector<4x144xf32> to vector<1x4x144xf32>
    %178 = vector.shape_cast %176 : vector<4x144xf32> to vector<1x4x144xf32>
    %179 = tpu.concatenate %177, %178 in 0 : vector<1x4x144xf32>, vector<1x4x144xf32> -> vector<2x4x144xf32>
    %180 = vector.broadcast %19 : vector<1x1x144xf32> to vector<2x4x144xf32>
    %181 = arith.mulf %179, %180 : vector<2x4x144xf32>
    %182 = vector.shape_cast %166 : vector<4x144xf32> to vector<1x4x144xf32>
    %183 = vector.shape_cast %174 : vector<4x144xf32> to vector<1x4x144xf32>
    %184 = tpu.concatenate %182, %183 in 0 : vector<1x4x144xf32>, vector<1x4x144xf32> -> vector<2x4x144xf32>
    %185 = vector.broadcast %19 : vector<1x1x144xf32> to vector<2x4x144xf32>
    %186 = arith.mulf %184, %185 : vector<2x4x144xf32>
    %187 = vector.shape_cast %167 : vector<4x144xf32> to vector<1x4x144xf32>
    %188 = vector.shape_cast %175 : vector<4x144xf32> to vector<1x4x144xf32>
    %189 = tpu.concatenate %187, %188 in 0 : vector<1x4x144xf32>, vector<1x4x144xf32> -> vector<2x4x144xf32>
    %190 = vector.broadcast %19 : vector<1x1x144xf32> to vector<2x4x144xf32>
    %191 = arith.mulf %189, %190 : vector<2x4x144xf32>
    %192 = vector.broadcast %19 : vector<1x1x144xf32> to vector<2x4x144xf32>
    %193 = arith.mulf %150, %192 : vector<2x4x144xf32>
    %cst_172 = arith.constant dense<0.000000e+00> : vector<4xf32>
    %194 = vector.multi_reduction <add>, %193, %cst_172 [0, 2] : vector<2x4x144xf32> to vector<4xf32>
    %195 = vector.shape_cast %194 : vector<4xf32> to vector<1x4x1xf32>
    %196 = arith.mulf %193, %193 : vector<2x4x144xf32>
    %cst_173 = arith.constant dense<0.000000e+00> : vector<4xf32>
    %197 = vector.multi_reduction <add>, %196, %cst_173 [0, 2] : vector<2x4x144xf32> to vector<4xf32>
    %198 = vector.shape_cast %197 : vector<4xf32> to vector<1x4x1xf32>
    %cst_174 = arith.constant 7.812500e-03 : f32
    %199 = vector.broadcast %cst_174 : f32 to vector<1x4x1xf32>
    %200 = arith.mulf %195, %199 : vector<1x4x1xf32>
    %cst_175 = arith.constant 7.812500e-03 : f32
    %201 = vector.broadcast %cst_175 : f32 to vector<1x4x1xf32>
    %202 = arith.mulf %198, %201 : vector<1x4x1xf32>
    %203 = arith.mulf %200, %200 : vector<1x4x1xf32>
    %204 = arith.subf %202, %203 : vector<1x4x1xf32>
    %205 = vector.broadcast %200 : vector<1x4x1xf32> to vector<2x4x144xf32>
    %206 = arith.subf %193, %205 : vector<2x4x144xf32>
    %cst_176 = arith.constant 9.99999974E-6 : f32
    %207 = vector.broadcast %cst_176 : f32 to vector<1x4x1xf32>
    %208 = arith.addf %204, %207 : vector<1x4x1xf32>
    %209 = math.rsqrt %208 : vector<1x4x1xf32>
    %210 = vector.broadcast %209 : vector<1x4x1xf32> to vector<2x4x144xf32>
    %211 = arith.mulf %206, %210 : vector<2x4x144xf32>
    %212 = vector.broadcast %19 : vector<1x1x144xf32> to vector<2x4x144xf32>
    %213 = arith.mulf %211, %212 : vector<2x4x144xf32>
    %214 = vector.broadcast %19 : vector<1x1x144xf32> to vector<2x4x144xf32>
    %215 = arith.mulf %157, %214 : vector<2x4x144xf32>
    %cst_177 = arith.constant dense<0.000000e+00> : vector<4xf32>
    %216 = vector.multi_reduction <add>, %215, %cst_177 [0, 2] : vector<2x4x144xf32> to vector<4xf32>
    %217 = vector.shape_cast %216 : vector<4xf32> to vector<1x4x1xf32>
    %218 = arith.mulf %215, %215 : vector<2x4x144xf32>
    %cst_178 = arith.constant dense<0.000000e+00> : vector<4xf32>
    %219 = vector.multi_reduction <add>, %218, %cst_178 [0, 2] : vector<2x4x144xf32> to vector<4xf32>
    %220 = vector.shape_cast %219 : vector<4xf32> to vector<1x4x1xf32>
    %cst_179 = arith.constant 7.812500e-03 : f32
    %221 = vector.broadcast %cst_179 : f32 to vector<1x4x1xf32>
    %222 = arith.mulf %217, %221 : vector<1x4x1xf32>
    %cst_180 = arith.constant 7.812500e-03 : f32
    %223 = vector.broadcast %cst_180 : f32 to vector<1x4x1xf32>
    %224 = arith.mulf %220, %223 : vector<1x4x1xf32>
    %225 = arith.mulf %222, %222 : vector<1x4x1xf32>
    %226 = arith.subf %224, %225 : vector<1x4x1xf32>
    %227 = vector.broadcast %222 : vector<1x4x1xf32> to vector<2x4x144xf32>
    %228 = arith.subf %215, %227 : vector<2x4x144xf32>
    %cst_181 = arith.constant 9.99999974E-6 : f32
    %229 = vector.broadcast %cst_181 : f32 to vector<1x4x1xf32>
    %230 = arith.addf %226, %229 : vector<1x4x1xf32>
    %231 = math.rsqrt %230 : vector<1x4x1xf32>
    %232 = vector.broadcast %231 : vector<1x4x1xf32> to vector<2x4x144xf32>
    %233 = arith.mulf %228, %232 : vector<2x4x144xf32>
    %234 = vector.broadcast %19 : vector<1x1x144xf32> to vector<2x4x144xf32>
    %235 = arith.mulf %233, %234 : vector<2x4x144xf32>
    %cst_182 = arith.constant dense<0.000000e+00> : vector<2x4xf32>
    %236 = vector.multi_reduction <add>, %20, %cst_182 [2] : vector<2x4x144xf32> to vector<2x4xf32>
    %cst_183 = arith.constant 1.562500e-02 : f32
    %237 = vector.broadcast %cst_183 : f32 to vector<2x4xf32>
    %238 = arith.mulf %236, %237 : vector<2x4xf32>
    %cst_184 = arith.constant dense<0.000000e+00> : vector<2x4xf32>
    %239 = vector.multi_reduction <add>, %181, %cst_184 [2] : vector<2x4x144xf32> to vector<2x4xf32>
    %cst_185 = arith.constant 1.562500e-02 : f32
    %240 = vector.broadcast %cst_185 : f32 to vector<2x4xf32>
    %241 = arith.mulf %239, %240 : vector<2x4xf32>
    %cst_186 = arith.constant dense<0.000000e+00> : vector<2x4xf32>
    %242 = vector.multi_reduction <add>, %186, %cst_186 [2] : vector<2x4x144xf32> to vector<2x4xf32>
    %cst_187 = arith.constant 1.562500e-02 : f32
    %243 = vector.broadcast %cst_187 : f32 to vector<2x4xf32>
    %244 = arith.mulf %242, %243 : vector<2x4xf32>
    %cst_188 = arith.constant dense<0.000000e+00> : vector<2x4xf32>
    %245 = vector.multi_reduction <add>, %191, %cst_188 [2] : vector<2x4x144xf32> to vector<2x4xf32>
    %cst_189 = arith.constant 1.562500e-02 : f32
    %246 = vector.broadcast %cst_189 : f32 to vector<2x4xf32>
    %247 = arith.mulf %245, %246 : vector<2x4xf32>
    %cst_190 = arith.constant dense<0.000000e+00> : vector<2x4xf32>
    %248 = vector.multi_reduction <add>, %213, %cst_190 [2] : vector<2x4x144xf32> to vector<2x4xf32>
    %cst_191 = arith.constant 1.562500e-02 : f32
    %249 = vector.broadcast %cst_191 : f32 to vector<2x4xf32>
    %250 = arith.mulf %248, %249 : vector<2x4xf32>
    %cst_192 = arith.constant dense<0.000000e+00> : vector<2x4xf32>
    %251 = vector.multi_reduction <add>, %235, %cst_192 [2] : vector<2x4x144xf32> to vector<2x4xf32>
    %cst_193 = arith.constant 1.562500e-02 : f32
    %252 = vector.broadcast %cst_193 : f32 to vector<2x4xf32>
    %253 = arith.mulf %251, %252 : vector<2x4xf32>
    %254 = tpu.concatenate %238, %241, %244, %247, %250, %253 in 1 : vector<2x4xf32>, vector<2x4xf32>, vector<2x4xf32>, vector<2x4xf32>, vector<2x4xf32>, vector<2x4xf32> -> vector<2x24xf32>
    %c0_194 = arith.constant 0 : index
    %c0_195 = arith.constant 0 : index
    %255 = vector.load %arg5[%c0_194, %c0_195] : memref<24x3xf32, #tpu.memory_space<vmem>>, vector<24x3xf32>
    %cst_196 = arith.constant dense<0.000000e+00> : vector<2x3xf32>
    %256 = tpu.matmul %254, %255, %cst_196 {dimension_numbers = #tpu.dot_dimension_numbers<[1], [0], [0], [1], [0, 0, 1, 1], [], []>} : vector<2x24xf32>, vector<24x3xf32>, vector<2x3xf32> -> vector<2x3xf32>
    %cst_197 = arith.constant 0.000000e+00 : f32
    %257 = vector.broadcast %cst_197 : f32 to vector<2x3xf32>
    %258 = arith.maximumf %256, %257 : vector<2x3xf32>
    %c0_198 = arith.constant 0 : index
    %c0_199 = arith.constant 0 : index
    %259 = vector.load %arg6[%c0_198, %c0_199] : memref<3x24xf32, #tpu.memory_space<vmem>>, vector<3x24xf32>
    %cst_200 = arith.constant dense<0.000000e+00> : vector<2x24xf32>
    %260 = tpu.matmul %258, %259, %cst_200 {dimension_numbers = #tpu.dot_dimension_numbers<[1], [0], [0], [1], [0, 0, 1, 1], [], []>} : vector<2x3xf32>, vector<3x24xf32>, vector<2x24xf32> -> vector<2x24xf32>
    %261 = arith.negf %260 : vector<2x24xf32>
    %262 = math.exp %261 : vector<2x24xf32>
    %cst_201 = arith.constant 1.000000e+00 : f32
    %263 = vector.broadcast %cst_201 : f32 to vector<2x24xf32>
    %264 = arith.addf %263, %262 : vector<2x24xf32>
    %265 = arith.divf %263, %264 : vector<2x24xf32>
    %c0_202 = arith.constant 0 : index
    %c0_203 = arith.constant 0 : index
    %266 = vector.load %arg7[%c0_202, %c0_203] : memref<2x24xf32, #tpu.memory_space<vmem>>, vector<2x24xf32>
    tpu.vector_store %arg7[%c0_202, %c0_203], %265 {strides = array<i32>} : memref<2x24xf32, #tpu.memory_space<vmem>>, vector<2x24xf32>,
    %cst_204 = arith.constant 0.000000e+00 : f32
    %267 = vector.broadcast %cst_204 : f32 to vector<2x4x144xf32>
    %268 = vector.extract_strided_slice %265 {offsets = [0, 0], sizes = [2, 4], strides = [1, 1]} : vector<2x24xf32> to vector<2x4xf32>
    %269 = vector.shape_cast %268 : vector<2x4xf32> to vector<2x4x1xf32>
    %270 = vector.broadcast %269 : vector<2x4x1xf32> to vector<2x4x144xf32>
    %271 = arith.mulf %20, %270 : vector<2x4x144xf32>
    %272 = arith.addf %267, %271 : vector<2x4x144xf32>
    %273 = vector.extract_strided_slice %265 {offsets = [0, 4], sizes = [2, 4], strides = [1, 1]} : vector<2x24xf32> to vector<2x4xf32>
    %274 = vector.shape_cast %273 : vector<2x4xf32> to vector<2x4x1xf32>
    %275 = vector.broadcast %274 : vector<2x4x1xf32> to vector<2x4x144xf32>
    %276 = arith.mulf %181, %275 : vector<2x4x144xf32>
    %277 = arith.addf %272, %276 : vector<2x4x144xf32>
    %278 = vector.extract_strided_slice %265 {offsets = [0, 8], sizes = [2, 4], strides = [1, 1]} : vector<2x24xf32> to vector<2x4xf32>
    %279 = vector.shape_cast %278 : vector<2x4xf32> to vector<2x4x1xf32>
    %280 = vector.broadcast %279 : vector<2x4x1xf32> to vector<2x4x144xf32>
    %281 = arith.mulf %186, %280 : vector<2x4x144xf32>
    %282 = arith.addf %277, %281 : vector<2x4x144xf32>
    %283 = vector.extract_strided_slice %265 {offsets = [0, 12], sizes = [2, 4], strides = [1, 1]} : vector<2x24xf32> to vector<2x4xf32>
    %284 = vector.shape_cast %283 : vector<2x4xf32> to vector<2x4x1xf32>
    %285 = vector.broadcast %284 : vector<2x4x1xf32> to vector<2x4x144xf32>
    %286 = arith.mulf %191, %285 : vector<2x4x144xf32>
    %287 = arith.addf %282, %286 : vector<2x4x144xf32>
    %288 = vector.extract_strided_slice %265 {offsets = [0, 16], sizes = [2, 4], strides = [1, 1]} : vector<2x24xf32> to vector<2x4xf32>
    %289 = vector.shape_cast %288 : vector<2x4xf32> to vector<2x4x1xf32>
    %290 = vector.broadcast %289 : vector<2x4x1xf32> to vector<2x4x144xf32>
    %291 = arith.mulf %213, %290 : vector<2x4x144xf32>
    %292 = arith.addf %287, %291 : vector<2x4x144xf32>
    %293 = vector.extract_strided_slice %265 {offsets = [0, 20], sizes = [2, 4], strides = [1, 1]} : vector<2x24xf32> to vector<2x4xf32>
    %294 = vector.shape_cast %293 : vector<2x4xf32> to vector<2x4x1xf32>
    %295 = vector.broadcast %294 : vector<2x4x1xf32> to vector<2x4x144xf32>
    %296 = arith.mulf %235, %295 : vector<2x4x144xf32>
    %297 = arith.addf %292, %296 : vector<2x4x144xf32>
    %298 = vector.extract_strided_slice %297 {offsets = [0, 0, 26], sizes = [2, 4, 8], strides = [1, 1, 1]} : vector<2x4x144xf32> to vector<2x4x8xf32>
    %c0_205 = arith.constant 0 : index
    %c0_206 = arith.constant 0 : index
    %c0_207 = arith.constant 0 : index
    %299 = vector.load %arg8[%c0_205, %c0_206, %c0_207] : memref<2x4x64xf32, #tpu.memory_space<vmem>>, vector<2x4x8xf32>
    tpu.vector_store %arg8[%c0_205, %c0_206, %c0_207], %298 {strides = array<i32>} : memref<2x4x64xf32, #tpu.memory_space<vmem>>, vector<2x4x8xf32>,
    %300 = vector.extract_strided_slice %297 {offsets = [0, 0, 38], sizes = [2, 4, 8], strides = [1, 1, 1]} : vector<2x4x144xf32> to vector<2x4x8xf32>
    %c0_208 = arith.constant 0 : index
    %c0_209 = arith.constant 0 : index
    %c8_210 = arith.constant 8 : index
    %301 = vector.load %arg8[%c0_208, %c0_209, %c8_210] : memref<2x4x64xf32, #tpu.memory_space<vmem>>, vector<2x4x8xf32>
    tpu.vector_store %arg8[%c0_208, %c0_209, %c8_210], %300 {strides = array<i32>} : memref<2x4x64xf32, #tpu.memory_space<vmem>>, vector<2x4x8xf32>,
    %302 = vector.extract_strided_slice %297 {offsets = [0, 0, 50], sizes = [2, 4, 8], strides = [1, 1, 1]} : vector<2x4x144xf32> to vector<2x4x8xf32>
    %c0_211 = arith.constant 0 : index
    %c0_212 = arith.constant 0 : index
    %c16_213 = arith.constant 16 : index
    %303 = vector.load %arg8[%c0_211, %c0_212, %c16_213] : memref<2x4x64xf32, #tpu.memory_space<vmem>>, vector<2x4x8xf32>
    tpu.vector_store %arg8[%c0_211, %c0_212, %c16_213], %302 {strides = array<i32>} : memref<2x4x64xf32, #tpu.memory_space<vmem>>, vector<2x4x8xf32>,
    %304 = vector.extract_strided_slice %297 {offsets = [0, 0, 62], sizes = [2, 4, 8], strides = [1, 1, 1]} : vector<2x4x144xf32> to vector<2x4x8xf32>
    %c0_214 = arith.constant 0 : index
    %c0_215 = arith.constant 0 : index
    %c24_216 = arith.constant 24 : index
    %305 = vector.load %arg8[%c0_214, %c0_215, %c24_216] : memref<2x4x64xf32, #tpu.memory_space<vmem>>, vector<2x4x8xf32>
    tpu.vector_store %arg8[%c0_214, %c0_215, %c24_216], %304 {strides = array<i32>} : memref<2x4x64xf32, #tpu.memory_space<vmem>>, vector<2x4x8xf32>,
    %306 = vector.extract_strided_slice %297 {offsets = [0, 0, 74], sizes = [2, 4, 8], strides = [1, 1, 1]} : vector<2x4x144xf32> to vector<2x4x8xf32>
    %c0_217 = arith.constant 0 : index
    %c0_218 = arith.constant 0 : index
    %c32_219 = arith.constant 32 : index
    %307 = vector.load %arg8[%c0_217, %c0_218, %c32_219] : memref<2x4x64xf32, #tpu.memory_space<vmem>>, vector<2x4x8xf32>
    tpu.vector_store %arg8[%c0_217, %c0_218, %c32_219], %306 {strides = array<i32>} : memref<2x4x64xf32, #tpu.memory_space<vmem>>, vector<2x4x8xf32>,
    %308 = vector.extract_strided_slice %297 {offsets = [0, 0, 86], sizes = [2, 4, 8], strides = [1, 1, 1]} : vector<2x4x144xf32> to vector<2x4x8xf32>
    %c0_220 = arith.constant 0 : index
    %c0_221 = arith.constant 0 : index
    %c40_222 = arith.constant 40 : index
    %309 = vector.load %arg8[%c0_220, %c0_221, %c40_222] : memref<2x4x64xf32, #tpu.memory_space<vmem>>, vector<2x4x8xf32>
    tpu.vector_store %arg8[%c0_220, %c0_221, %c40_222], %308 {strides = array<i32>} : memref<2x4x64xf32, #tpu.memory_space<vmem>>, vector<2x4x8xf32>,
    %310 = vector.extract_strided_slice %297 {offsets = [0, 0, 98], sizes = [2, 4, 8], strides = [1, 1, 1]} : vector<2x4x144xf32> to vector<2x4x8xf32>
    %c0_223 = arith.constant 0 : index
    %c0_224 = arith.constant 0 : index
    %c48_225 = arith.constant 48 : index
    %311 = vector.load %arg8[%c0_223, %c0_224, %c48_225] : memref<2x4x64xf32, #tpu.memory_space<vmem>>, vector<2x4x8xf32>
    tpu.vector_store %arg8[%c0_223, %c0_224, %c48_225], %310 {strides = array<i32>} : memref<2x4x64xf32, #tpu.memory_space<vmem>>, vector<2x4x8xf32>,
    %312 = vector.extract_strided_slice %297 {offsets = [0, 0, 110], sizes = [2, 4, 8], strides = [1, 1, 1]} : vector<2x4x144xf32> to vector<2x4x8xf32>
    %c0_226 = arith.constant 0 : index
    %c0_227 = arith.constant 0 : index
    %c56_228 = arith.constant 56 : index
    %313 = vector.load %arg8[%c0_226, %c0_227, %c56_228] : memref<2x4x64xf32, #tpu.memory_space<vmem>>, vector<2x4x8xf32>
    tpu.vector_store %arg8[%c0_226, %c0_227, %c56_228], %312 {strides = array<i32>} : memref<2x4x64xf32, #tpu.memory_space<vmem>>, vector<2x4x8xf32>,
    return
  }
}

</mosaic_0001>

<llo_original>
// kernel: mixed_op_forward.2
$region0: #{mixed_op_forward.2}
  #allocation0 [shape = 'u32[]', space=smem, size = 0x4, offset = 0x4, fixed_abs, tag = 'smem constant byte address 0x4 - core index']
  #allocation1 [shape = 'u32[72,128]{1,0:T(1,128)}', space=vmem, size = 0x9000, scoped, tag = 'internal scratch']
  %s0 = inlined_call_operand.vmem [shape: f32[2,16,64], index: 0, kind: input, shape index: {}]
  %s1 = inlined_call_operand.vmem [shape: f32[16,8], index: 1, kind: input, shape index: {}]
  %s2 = inlined_call_operand.vmem [shape: f32[8,16], index: 2, kind: input, shape index: {}]
  %s3 = inlined_call_operand.vmem [shape: f32[2,16,1], index: 3, kind: output, shape index: {0}]
  %s4 = inlined_call_operand.vmem [shape: f32[2,16,64], index: 4, kind: output, shape index: {1}]
  %5 = xla_tuple %s3, %s4
  %s6 = sld [smem:[#allocation0]]
  $region53: #{mixed_op_forward.2} parent=0
    _
  %s8 = ssub.s32 1, %s6
  %s9 = scalar_select 0, %s8, %s6
  loop: start=0, step=1, limit=4
  $region2: #{mixed_op_forward.2} parent=0 // loop_pre_header
    _
  $region3: #{mixed_op_forward.2} parent=0 // loop_header
    %s11 = sphi 0, %s15
    %p12 = scmp.ge.s32.totalorder %s11, 4
    %s21 = sphi 0, %s23
    %s24 = sphi 0, %s21
    %s25 = sphi 0, %s24
    %s41 = sphi 0, %s25
    %s45 = sphi 0, %s45
    %s47 = sphi 0, %s45
    %s48 = sphi 0, %s47
    %s62 = sphi 0, %s48
    %s66 = sphi 0, %s66
    %s68 = sphi 0, %s66
    %s69 = sphi 0, %s68
    %s83 = sphi 0, %s69
    %s89 = sphi 0, %s91
    %s92 = sphi 0, %s89
    %s93 = sphi 0, %s92
    %s109 = sphi 0, %s93
    %s115 = sphi 0, %s117
    %s118 = sphi 0, %s115
    %s119 = sphi 0, %s118
    %s135 = sphi 0, %s119
  $region4: #{mixed_op_forward.2} parent=0 // loop_header_branch
    %14 = sbr.rel (%p12) target = $region8
  $region5: #{mixed_op_forward.2} parent=0 // loop_body
    %s16 = ssub.s32 %s11, 1
    %s17 = ssub.s32 %s11, 2
    %s18 = sadd.s32 %s11, 1
    %s19 = ssub.s32 %s11, %s18
    %p20 = scmp.eq.s32.totalorder %s19, 0
    %s22 = sadd.s32 %s21, 1
    %s23 = scalar_select %p20, %s21, %s22
    %p26 = pneg %p20
    %p27 = scmp.eq.s32.totalorder %s11, 1
    %p28 = por %p26, %p27
    %p29 = scmp.ne.s32.totalorder %s21, %s24
    %p30 = scmp.eq.s32.totalorder %s11, 0
    %p31 = por %p29, %p30
    %p32 = scmp.ne.s32.totalorder %s21, %s24
    %p33 = scmp.eq.s32.totalorder %s16, 1
    %p34 = por %p32, %p33
    %p35 = scmp.ne.s32.totalorder %s24, %s25
    %p36 = scmp.eq.s32.totalorder %s16, 0
    %p37 = por %p35, %p36
    %p38 = scmp.ne.s32.totalorder %s24, %s25
    %p39 = scmp.eq.s32.totalorder %s17, 1
    %p40 = por %p38, %p39
    %p42 = scmp.ne.s32.totalorder %s25, %s41
    %p43 = scmp.eq.s32.totalorder %s17, 0
    %p44 = por %p42, %p43
    %s46 = sadd.s32 %s45, 1
    %p49 = scmp.eq.s32.totalorder %s11, 1
    %p50 = scmp.ne.s32.totalorder %s45, %s47
    %p51 = scmp.eq.s32.totalorder %s11, 0
    %p52 = por %p50, %p51
    %p53 = scmp.ne.s32.totalorder %s45, %s47
    %p54 = scmp.eq.s32.totalorder %s16, 1
    %p55 = por %p53, %p54
    %p56 = scmp.ne.s32.totalorder %s47, %s48
    %p57 = scmp.eq.s32.totalorder %s16, 0
    %p58 = por %p56, %p57
    %p59 = scmp.ne.s32.totalorder %s47, %s48
    %p60 = scmp.eq.s32.totalorder %s17, 1
    %p61 = por %p59, %p60
    %p63 = scmp.ne.s32.totalorder %s48, %s62
    %p64 = scmp.eq.s32.totalorder %s17, 0
    %p65 = por %p63, %p64
    %s67 = sadd.s32 %s66, 1
    %p70 = scmp.eq.s32.totalorder %s11, 1
    %p71 = scmp.ne.s32.totalorder %s66, %s68
    %p72 = scmp.eq.s32.totalorder %s11, 0
    %p73 = por %p71, %p72
    %p74 = scmp.ne.s32.totalorder %s66, %s68
    %p75 = scmp.eq.s32.totalorder %s16, 1
    %p76 = por %p74, %p75
    %p77 = scmp.ne.s32.totalorder %s68, %s69
    %p78 = scmp.eq.s32.totalorder %s16, 0
    %p79 = por %p77, %p78
    %p80 = scmp.ne.s32.totalorder %s68, %s69
    %p81 = scmp.eq.s32.totalorder %s17, 1
    %p82 = por %p80, %p81
    %p84 = scmp.ne.s32.totalorder %s69, %s83
    %p85 = scmp.eq.s32.totalorder %s17, 0
    %p86 = por %p84, %p85
    %s87 = ssub.s32 %s11, %s18
    %p88 = scmp.eq.s32.totalorder %s87, 0
    %s90 = sadd.s32 %s89, 1
    %s91 = scalar_select %p88, %s89, %s90
    %p94 = pneg %p88
    %p95 = scmp.eq.s32.totalorder %s11, 1
    %p96 = por %p94, %p95
    %p97 = scmp.ne.s32.totalorder %s89, %s92
    %p98 = scmp.eq.s32.totalorder %s11, 0
    %p99 = por %p97, %p98
    %p100 = scmp.ne.s32.totalorder %s89, %s92
    %p101 = scmp.eq.s32.totalorder %s16, 1
    %p102 = por %p100, %p101
    %p103 = scmp.ne.s32.totalorder %s92, %s93
    %p104 = scmp.eq.s32.totalorder %s16, 0
    %p105 = por %p103, %p104
    %p106 = scmp.ne.s32.totalorder %s92, %s93
    %p107 = scmp.eq.s32.totalorder %s17, 1
    %p108 = por %p106, %p107
    %p110 = scmp.ne.s32.totalorder %s93, %s109
    %p111 = scmp.eq.s32.totalorder %s17, 0
    %p112 = por %p110, %p111
    %s113 = ssub.s32 %s11, %s18
    %p114 = scmp.eq.s32.totalorder %s113, 0
    %s116 = sadd.s32 %s115, 1
    %s117 = scalar_select %p114, %s115, %s116
    %p120 = pneg %p114
    %p121 = scmp.eq.s32.totalorder %s11, 1
    %p122 = por %p120, %p121
    %p123 = scmp.ne.s32.totalorder %s115, %s118
    %p124 = scmp.eq.s32.totalorder %s11, 0
    %p125 = por %p123, %p124
    %p126 = scmp.ne.s32.totalorder %s115, %s118
    %p127 = scmp.eq.s32.totalorder %s16, 1
    %p128 = por %p126, %p127
    %p129 = scmp.ne.s32.totalorder %s118, %s119
    %p130 = scmp.eq.s32.totalorder %s16, 0
    %p131 = por %p129, %p130
    %p132 = scmp.ne.s32.totalorder %s118, %s119
    %p133 = scmp.eq.s32.totalorder %s17, 1
    %p134 = por %p132, %p133
    %p136 = scmp.ne.s32.totalorder %s119, %s135
    %p137 = scmp.eq.s32.totalorder %s17, 0
    %p138 = por %p136, %p137
    %p139 = scmp.le.s32.totalorder 1, %s11
    %p140 = scmp.lt.s32.totalorder %s11, 3
    %p141 = pnand %p139, %p140
    %p142 = pneg %p141
    // Predicated region
    $region9: #{mixed_op_forward.2} parent=5 // pred_check
      _
    $region10: #{mixed_op_forward.2} parent=5 // pred_check_branch
      %144 = sbr.rel (%p141) target = $region12
    $region11: #{mixed_op_forward.2} parent=5 // pred_region
      %s145 = ssub.s32 %s11, 1
      // Predicated region
      $region13: #{mixed_op_forward.2} parent=11 // pred_check
        %p146 = pneg %p58
      $region14: #{mixed_op_forward.2} parent=11 // pred_check_branch
        %148 = sbr.rel (%p146) target = $region16
      $region15: #{mixed_op_forward.2} parent=11 // pred_region
        _
      $region16: #{mixed_op_forward.2} parent=11 // pred_fallthru
        _
      // Predicated region
      $region17: #{mixed_op_forward.2} parent=11 // pred_check
        %p149 = pneg %p79
      $region18: #{mixed_op_forward.2} parent=11 // pred_check_branch
        %151 = sbr.rel (%p149) target = $region20
      $region19: #{mixed_op_forward.2} parent=11 // pred_region
        _
      $region20: #{mixed_op_forward.2} parent=11 // pred_fallthru
        _
    $region12: #{mixed_op_forward.2} parent=5 // pred_fallthru
      _
    %p152 = scmp.lt.s32.totalorder %s11, 2
    // Predicated region
    $region21: #{mixed_op_forward.2} parent=5 // pred_check
      %p153 = pneg %p152
    $region22: #{mixed_op_forward.2} parent=5 // pred_check_branch
      %155 = sbr.rel (%p153) target = $region24
    $region23: #{mixed_op_forward.2} parent=5 // pred_region
      // Predicated region
      $region25: #{mixed_op_forward.2} parent=23 // pred_check
        %p156 = pneg %p31
      $region26: #{mixed_op_forward.2} parent=23 // pred_check_branch
        %158 = sbr.rel (%p156) target = $region28
      $region27: #{mixed_op_forward.2} parent=23 // pred_region
        %p159 = scmp.lt.s32.totalorder %s11, 1
        %s160 = scalar_select %p159, %s11, 1
        %s161 = smul.addr %s160, 2
        %s162 = smul.addr %s161, 8
        %s163 = scalar_lea.vmem %s0, %s162
      $region28: #{mixed_op_forward.2} parent=23 // pred_fallthru
        _
    $region24: #{mixed_op_forward.2} parent=5 // pred_fallthru
      _
    %p164 = scmp.le.s32.totalorder 1, %s11
    %p165 = scmp.lt.s32.totalorder %s11, 3
    %p166 = pnand %p164, %p165
    %p167 = pneg %p166
    // Predicated region
    $region29: #{mixed_op_forward.2} parent=5 // pred_check
      _
    $region30: #{mixed_op_forward.2} parent=5 // pred_check_branch
      %169 = sbr.rel (%p166) target = $region32
    $region31: #{mixed_op_forward.2} parent=5 // pred_region
      %s170 = ssub.s32 %s11, 1
      %p171 = scmp.lt.s32.totalorder %s16, 1
      %s172 = scalar_select %p171, %s16, 1
      %s173 = smul.addr %s172, 2
      %s174 = smul.addr %s173, 8
      %s175 = scalar_lea.vmem %s0, %s174
      %p176 = pneg %p37
      %p177 = pneg %p34
      %p178 = pneg %p58
      %p179 = pneg %p55
      %p180 = pneg %p79
      %p181 = pneg %p76
      %p182 = pneg %p105
      %p183 = pneg %p102
      %p184 = scmp.lt.s32.totalorder %s16, 1
      %s185 = scalar_select %p184, %s16, 1
      %s186 = smul.addr %s185, 2
      %s187 = smul.addr %s186, 8
      %s188 = scalar_lea.vmem %s3, %s187
      %p189 = pneg %p131
      %p190 = pneg %p128
      %p191 = scmp.lt.s32.totalorder %s16, 1
      %s192 = scalar_select %p191, %s16, 1
      %s193 = smul.addr %s192, 2
      %s194 = smul.addr %s193, 8
      %s195 = scalar_lea.vmem %s4, %s194
      %p196 = scmp.lt.s32.totalorder %s16, 1
      %s197 = scalar_select %p196, %s16, 1
      %s198 = smul.addr %s197, 2
      %s199 = smul.addr %s198, 8
      %s200 = scalar_lea.vmem %s0, %s199
      %p201 = scmp.lt.s32.totalorder %s16, 1
      %s202 = scalar_select %p201, %s16, 1
      %s203 = smul.addr %s202, 2
      %s204 = smul.addr %s203, 8
      %s205 = scalar_lea.vmem %s3, %s204
      %p206 = scmp.lt.s32.totalorder %s16, 1
      %s207 = scalar_select %p206, %s16, 1
      %s208 = smul.addr %s207, 2
      %s209 = smul.addr %s208, 8
      %s210 = scalar_lea.vmem %s4, %s209
      %v211 = vld [vmem:[%s200] sm:$0xff]
      %v212 = vld [vmem:[%s200 + $0x8] sm:$0xff]
      %v213 = vld [vmem:[%s1] sm:$0xff]
      %v214 = vld [vmem:[%s1 + $0x8] sm:$0xff]
      %v215 = vld [vmem:[%s2] sm:$0xff]
      %vm216 = vcmask 523264
      %v217 = vsel %vm216, %v211, 0.0
      %218 = vadd.xlane.f32.xlu0 %v217
      %v219 = vpop.xlane.xlu0 %218
      %v220 = vsel %vm216, %v212, 0.0
      %221 = vadd.xlane.f32.xlu0 %v220
      %v222 = vpop.xlane.xlu0 %221
      %v223 = vrcp.pop 64.0
      %v224 = vmul.f32 64.0, %v223
      %v225 = vsub.f32 1.0, %v224
      %v226 = vmul.f32 %v223, %v225
      %v227 = vadd.f32 %v223, %v226
      %vm228 = vweird.f32 %v223
      %v229 = vsel %vm228, %v223, %v227
      %v230 = vmul.f32 %v219, %v229
      %v231 = vmul.f32 %v222, %v229
      %v232 = vsel %vm216, %v211, -inf
      %233 = vmax.xlane.f32.xlu0 %v232
      %v234 = vpop.xlane.xlu0 %233
      %v235 = vsel %vm216, %v212, -inf
      %236 = vmax.xlane.f32.xlu0 %v235
      %v237 = vpop.xlane.xlu0 %236
      %v240 = vlaneseq
      %v241 = vand.u32 %v240, 127
      %v242 = vperm.slane %v230, %v241
      %v243 = vadd.s32 %v241, 4294967288
      %v244 = vperm.slane %v231, %v243
      %vm245 = vcmask 130112
      %v246 = vsel %vm245, %v244, %v242
      %vm247 = vcmask 130048
      %v248 = vsel %vm247, %v246, 0
      %250 = vmatpush.msra.mxu0 0.0
      %251 = vmatpush.msra.mxu0 0.0
      %252 = vmatpush.msra.mxu0 0.0
      %253 = vmatpush.msra.mxu0 0.0
      %254 = vmatpush.msra.mxu0 0.0
      %255 = vmatpush.msra.mxu0 0.0
      %256 = vmatpush.msra.mxu0 0.0
      %257 = vmatpush.msra.mxu0 0.0
      %258 = vmatpush.msra.mxu0 0.0
      %259 = vmatpush.msra.mxu0 0.0
      %260 = vmatpush.msra.mxu0 0.0
      %261 = vmatpush.msra.mxu0 0.0
      %262 = vmatpush.msra.mxu0 0.0
      %263 = vmatpush.msra.mxu0 0.0
      %264 = vmatpush.msra.mxu0 %v214
      %265 = vmatpush.msra.mxu0 %v213
      %266 = vmatmul.f32.gmra.mxu0 %v248
      %v267 = vpop.f32.mrf.mxu0
      %v268 = vadd.f32 0.0, %v267
      %269 = vdwg.mxu0
      %v270 = vmax.f32 %v268, 0.0
      %v273 = vperm.slane %v234, %v241
      %v274 = vperm.slane %v237, %v243
      %v275 = vsel %vm245, %v274, %v273
      %v276 = vsel %vm247, %v275, 0
      %278 = vmatpush.msra.mxu0 0.0
      %279 = vmatpush.msra.mxu0 0.0
      %280 = vmatpush.msra.mxu0 0.0
      %281 = vmatpush.msra.mxu0 0.0
      %282 = vmatpush.msra.mxu0 0.0
      %283 = vmatpush.msra.mxu0 0.0
      %284 = vmatpush.msra.mxu0 0.0
      %285 = vmatpush.msra.mxu0 0.0
      %286 = vmatpush.msra.mxu0 0.0
      %287 = vmatpush.msra.mxu0 0.0
      %288 = vmatpush.msra.mxu0 0.0
      %289 = vmatpush.msra.mxu0 0.0
      %290 = vmatpush.msra.mxu0 0.0
      %291 = vmatpush.msra.mxu0 0.0
      %292 = vmatpush.msra.mxu0 %v214
      %293 = vmatpush.msra.mxu0 %v213
      %294 = vmatmul.f32.gmra.mxu0 %v276
      %v295 = vpop.f32.mrf.mxu0
      %v296 = vadd.f32 0.0, %v295
      %297 = vdwg.mxu0
      %v298 = vmax.f32 %v296, 0.0
      %vm299 = vcmask 64512
      %v301 = vsel %vm299, %v298, 0
      %303 = vmatpush.msra.mxu0 0.0
      %304 = vmatpush.msra.mxu0 0.0
      %305 = vmatpush.msra.mxu0 0.0
      %306 = vmatpush.msra.mxu0 0.0
      %307 = vmatpush.msra.mxu0 0.0
      %308 = vmatpush.msra.mxu0 0.0
      %309 = vmatpush.msra.mxu0 0.0
      %310 = vmatpush.msra.mxu0 0.0
      %311 = vmatpush.msra.mxu0 0.0
      %312 = vmatpush.msra.mxu0 0.0
      %313 = vmatpush.msra.mxu0 0.0
      %314 = vmatpush.msra.mxu0 0.0
      %315 = vmatpush.msra.mxu0 0.0
      %316 = vmatpush.msra.mxu0 0.0
      %317 = vmatpush.msra.mxu0 0.0
      %318 = vmatpush.msra.mxu0 %v215
      %319 = vmatmul.f32.gmra.mxu0 %v301
      %v320 = vpop.f32.mrf.mxu0
      %v321 = vadd.f32 0.0, %v320
      %322 = vdwg.mxu0
      %v324 = vsel %vm299, %v270, 0
      %326 = vmatpush.msra.mxu0 0.0
      %327 = vmatpush.msra.mxu0 0.0
      %328 = vmatpush.msra.mxu0 0.0
      %329 = vmatpush.msra.mxu0 0.0
      %330 = vmatpush.msra.mxu0 0.0
      %331 = vmatpush.msra.mxu0 0.0
      %332 = vmatpush.msra.mxu0 0.0
      %333 = vmatpush.msra.mxu0 0.0
      %334 = vmatpush.msra.mxu0 0.0
      %335 = vmatpush.msra.mxu0 0.0
      %336 = vmatpush.msra.mxu0 0.0
      %337 = vmatpush.msra.mxu0 0.0
      %338 = vmatpush.msra.mxu0 0.0
      %339 = vmatpush.msra.mxu0 0.0
      %340 = vmatpush.msra.mxu0 0.0
      %341 = vmatpush.msra.mxu0 %v215
      %342 = vmatmul.f32.gmra.mxu0 %v324
      %v343 = vpop.f32.mrf.mxu0
      %v344 = vadd.f32 %v321, %v343
      %345 = vdwg.mxu0
      %v346 = vxor.u32 %v344, 2147483648
      %v347 = vmul.f32 %v346, 1.442695
      %v348 = vpow.pop %v347
      %v349 = vadd.f32 %v348, 1.0
      %v350 = vrcp.pop %v349
      %v351 = vmul.f32 %v349, %v350
      %v352 = vsub.f32 1.0, %v351
      %v353 = vmul.f32 %v350, %v352
      %v354 = vadd.f32 %v350, %v353
      %vm355 = vweird.f32 %v349
      %vm356 = vweird.f32 %v350
      %vm357 = vmor %vm355, %vm356
      %v358 = vsel %vm357, %v350, %v354
      %v359 = vand.u32 2147483647, %v349
      %vm360 = vcmp.eq.f32.partialorder %v359, 8.507059e+37
      %v361 = vand.u32 %v349, 2147483648
      %v362 = vor.u32 1.1754944e-38, %v361
      %v363 = vsel %vm360, %v362, %v358
      %v364 = vmul.f32 1.0, %v363
      %v365 = vperm.slane %v364, 0
      %v366 = vlaneseq
      %v367 = vshrl.u32 %v366, 7
      %369 = vset.pattern.permute.xlu0 %v367
      %370 = vperm.xlu0 %369, %v365
      %v371 = vpop.permute.xlu0 %370
      %v372 = vlaneseq
      %v373 = vshrl.u32 %v372, 7
      %v374 = vadd.s32 %v373, 8
      %375 = vset.pattern.permute.xlu0 %v374
      %376 = vperm.xlu0 %375, %v365
      %v377 = vpop.permute.xlu0 %376
      %vm378 = vcmask 7168
      %379 = vst.msk [vmem:[%s205] sm:$0xff] %vm378, %v371
      %380 = vst.msk [vmem:[%s205 + $0x8] sm:$0xff] %vm378, %v377
      %v381 = vmul.f32 %v211, %v371
      %v382 = vmul.f32 %v212, %v377
      %383 = vst.msk [vmem:[%s210] sm:$0xff] %vm216, %v381
      %384 = vst.msk [vmem:[%s210 + $0x8] sm:$0xff] %vm216, %v382
      %p385 = scmp.lt.s32.totalorder %s16, 1
      %s386 = scalar_select %p385, %s16, 1
      %s387 = smul.addr %s386, 2
      %s388 = smul.addr %s387, 8
      %s389 = scalar_lea.vmem %s3, %s388
      %p390 = scmp.lt.s32.totalorder %s16, 1
      %s391 = scalar_select %p390, %s16, 1
      %s392 = smul.addr %s391, 2
      %s393 = smul.addr %s392, 8
      %s394 = scalar_lea.vmem %s4, %s393
      // Predicated region
      $region33: #{mixed_op_forward.2} parent=31 // pred_check
        %p395 = pneg %p102
      $region34: #{mixed_op_forward.2} parent=31 // pred_check_branch
        %397 = sbr.rel (%p395) target = $region36
      $region35: #{mixed_op_forward.2} parent=31 // pred_region
        _
      $region36: #{mixed_op_forward.2} parent=31 // pred_fallthru
        _
      // Predicated region
      $region37: #{mixed_op_forward.2} parent=31 // pred_check
        %p398 = pneg %p128
      $region38: #{mixed_op_forward.2} parent=31 // pred_check_branch
        %400 = sbr.rel (%p398) target = $region40
      $region39: #{mixed_op_forward.2} parent=31 // pred_region
        _
      $region40: #{mixed_op_forward.2} parent=31 // pred_fallthru
        _
    $region32: #{mixed_op_forward.2} parent=5 // pred_fallthru
      _
    %p401 = scmp.le.s32.totalorder 2, %s11
    // Predicated region
    $region41: #{mixed_op_forward.2} parent=5 // pred_check
      %p402 = pneg %p401
    $region42: #{mixed_op_forward.2} parent=5 // pred_check_branch
      %404 = sbr.rel (%p402) target = $region44
    $region43: #{mixed_op_forward.2} parent=5 // pred_region
      %s405 = ssub.s32 %s11, 2
      // Predicated region
      $region45: #{mixed_op_forward.2} parent=43 // pred_check
        %p406 = pneg %p108
      $region46: #{mixed_op_forward.2} parent=43 // pred_check_branch
        %408 = sbr.rel (%p406) target = $region48
      $region47: #{mixed_op_forward.2} parent=43 // pred_region
        %p409 = scmp.lt.s32.totalorder %s17, 1
        %s410 = scalar_select %p409, %s17, 1
        %s411 = smul.addr %s410, 2
        %s412 = smul.addr %s411, 8
        %s413 = scalar_lea.vmem %s3, %s412
      $region48: #{mixed_op_forward.2} parent=43 // pred_fallthru
        _
      // Predicated region
      $region49: #{mixed_op_forward.2} parent=43 // pred_check
        %p414 = pneg %p134
      $region50: #{mixed_op_forward.2} parent=43 // pred_check_branch
        %416 = sbr.rel (%p414) target = $region52
      $region51: #{mixed_op_forward.2} parent=43 // pred_region
        %p417 = scmp.lt.s32.totalorder %s17, 1
        %s418 = scalar_select %p417, %s17, 1
        %s419 = smul.addr %s418, 2
        %s420 = smul.addr %s419, 8
        %s421 = scalar_lea.vmem %s4, %s420
      $region52: #{mixed_op_forward.2} parent=43 // pred_fallthru
        _
    $region44: #{mixed_op_forward.2} parent=5 // pred_fallthru
      _
  $region6: #{mixed_op_forward.2} parent=0 // loop_footer
    %s15 = sadd.s32 1, %s11
  $region7: #{mixed_op_forward.2} parent=0 // loop_footer_branch
    %10 = sbr.rel target = $region3
  $region8: #{mixed_op_forward.2} parent=0 // loop_exit
    _

// kernel: mixed_op_forward.3
$region0: #{mixed_op_forward.3}
  #allocation0 [shape = 'u32[]', space=smem, size = 0x4, offset = 0x4, fixed_abs, tag = 'smem constant byte address 0x4 - core index']
  #allocation1 [shape = 'u32[72,128]{1,0:T(1,128)}', space=vmem, size = 0x9000, scoped, tag = 'internal scratch']
  #allocation2 [shape = 'f32[2,4,196]{2,1,0:T(4,128)}', space=vmem, size = 0x2000, scoped, tag = 'scratch operand']
  #allocation3 [shape = 'bf16[2,36,144]{2,1,0:T(8,128)(2,1)}', space=vmem, size = 0xa000, scoped, tag = 'scratch operand']
  #allocation4 [shape = 'bf16[2,36,144]{2,1,0:T(8,128)(2,1)}', space=vmem, size = 0xa000, scoped, tag = 'scratch operand']
  %s0 = inlined_call_operand.vmem [shape: f32[2,4,64], index: 0, kind: input, shape index: {}]
  %s1 = inlined_call_operand.vmem [shape: f32[1,1,196], index: 1, kind: input, shape index: {}]
  %s2 = inlined_call_operand.vmem [shape: bf16[4,4], index: 2, kind: input, shape index: {}]
  %s3 = inlined_call_operand.vmem [shape: bf16[4,36], index: 3, kind: input, shape index: {}]
  %s4 = inlined_call_operand.vmem [shape: bf16[4,36], index: 4, kind: input, shape index: {}]
  %s5 = inlined_call_operand.vmem [shape: f32[24,3], index: 5, kind: input, shape index: {}]
  %s6 = inlined_call_operand.vmem [shape: f32[3,24], index: 6, kind: input, shape index: {}]
  %s7 = inlined_call_operand.vmem [shape: f32[2,24], index: 7, kind: output, shape index: {0}]
  %s8 = inlined_call_operand.vmem [shape: f32[2,4,64], index: 8, kind: output, shape index: {1}]
  %9 = xla_tuple %s7, %s8
  %s10 = sld [smem:[#allocation0]]
  $region46: #{mixed_op_forward.3} parent=0
    _
  %s12 = ssub.s32 1, %s10
  %s13 = scalar_select 0, %s12, %s10
  // Predicated region
  $region2: #{mixed_op_forward.3} parent=0 // pred_check
    _
  $region3: #{mixed_op_forward.3} parent=0 // pred_check_branch
    %15 = sbr.rel (0) target = $region5
  $region4: #{mixed_op_forward.3} parent=0 // pred_region
    _
  $region5: #{mixed_op_forward.3} parent=0 // pred_fallthru
    _
  // Predicated region
  $region6: #{mixed_op_forward.3} parent=0 // pred_check
    _
  $region7: #{mixed_op_forward.3} parent=0 // pred_check_branch
    %17 = sbr.rel (0) target = $region9
  $region8: #{mixed_op_forward.3} parent=0 // pred_region
    _
  $region9: #{mixed_op_forward.3} parent=0 // pred_fallthru
    _
  // Predicated region
  $region10: #{mixed_op_forward.3} parent=0 // pred_check
    _
  $region11: #{mixed_op_forward.3} parent=0 // pred_check_branch
    %19 = sbr.rel (0) target = $region13
  $region12: #{mixed_op_forward.3} parent=0 // pred_region
    _
  $region13: #{mixed_op_forward.3} parent=0 // pred_fallthru
    _
  // Predicated region
  $region14: #{mixed_op_forward.3} parent=0 // pred_check
    _
  $region15: #{mixed_op_forward.3} parent=0 // pred_check_branch
    %21 = sbr.rel (0) target = $region17
  $region16: #{mixed_op_forward.3} parent=0 // pred_region
    _
  $region17: #{mixed_op_forward.3} parent=0 // pred_fallthru
    _
  // Predicated region
  $region18: #{mixed_op_forward.3} parent=0 // pred_check
    _
  $region19: #{mixed_op_forward.3} parent=0 // pred_check_branch
    %23 = sbr.rel (0) target = $region21
  $region20: #{mixed_op_forward.3} parent=0 // pred_region
    _
  $region21: #{mixed_op_forward.3} parent=0 // pred_fallthru
    _
  // Predicated region
  $region22: #{mixed_op_forward.3} parent=0 // pred_check
    _
  $region23: #{mixed_op_forward.3} parent=0 // pred_check_branch
    %25 = sbr.rel (0) target = $region25
  $region24: #{mixed_op_forward.3} parent=0 // pred_region
    _
  $region25: #{mixed_op_forward.3} parent=0 // pred_fallthru
    _
  // Predicated region
  $region26: #{mixed_op_forward.3} parent=0 // pred_check
    _
  $region27: #{mixed_op_forward.3} parent=0 // pred_check_branch
    %27 = sbr.rel (0) target = $region29
  $region28: #{mixed_op_forward.3} parent=0 // pred_region
    _
  $region29: #{mixed_op_forward.3} parent=0 // pred_fallthru
    _
  %vm29 = vcmask 1043456
  %vm30 = vcmask 556036
  %vm31 = vmor %vm30, %vm29
  %32 = vst.msk [vmem:[#allocation2] sm:$0xff] %vm31, 0.0
  %33 = vst.msk [vmem:[#allocation2 + $0x8] sm:$0xff] %vm31, 0.0
  %v34 = vld [vmem:[%s0] sm:$0xf]
  %v35 = vld [vmem:[%s0 + $0x4] sm:$0xf]
  %38 = vrot.lane.b32.xlu0 %v34, 52
  %v39 = vpop.permute.xlu0 %38
  %40 = vrot.lane.b32.xlu0 %v35, 52
  %v41 = vpop.permute.xlu0 %40
  %vm44 = vcmask 486816
  %45 = vst.msk [vmem:[#allocation2] sm:$0xf] %vm44, %v39
  %46 = vst.msk [vmem:[#allocation2 + $0x8] sm:$0xf] %vm44, %v41
  %v47 = vld [vmem:[%s0] sm:$0xf]
  %v48 = vld [vmem:[%s0 + $0x4] sm:$0xf]
  %51 = vrot.lane.b32.xlu0 %v47, 56
  %v52 = vpop.permute.xlu0 %51
  %53 = vrot.lane.b32.xlu0 %v48, 56
  %v54 = vpop.permute.xlu0 %53
  %vm57 = vcmask 585216
  %58 = vst.msk [vmem:[#allocation2] sm:$0xf] %vm57, %v52
  %59 = vst.msk [vmem:[#allocation2 + $0x8] sm:$0xf] %vm57, %v54
  %v60 = vld [vmem:[%s0] sm:$0xf]
  %v61 = vld [vmem:[%s0 + $0x4] sm:$0xf]
  %64 = vrot.lane.b32.xlu0 %v60, 60
  %v65 = vpop.permute.xlu0 %64
  %66 = vrot.lane.b32.xlu0 %v61, 60
  %v67 = vpop.permute.xlu0 %66
  %vm70 = vcmask 683616
  %71 = vst.msk [vmem:[#allocation2] sm:$0xf] %vm70, %v65
  %72 = vst.msk [vmem:[#allocation2 + $0x8] sm:$0xf] %vm70, %v67
  %v73 = vld [vmem:[%s0] sm:$0xf]
  %v74 = vld [vmem:[%s0 + $0x4] sm:$0xf]
  %77 = vrot.lane.b32.xlu0 %v73, 64
  %v78 = vpop.permute.xlu0 %77
  %79 = vrot.lane.b32.xlu0 %v74, 64
  %v80 = vpop.permute.xlu0 %79
  %vm83 = vcmask 782016
  %84 = vst.msk [vmem:[#allocation2] sm:$0xf] %vm83, %v78
  %85 = vst.msk [vmem:[#allocation2 + $0x8] sm:$0xf] %vm83, %v80
  %v86 = vld [vmem:[%s0] sm:$0xf]
  %v87 = vld [vmem:[%s0 + $0x4] sm:$0xf]
  %90 = vrot.lane.b32.xlu0 %v86, 68
  %v91 = vpop.permute.xlu0 %90
  %92 = vrot.lane.b32.xlu0 %v87, 68
  %v93 = vpop.permute.xlu0 %92
  %vm96 = vcmask 880416
  %97 = vst.msk [vmem:[#allocation2] sm:$0xf] %vm96, %v91
  %98 = vst.msk [vmem:[#allocation2 + $0x8] sm:$0xf] %vm96, %v93
  %v99 = vld [vmem:[%s0] sm:$0xf]
  %v100 = vld [vmem:[%s0 + $0x4] sm:$0xf]
  %103 = vrot.lane.b32.xlu0 %v99, 72
  %v104 = vpop.permute.xlu0 %103
  %105 = vrot.lane.b32.xlu0 %v100, 72
  %v106 = vpop.permute.xlu0 %105
  %vm109 = vcmask 978816
  %110 = vst.msk [vmem:[#allocation2] sm:$0xf] %vm109, %v104
  %111 = vst.msk [vmem:[#allocation2 + $0x8] sm:$0xf] %vm109, %v106
  %v112 = vld [vmem:[%s0] sm:$0xf]
  %v113 = vld [vmem:[%s0 + $0x4] sm:$0xf]
  %116 = vrot.lane.b32.xlu0 %v112, 76
  %v117 = vpop.permute.xlu0 %116
  %118 = vrot.lane.b32.xlu0 %v113, 76
  %v119 = vpop.permute.xlu0 %118
  %v120 = vrot.slane %v117, 4
  %v121 = vrot.slane %v119, 4
  %vm122 = vcmask 621568
  %v123 = vsel %vm122, %v120, %v117
  %v124 = vsel %vm122, %v121, %v119
  %vm127 = vcmask 1044448
  %vm128 = vcmask 31748
  %vm129 = vmor %vm128, %vm127
  %130 = vst.msk [vmem:[#allocation2] sm:$0xff] %vm129, %v123
  %131 = vst.msk [vmem:[#allocation2 + $0x8] sm:$0xff] %vm129, %v124
  %v132 = vld [vmem:[%s0] sm:$0xf]
  %v133 = vld [vmem:[%s0 + $0x4] sm:$0xf]
  %136 = vrot.lane.b32.xlu0 %v132, 80
  %v137 = vpop.permute.xlu0 %136
  %138 = vrot.lane.b32.xlu0 %v133, 80
  %v139 = vpop.permute.xlu0 %138
  %vm142 = vcmask 126016
  %143 = vst.msk [vmem:[#allocation2 + $0x4] sm:$0xf] %vm142, %v137
  %144 = vst.msk [vmem:[#allocation2 + $0xc] sm:$0xf] %vm142, %v139
  %v145 = vld [vmem:[%s1] sm:$0x3]
  %v146 = vld [vmem:[#allocation2] sm:$0xff]
  %v147 = vld [vmem:[#allocation2 + $0x8] sm:$0xff]
  %vm148 = vcmp.gt.f32.partialorder %v145, 0.5
  %v149 = vsel %vm148, 1, 0
  %v150 = vperm.slane %v149, 0
  %v151 = vperm.slane %v149, 1
  %vm152 = vcmp.eq.s32.totalorder %v150, 1
  %vm153 = vcmp.eq.s32.totalorder %v151, 1
  %156 = vst [vmem:[#allocation1] ss:$2 sm:$0xff] %v146
  %v157 = vld.sshfl [vmem:[#allocation1] sm:$0xff pattern:$0x75316420]
  %v158 = vld.sshfl [vmem:[#allocation1 + $0x8] sm:$0xff pattern:$0x75316420]
  %s159 = scalar_lea.vmem [#allocation1], 16
  %160 = vst [vmem:[%s159] ss:$2 sm:$0xff] %v147
  %v161 = vld.sshfl [vmem:[#allocation1 + $0x10] sm:$0xff pattern:$0x75316420]
  %v162 = vld.sshfl [vmem:[#allocation1 + $0x18] sm:$0xff pattern:$0x75316420]
  %v167 = vsel %vm152, %v157, -1e+30
  %v168 = vsel %vm153, %v158, -1e+30
  %v169 = vsel %vm152, %v161, -1e+30
  %v170 = vsel %vm153, %v162, -1e+30
  %v171 = vmax.f32 %v167, -1e+30
  %v172 = vmax.f32 %v168, -1e+30
  %v173 = vmax.f32 %v169, -1e+30
  %v174 = vmax.f32 %v170, -1e+30
  %v175 = vadd.f32 %v146, 0.0
  %v176 = vadd.f32 %v147, 0.0
  %177 = vst [vmem:[#allocation1] ss:$2 sm:$0xff] %v146
  %v178 = vld.sshfl [vmem:[#allocation1] sm:$0xff pattern:$0x75316420]
  %v179 = vld.sshfl [vmem:[#allocation1 + $0x8] sm:$0xff pattern:$0x75316420]
  %s180 = scalar_lea.vmem [#allocation1], 16
  %181 = vst [vmem:[%s180] ss:$2 sm:$0xff] %v147
  %v182 = vld.sshfl [vmem:[#allocation1 + $0x10] sm:$0xff pattern:$0x75316420]
  %v183 = vld.sshfl [vmem:[#allocation1 + $0x18] sm:$0xff pattern:$0x75316420]
  %v188 = vpack.c.bf16 %v179, %v178
  %v189 = vpack.c.bf16 %v183, %v182
  %192 = vrot.lane.b32.xlu0 %v188, 115
  %v193 = vpop.permute.xlu0 %192
  %194 = vrot.lane.b32.xlu0 %v189, 115
  %v195 = vpop.permute.xlu0 %194
  %v196 = vrot.slane %v193, 4
  %v197 = vrot.slane %v195, 4
  %vm198 = vcmask 941056
  %v199 = vsel %vm198, %v193, %v196
  %v200 = vsel %vm198, %v195, %v197
  %vm203 = vcmask 1041408
  %vm204 = vcmask 128004
  %vm205 = vmor %vm204, %vm203
  %206 = vst.msk [vmem:[#allocation3] sm:$0x33] %vm205, %v199
  %207 = vst.msk [vmem:[#allocation3 + $0x28] sm:$0x33] %vm205, %v200
  %208 = vst [vmem:[#allocation1] ss:$2 sm:$0xff] %v146
  %v209 = vld.sshfl [vmem:[#allocation1] sm:$0xff pattern:$0x75316420]
  %v210 = vld.sshfl [vmem:[#allocation1 + $0x8] sm:$0xff pattern:$0x75316420]
  %s211 = scalar_lea.vmem [#allocation1], 16
  %212 = vst [vmem:[%s211] ss:$2 sm:$0xff] %v147
  %v213 = vld.sshfl [vmem:[#allocation1 + $0x10] sm:$0xff pattern:$0x75316420]
  %v214 = vld.sshfl [vmem:[#allocation1 + $0x18] sm:$0xff pattern:$0x75316420]
  %v219 = vpack.c.bf16 %v210, %v209
  %v220 = vpack.c.bf16 %v214, %v213
  %221 = vst.msk [vmem:[#allocation4] sm:$0x33] %vm205, %v219
  %222 = vst.msk [vmem:[#allocation4 + $0x28] sm:$0x33] %vm205, %v220
  %v223 = vld [vmem:[#allocation2] sm:$0xff]
  %v224 = vld [vmem:[#allocation2 + $0x8] sm:$0xff]
  %227 = vst [vmem:[#allocation1] ss:$2 sm:$0xff] %v223
  %v228 = vld.sshfl [vmem:[#allocation1] sm:$0xff pattern:$0x75316420]
  %v229 = vld.sshfl [vmem:[#allocation1 + $0x8] sm:$0xff pattern:$0x75316420]
  %s230 = scalar_lea.vmem [#allocation1], 16
  %231 = vst [vmem:[%s230] ss:$2 sm:$0xff] %v224
  %v232 = vld.sshfl [vmem:[#allocation1 + $0x10] sm:$0xff pattern:$0x75316420]
  %v233 = vld.sshfl [vmem:[#allocation1 + $0x18] sm:$0xff pattern:$0x75316420]
  %v238 = vsel %vm152, %v228, -1e+30
  %v239 = vsel %vm153, %v229, -1e+30
  %v240 = vsel %vm152, %v232, -1e+30
  %v241 = vsel %vm153, %v233, -1e+30
  %246 = vrot.lane.b32.xlu0 %v238, 127
  %v247 = vpop.permute.xlu0 %246
  %248 = vrot.lane.b32.xlu0 %v239, 127
  %v249 = vpop.permute.xlu0 %248
  %250 = vrot.lane.b32.xlu0 %v240, 127
  %v251 = vpop.permute.xlu0 %250
  %252 = vrot.lane.b32.xlu0 %v241, 127
  %v253 = vpop.permute.xlu0 %252
  %vm254 = vcmask 1039360
  %v255 = vsel %vm254, %v247, %v249
  %v256 = vsel %vm254, %v251, %v253
  %v261 = vmax.f32 %v171, %v255
  %v262 = vmax.f32 %v172, %v249
  %v263 = vmax.f32 %v173, %v256
  %v264 = vmax.f32 %v174, %v253
  %265 = vrot.lane.b32.xlu0 %v223, 127
  %v266 = vpop.permute.xlu0 %265
  %267 = vrot.lane.b32.xlu0 %v224, 127
  %v268 = vpop.permute.xlu0 %267
  %v269 = vrot.slane %v266, 4
  %v270 = vrot.slane %v268, 4
  %v271 = vsel %vm254, %v266, %v269
  %v272 = vsel %vm254, %v268, %v270
  %v275 = vadd.f32 %v175, %v271
  %v276 = vadd.f32 %v176, %v272
  %277 = vst [vmem:[#allocation1] ss:$2 sm:$0xff] %v223
  %v278 = vld.sshfl [vmem:[#allocation1] sm:$0xff pattern:$0x75316420]
  %v279 = vld.sshfl [vmem:[#allocation1 + $0x8] sm:$0xff pattern:$0x75316420]
  %s280 = scalar_lea.vmem [#allocation1], 16
  %281 = vst [vmem:[%s280] ss:$2 sm:$0xff] %v224
  %v282 = vld.sshfl [vmem:[#allocation1 + $0x10] sm:$0xff pattern:$0x75316420]
  %v283 = vld.sshfl [vmem:[#allocation1 + $0x18] sm:$0xff pattern:$0x75316420]
  %v288 = vpack.c.bf16 %v279, %v278
  %v289 = vpack.c.bf16 %v283, %v282
  %v292 = vrot.slane %v288, 6
  %v293 = vrot.slane %v289, 6
  %294 = vrot.lane.b32.xlu0 %v292, 114
  %v295 = vpop.permute.xlu0 %294
  %296 = vrot.lane.b32.xlu0 %v293, 114
  %v297 = vpop.permute.xlu0 %296
  %v298 = vrot.slane %v295, 4
  %v299 = vrot.slane %v297, 4
  %vm300 = vcmask 932864
  %v301 = vsel %vm300, %v295, %v298
  %v302 = vsel %vm300, %v297, %v299
  %vm305 = vcmask 1043458
  %vm306 = vcmask 130054
  %vm307 = vmor %vm306, %vm305
  %308 = vst.msk [vmem:[#allocation3] sm:$0xcc] %vm307, %v301
  %309 = vst.msk [vmem:[#allocation3 + $0x28] sm:$0xcc] %vm307, %v302
  %310 = vst [vmem:[#allocation1] ss:$2 sm:$0xff] %v223
  %v311 = vld.sshfl [vmem:[#allocation1] sm:$0xff pattern:$0x75316420]
  %v312 = vld.sshfl [vmem:[#allocation1 + $0x8] sm:$0xff pattern:$0x75316420]
  %s313 = scalar_lea.vmem [#allocation1], 16
  %314 = vst [vmem:[%s313] ss:$2 sm:$0xff] %v224
  %v315 = vld.sshfl [vmem:[#allocation1 + $0x10] sm:$0xff pattern:$0x75316420]
  %v316 = vld.sshfl [vmem:[#allocation1 + $0x18] sm:$0xff pattern:$0x75316420]
  %v321 = vpack.c.bf16 %v312, %v311
  %v322 = vpack.c.bf16 %v316, %v315
  %v325 = vrot.slane %v321, 6
  %v326 = vrot.slane %v322, 6
  %327 = vrot.lane.b32.xlu0 %v325, 126
  %v328 = vpop.permute.xlu0 %327
  %329 = vrot.lane.b32.xlu0 %v326, 126
  %v330 = vpop.permute.xlu0 %329
  %v331 = vrot.slane %v328, 4
  %v332 = vrot.slane %v330, 4
  %vm333 = vcmask 1031168
  %v334 = vsel %vm333, %v328, %v331
  %v335 = vsel %vm333, %v330, %v332
  %338 = vst.msk [vmem:[#allocation4] sm:$0xcc] %vm307, %v334
  %339 = vst.msk [vmem:[#allocation4 + $0x28] sm:$0xcc] %vm307, %v335
  %v340 = vld [vmem:[#allocation2] sm:$0xff]
  %v341 = vld [vmem:[#allocation2 + $0x8] sm:$0xff]
  %344 = vst [vmem:[#allocation1] ss:$2 sm:$0xff] %v340
  %v345 = vld.sshfl [vmem:[#allocation1] sm:$0xff pattern:$0x75316420]
  %v346 = vld.sshfl [vmem:[#allocation1 + $0x8] sm:$0xff pattern:$0x75316420]
  %s347 = scalar_lea.vmem [#allocation1], 16
  %348 = vst [vmem:[%s347] ss:$2 sm:$0xff] %v341
  %v349 = vld.sshfl [vmem:[#allocation1 + $0x10] sm:$0xff pattern:$0x75316420]
  %v350 = vld.sshfl [vmem:[#allocation1 + $0x18] sm:$0xff pattern:$0x75316420]
  %v355 = vsel %vm152, %v345, -1e+30
  %v356 = vsel %vm153, %v346, -1e+30
  %v357 = vsel %vm152, %v349, -1e+30
  %v358 = vsel %vm153, %v350, -1e+30
  %363 = vrot.lane.b32.xlu0 %v355, 126
  %v364 = vpop.permute.xlu0 %363
  %365 = vrot.lane.b32.xlu0 %v356, 126
  %v366 = vpop.permute.xlu0 %365
  %367 = vrot.lane.b32.xlu0 %v357, 126
  %v368 = vpop.permute.xlu0 %367
  %369 = vrot.lane.b32.xlu0 %v358, 126
  %v370 = vpop.permute.xlu0 %369
  %vm371 = vcmask 1031168
  %v372 = vsel %vm371, %v364, %v366
  %v373 = vsel %vm371, %v368, %v370
  %v378 = vmax.f32 %v261, %v372
  %v379 = vmax.f32 %v262, %v366
  %v380 = vmax.f32 %v263, %v373
  %v381 = vmax.f32 %v264, %v370
  %382 = vrot.lane.b32.xlu0 %v340, 126
  %v383 = vpop.permute.xlu0 %382
  %384 = vrot.lane.b32.xlu0 %v341, 126
  %v385 = vpop.permute.xlu0 %384
  %v386 = vrot.slane %v383, 4
  %v387 = vrot.slane %v385, 4
  %v388 = vsel %vm371, %v383, %v386
  %v389 = vsel %vm371, %v385, %v387
  %v392 = vadd.f32 %v275, %v388
  %v393 = vadd.f32 %v276, %v389
  %394 = vst [vmem:[#allocation1] ss:$2 sm:$0xff] %v340
  %v395 = vld.sshfl [vmem:[#allocation1] sm:$0xff pattern:$0x75316420]
  %v396 = vld.sshfl [vmem:[#allocation1 + $0x8] sm:$0xff pattern:$0x75316420]
  %s397 = scalar_lea.vmem [#allocation1], 16
  %398 = vst [vmem:[%s397] ss:$2 sm:$0xff] %v341
  %v399 = vld.sshfl [vmem:[#allocation1 + $0x10] sm:$0xff pattern:$0x75316420]
  %v400 = vld.sshfl [vmem:[#allocation1 + $0x18] sm:$0xff pattern:$0x75316420]
  %v405 = vpack.c.bf16 %v396, %v395
  %v406 = vpack.c.bf16 %v400, %v399
  %409 = vrot.lane.b32.xlu0 %v405, 113
  %v410 = vpop.permute.xlu0 %409
  %411 = vrot.lane.b32.xlu0 %v406, 113
  %v412 = vpop.permute.xlu0 %411
  %v413 = vrot.slane %v410, 4
  %v414 = vrot.slane %v412, 4
  %vm415 = vcmask 924672
  %v416 = vsel %vm415, %v410, %v413
  %v417 = vsel %vm415, %v412, %v414
  %420 = vst.msk [vmem:[#allocation3 + $0x8] sm:$0x33] %vm205, %v416
  %421 = vst.msk [vmem:[#allocation3 + $0x30] sm:$0x33] %vm205, %v417
  %422 = vst [vmem:[#allocation1] ss:$2 sm:$0xff] %v340
  %v423 = vld.sshfl [vmem:[#allocation1] sm:$0xff pattern:$0x75316420]
  %v424 = vld.sshfl [vmem:[#allocation1 + $0x8] sm:$0xff pattern:$0x75316420]
  %s425 = scalar_lea.vmem [#allocation1], 16
  %426 = vst [vmem:[%s425] ss:$2 sm:$0xff] %v341
  %v427 = vld.sshfl [vmem:[#allocation1 + $0x10] sm:$0xff pattern:$0x75316420]
  %v428 = vld.sshfl [vmem:[#allocation1 + $0x18] sm:$0xff pattern:$0x75316420]
  %v433 = vpack.c.bf16 %v424, %v423
  %v434 = vpack.c.bf16 %v428, %v427
  %437 = vrot.lane.b32.xlu0 %v433, 124
  %v438 = vpop.permute.xlu0 %437
  %439 = vrot.lane.b32.xlu0 %v434, 124
  %v440 = vpop.permute.xlu0 %439
  %v441 = vrot.slane %v438, 4
  %v442 = vrot.slane %v440, 4
  %vm443 = vcmask 1014784
  %v444 = vsel %vm443, %v438, %v441
  %v445 = vsel %vm443, %v440, %v442
  %448 = vst.msk [vmem:[#allocation4 + $0x8] sm:$0x33] %vm205, %v444
  %449 = vst.msk [vmem:[#allocation4 + $0x30] sm:$0x33] %vm205, %v445
  %v450 = vld [vmem:[#allocation2] sm:$0xff]
  %v451 = vld [vmem:[#allocation2 + $0x8] sm:$0xff]
  %454 = vst [vmem:[#allocation1] ss:$2 sm:$0xff] %v450
  %v455 = vld.sshfl [vmem:[#allocation1] sm:$0xff pattern:$0x75316420]
  %v456 = vld.sshfl [vmem:[#allocation1 + $0x8] sm:$0xff pattern:$0x75316420]
  %s457 = scalar_lea.vmem [#allocation1], 16
  %458 = vst [vmem:[%s457] ss:$2 sm:$0xff] %v451
  %v459 = vld.sshfl [vmem:[#allocation1 + $0x10] sm:$0xff pattern:$0x75316420]
  %v460 = vld.sshfl [vmem:[#allocation1 + $0x18] sm:$0xff pattern:$0x75316420]
  %v465 = vsel %vm152, %v455, -1e+30
  %v466 = vsel %vm153, %v456, -1e+30
  %v467 = vsel %vm152, %v459, -1e+30
  %v468 = vsel %vm153, %v460, -1e+30
  %473 = vrot.lane.b32.xlu0 %v465, 116
  %v474 = vpop.permute.xlu0 %473
  %475 = vrot.lane.b32.xlu0 %v466, 116
  %v476 = vpop.permute.xlu0 %475
  %477 = vrot.lane.b32.xlu0 %v467, 116
  %v478 = vpop.permute.xlu0 %477
  %479 = vrot.lane.b32.xlu0 %v468, 116
  %v480 = vpop.permute.xlu0 %479
  %vm481 = vcmask 949248
  %v482 = vsel %vm481, %v474, %v476
  %v483 = vsel %vm481, %v478, %v480
  %v488 = vmax.f32 %v378, %v482
  %v489 = vmax.f32 %v379, %v476
  %v490 = vmax.f32 %v380, %v483
  %v491 = vmax.f32 %v381, %v480
  %492 = vrot.lane.b32.xlu0 %v450, 116
  %v493 = vpop.permute.xlu0 %492
  %494 = vrot.lane.b32.xlu0 %v451, 116
  %v495 = vpop.permute.xlu0 %494
  %v496 = vrot.slane %v493, 4
  %v497 = vrot.slane %v495, 4
  %v498 = vsel %vm481, %v493, %v496
  %v499 = vsel %vm481, %v495, %v497
  %v502 = vadd.f32 %v392, %v498
  %v503 = vadd.f32 %v393, %v499
  %504 = vst [vmem:[#allocation1] ss:$2 sm:$0xff] %v450
  %v505 = vld.sshfl [vmem:[#allocation1] sm:$0xff pattern:$0x75316420]
  %v506 = vld.sshfl [vmem:[#allocation1 + $0x8] sm:$0xff pattern:$0x75316420]
  %s507 = scalar_lea.vmem [#allocation1], 16
  %508 = vst [vmem:[%s507] ss:$2 sm:$0xff] %v451
  %v509 = vld.sshfl [vmem:[#allocation1 + $0x10] sm:$0xff pattern:$0x75316420]
  %v510 = vld.sshfl [vmem:[#allocation1 + $0x18] sm:$0xff pattern:$0x75316420]
  %v515 = vpack.c.bf16 %v506, %v505
  %v516 = vpack.c.bf16 %v510, %v509
  %v519 = vrot.slane %v515, 6
  %v520 = vrot.slane %v516, 6
  %521 = vrot.lane.b32.xlu0 %v519, 103
  %v522 = vpop.permute.xlu0 %521
  %523 = vrot.lane.b32.xlu0 %v520, 103
  %v524 = vpop.permute.xlu0 %523
  %v525 = vrot.slane %v522, 4
  %v526 = vrot.slane %v524, 4
  %vm527 = vcmask 842752
  %v528 = vsel %vm527, %v522, %v525
  %v529 = vsel %vm527, %v524, %v526
  %532 = vst.msk [vmem:[#allocation3 + $0x8] sm:$0xcc] %vm307, %v528
  %533 = vst.msk [vmem:[#allocation3 + $0x30] sm:$0xcc] %vm307, %v529
  %534 = vst [vmem:[#allocation1] ss:$2 sm:$0xff] %v450
  %v535 = vld.sshfl [vmem:[#allocation1] sm:$0xff pattern:$0x75316420]
  %v536 = vld.sshfl [vmem:[#allocation1 + $0x8] sm:$0xff pattern:$0x75316420]
  %s537 = scalar_lea.vmem [#allocation1], 16
  %538 = vst [vmem:[%s537] ss:$2 sm:$0xff] %v451
  %v539 = vld.sshfl [vmem:[#allocation1 + $0x10] sm:$0xff pattern:$0x75316420]
  %v540 = vld.sshfl [vmem:[#allocation1 + $0x18] sm:$0xff pattern:$0x75316420]
  %v545 = vpack.c.bf16 %v536, %v535
  %v546 = vpack.c.bf16 %v540, %v539
  %v549 = vrot.slane %v545, 6
  %v550 = vrot.slane %v546, 6
  %551 = vrot.lane.b32.xlu0 %v549, 104
  %v552 = vpop.permute.xlu0 %551
  %553 = vrot.lane.b32.xlu0 %v550, 104
  %v554 = vpop.permute.xlu0 %553
  %v555 = vrot.slane %v552, 4
  %v556 = vrot.slane %v554, 4
  %vm557 = vcmask 850944
  %v558 = vsel %vm557, %v552, %v555
  %v559 = vsel %vm557, %v554, %v556
  %562 = vst.msk [vmem:[#allocation4 + $0x8] sm:$0xcc] %vm307, %v558
  %563 = vst.msk [vmem:[#allocation4 + $0x30] sm:$0xcc] %vm307, %v559
  %564 = vst [vmem:[#allocation1] ss:$2 sm:$0xff] %v146
  %v565 = vld.sshfl [vmem:[#allocation1] sm:$0xff pattern:$0x75316420]
  %v566 = vld.sshfl [vmem:[#allocation1 + $0x8] sm:$0xff pattern:$0x75316420]
  %s567 = scalar_lea.vmem [#allocation1], 16
  %568 = vst [vmem:[%s567] ss:$2 sm:$0xff] %v147
  %v569 = vld.sshfl [vmem:[#allocation1 + $0x10] sm:$0xff pattern:$0x75316420]
  %v570 = vld.sshfl [vmem:[#allocation1 + $0x18] sm:$0xff pattern:$0x75316420]
  %v575 = vsel %vm152, %v565, -1e+30
  %v576 = vsel %vm153, %v566, -1e+30
  %v577 = vsel %vm152, %v569, -1e+30
  %v578 = vsel %vm153, %v570, -1e+30
  %583 = vrot.lane.b32.xlu0 %v575, 115
  %v584 = vpop.permute.xlu0 %583
  %585 = vrot.lane.b32.xlu0 %v576, 115
  %v586 = vpop.permute.xlu0 %585
  %587 = vrot.lane.b32.xlu0 %v577, 115
  %v588 = vpop.permute.xlu0 %587
  %589 = vrot.lane.b32.xlu0 %v578, 115
  %v590 = vpop.permute.xlu0 %589
  %vm591 = vcmask 941056
  %v592 = vsel %vm591, %v584, %v586
  %v593 = vsel %vm591, %v588, %v590
  %v598 = vmax.f32 %v488, %v592
  %v599 = vmax.f32 %v489, %v586
  %v600 = vmax.f32 %v490, %v593
  %v601 = vmax.f32 %v491, %v590
  %602 = vrot.lane.b32.xlu0 %v146, 115
  %v603 = vpop.permute.xlu0 %602
  %604 = vrot.lane.b32.xlu0 %v147, 115
  %v605 = vpop.permute.xlu0 %604
  %v606 = vrot.slane %v603, 4
  %v607 = vrot.slane %v605, 4
  %v608 = vsel %vm591, %v603, %v606
  %v609 = vsel %vm591, %v605, %v607
  %v612 = vadd.f32 %v502, %v608
  %v613 = vadd.f32 %v503, %v609
  %614 = vst [vmem:[#allocation1] ss:$2 sm:$0xff] %v146
  %v615 = vld.sshfl [vmem:[#allocation1] sm:$0xff pattern:$0x75316420]
  %v616 = vld.sshfl [vmem:[#allocation1 + $0x8] sm:$0xff pattern:$0x75316420]
  %s617 = scalar_lea.vmem [#allocation1], 16
  %618 = vst [vmem:[%s617] ss:$2 sm:$0xff] %v147
  %v619 = vld.sshfl [vmem:[#allocation1 + $0x10] sm:$0xff pattern:$0x75316420]
  %v620 = vld.sshfl [vmem:[#allocation1 + $0x18] sm:$0xff pattern:$0x75316420]
  %v625 = vpack.c.bf16 %v616, %v615
  %v626 = vpack.c.bf16 %v620, %v619
  %629 = vrot.lane.b32.xlu0 %v625, 102
  %v630 = vpop.permute.xlu0 %629
  %631 = vrot.lane.b32.xlu0 %v626, 102
  %v632 = vpop.permute.xlu0 %631
  %v633 = vrot.slane %v630, 4
  %v634 = vrot.slane %v632, 4
  %vm635 = vcmask 834560
  %v636 = vsel %vm635, %v630, %v633
  %v637 = vsel %vm635, %v632, %v634
  %640 = vst.msk [vmem:[#allocation3 + $0x10] sm:$0x33] %vm205, %v636
  %641 = vst.msk [vmem:[#allocation3 + $0x38] sm:$0x33] %vm205, %v637
  %642 = vst.msk [vmem:[#allocation4 + $0x10] sm:$0x33] %vm205, %v636
  %643 = vst.msk [vmem:[#allocation4 + $0x38] sm:$0x33] %vm205, %v637
  %v644 = vld [vmem:[#allocation2] sm:$0xff]
  %v645 = vld [vmem:[#allocation2 + $0x8] sm:$0xff]
  %648 = vst [vmem:[#allocation1] ss:$2 sm:$0xff] %v644
  %v649 = vld.sshfl [vmem:[#allocation1] sm:$0xff pattern:$0x75316420]
  %v650 = vld.sshfl [vmem:[#allocation1 + $0x8] sm:$0xff pattern:$0x75316420]
  %s651 = scalar_lea.vmem [#allocation1], 16
  %652 = vst [vmem:[%s651] ss:$2 sm:$0xff] %v645
  %v653 = vld.sshfl [vmem:[#allocation1 + $0x10] sm:$0xff pattern:$0x75316420]
  %v654 = vld.sshfl [vmem:[#allocation1 + $0x18] sm:$0xff pattern:$0x75316420]
  %v659 = vsel %vm152, %v649, -1e+30
  %v660 = vsel %vm153, %v650, -1e+30
  %v661 = vsel %vm152, %v653, -1e+30
  %v662 = vsel %vm153, %v654, -1e+30
  %667 = vrot.lane.b32.xlu0 %v659, 114
  %v668 = vpop.permute.xlu0 %667
  %669 = vrot.lane.b32.xlu0 %v660, 114
  %v670 = vpop.permute.xlu0 %669
  %671 = vrot.lane.b32.xlu0 %v661, 114
  %v672 = vpop.permute.xlu0 %671
  %673 = vrot.lane.b32.xlu0 %v662, 114
  %v674 = vpop.permute.xlu0 %673
  %vm675 = vcmask 932864
  %v676 = vsel %vm675, %v668, %v670
  %v677 = vsel %vm675, %v672, %v674
  %v682 = vmax.f32 %v598, %v676
  %v683 = vmax.f32 %v599, %v670
  %v684 = vmax.f32 %v600, %v677
  %v685 = vmax.f32 %v601, %v674
  %686 = vrot.lane.b32.xlu0 %v644, 114
  %v687 = vpop.permute.xlu0 %686
  %688 = vrot.lane.b32.xlu0 %v645, 114
  %v689 = vpop.permute.xlu0 %688
  %v690 = vrot.slane %v687, 4
  %v691 = vrot.slane %v689, 4
  %v692 = vsel %vm675, %v687, %v690
  %v693 = vsel %vm675, %v689, %v691
  %v696 = vadd.f32 %v612, %v692
  %v697 = vadd.f32 %v613, %v693
  %698 = vst [vmem:[#allocation1] ss:$2 sm:$0xff] %v644
  %v699 = vld.sshfl [vmem:[#allocation1] sm:$0xff pattern:$0x75316420]
  %v700 = vld.sshfl [vmem:[#allocation1 + $0x8] sm:$0xff pattern:$0x75316420]
  %s701 = scalar_lea.vmem [#allocation1], 16
  %702 = vst [vmem:[%s701] ss:$2 sm:$0xff] %v645
  %v703 = vld.sshfl [vmem:[#allocation1 + $0x10] sm:$0xff pattern:$0x75316420]
  %v704 = vld.sshfl [vmem:[#allocation1 + $0x18] sm:$0xff pattern:$0x75316420]
  %v709 = vpack.c.bf16 %v700, %v699
  %v710 = vpack.c.bf16 %v704, %v703
  %v713 = vrot.slane %v709, 6
  %v714 = vrot.slane %v710, 6
  %715 = vrot.lane.b32.xlu0 %v713, 101
  %v716 = vpop.permute.xlu0 %715
  %717 = vrot.lane.b32.xlu0 %v714, 101
  %v718 = vpop.permute.xlu0 %717
  %v719 = vrot.slane %v716, 4
  %v720 = vrot.slane %v718, 4
  %vm721 = vcmask 826368
  %v722 = vsel %vm721, %v716, %v719
  %v723 = vsel %vm721, %v718, %v720
  %726 = vst.msk [vmem:[#allocation3 + $0x10] sm:$0xcc] %vm307, %v722
  %727 = vst.msk [vmem:[#allocation3 + $0x38] sm:$0xcc] %vm307, %v723
  %728 = vst [vmem:[#allocation1] ss:$2 sm:$0xff] %v644
  %v729 = vld.sshfl [vmem:[#allocation1] sm:$0xff pattern:$0x75316420]
  %v730 = vld.sshfl [vmem:[#allocation1 + $0x8] sm:$0xff pattern:$0x75316420]
  %s731 = scalar_lea.vmem [#allocation1], 16
  %732 = vst [vmem:[%s731] ss:$2 sm:$0xff] %v645
  %v733 = vld.sshfl [vmem:[#allocation1 + $0x10] sm:$0xff pattern:$0x75316420]
  %v734 = vld.sshfl [vmem:[#allocation1 + $0x18] sm:$0xff pattern:$0x75316420]
  %v739 = vpack.c.bf16 %v730, %v729
  %v740 = vpack.c.bf16 %v734, %v733
  %v743 = vrot.slane %v739, 6
  %v744 = vrot.slane %v740, 6
  %745 = vrot.lane.b32.xlu0 %v743, 100
  %v746 = vpop.permute.xlu0 %745
  %747 = vrot.lane.b32.xlu0 %v744, 100
  %v748 = vpop.permute.xlu0 %747
  %v749 = vrot.slane %v746, 4
  %v750 = vrot.slane %v748, 4
  %vm751 = vcmask 818176
  %v752 = vsel %vm751, %v746, %v749
  %v753 = vsel %vm751, %v748, %v750
  %756 = vst.msk [vmem:[#allocation4 + $0x10] sm:$0xcc] %vm307, %v752
  %757 = vst.msk [vmem:[#allocation4 + $0x38] sm:$0xcc] %vm307, %v753
  %v758 = vld [vmem:[#allocation2] sm:$0xff]
  %v759 = vld [vmem:[#allocation2 + $0x8] sm:$0xff]
  %762 = vst [vmem:[#allocation1] ss:$2 sm:$0xff] %v758
  %v763 = vld.sshfl [vmem:[#allocation1] sm:$0xff pattern:$0x75316420]
  %v764 = vld.sshfl [vmem:[#allocation1 + $0x8] sm:$0xff pattern:$0x75316420]
  %s765 = scalar_lea.vmem [#allocation1], 16
  %766 = vst [vmem:[%s765] ss:$2 sm:$0xff] %v759
  %v767 = vld.sshfl [vmem:[#allocation1 + $0x10] sm:$0xff pattern:$0x75316420]
  %v768 = vld.sshfl [vmem:[#allocation1 + $0x18] sm:$0xff pattern:$0x75316420]
  %v773 = vsel %vm152, %v763, -1e+30
  %v774 = vsel %vm153, %v764, -1e+30
  %v775 = vsel %vm152, %v767, -1e+30
  %v776 = vsel %vm153, %v768, -1e+30
  %781 = vrot.lane.b32.xlu0 %v773, 104
  %v782 = vpop.permute.xlu0 %781
  %783 = vrot.lane.b32.xlu0 %v774, 104
  %v784 = vpop.permute.xlu0 %783
  %785 = vrot.lane.b32.xlu0 %v775, 104
  %v786 = vpop.permute.xlu0 %785
  %787 = vrot.lane.b32.xlu0 %v776, 104
  %v788 = vpop.permute.xlu0 %787
  %vm789 = vcmask 850944
  %v790 = vsel %vm789, %v782, %v784
  %v791 = vsel %vm789, %v786, %v788
  %v796 = vmax.f32 %v682, %v790
  %v797 = vmax.f32 %v683, %v784
  %v798 = vmax.f32 %v684, %v791
  %v799 = vmax.f32 %v685, %v788
  %800 = vrot.lane.b32.xlu0 %v758, 104
  %v801 = vpop.permute.xlu0 %800
  %802 = vrot.lane.b32.xlu0 %v759, 104
  %v803 = vpop.permute.xlu0 %802
  %v804 = vrot.slane %v801, 4
  %v805 = vrot.slane %v803, 4
  %v806 = vsel %vm789, %v801, %v804
  %v807 = vsel %vm789, %v803, %v805
  %v810 = vadd.f32 %v696, %v806
  %v811 = vadd.f32 %v697, %v807
  %812 = vst [vmem:[#allocation1] ss:$2 sm:$0xff] %v758
  %v813 = vld.sshfl [vmem:[#allocation1] sm:$0xff pattern:$0x75316420]
  %v814 = vld.sshfl [vmem:[#allocation1 + $0x8] sm:$0xff pattern:$0x75316420]
  %s815 = scalar_lea.vmem [#allocation1], 16
  %816 = vst [vmem:[%s815] ss:$2 sm:$0xff] %v759
  %v817 = vld.sshfl [vmem:[#allocation1 + $0x10] sm:$0xff pattern:$0x75316420]
  %v818 = vld.sshfl [vmem:[#allocation1 + $0x18] sm:$0xff pattern:$0x75316420]
  %v823 = vpack.c.bf16 %v814, %v813
  %v824 = vpack.c.bf16 %v818, %v817
  %827 = vrot.lane.b32.xlu0 %v823, 91
  %v828 = vpop.permute.xlu0 %827
  %829 = vrot.lane.b32.xlu0 %v824, 91
  %v830 = vpop.permute.xlu0 %829
  %v831 = vrot.slane %v828, 4
  %v832 = vrot.slane %v830, 4
  %vm833 = vcmask 744448
  %v834 = vsel %vm833, %v828, %v831
  %v835 = vsel %vm833, %v830, %v832
  %838 = vst.msk [vmem:[#allocation3 + $0x18] sm:$0x33] %vm205, %v834
  %839 = vst.msk [vmem:[#allocation3 + $0x40] sm:$0x33] %vm205, %v835
  %840 = vst [vmem:[#allocation1] ss:$2 sm:$0xff] %v758
  %v841 = vld.sshfl [vmem:[#allocation1] sm:$0xff pattern:$0x75316420]
  %v842 = vld.sshfl [vmem:[#allocation1 + $0x8] sm:$0xff pattern:$0x75316420]
  %s843 = scalar_lea.vmem [#allocation1], 16
  %844 = vst [vmem:[%s843] ss:$2 sm:$0xff] %v759
  %v845 = vld.sshfl [vmem:[#allocation1 + $0x10] sm:$0xff pattern:$0x75316420]
  %v846 = vld.sshfl [vmem:[#allocation1 + $0x18] sm:$0xff pattern:$0x75316420]
  %v851 = vpack.c.bf16 %v842, %v841
  %v852 = vpack.c.bf16 %v846, %v845
  %855 = vrot.lane.b32.xlu0 %v851, 80
  %v856 = vpop.permute.xlu0 %855
  %857 = vrot.lane.b32.xlu0 %v852, 80
  %v858 = vpop.permute.xlu0 %857
  %v859 = vrot.slane %v856, 4
  %v860 = vrot.slane %v858, 4
  %vm861 = vcmask 654336
  %v862 = vsel %vm861, %v856, %v859
  %v863 = vsel %vm861, %v858, %v860
  %866 = vst.msk [vmem:[#allocation4 + $0x18] sm:$0x33] %vm205, %v862
  %867 = vst.msk [vmem:[#allocation4 + $0x40] sm:$0x33] %vm205, %v863
  %v868 = vld [vmem:[#allocation2] sm:$0xff]
  %v869 = vld [vmem:[#allocation2 + $0x8] sm:$0xff]
  %872 = vst [vmem:[#allocation1] ss:$2 sm:$0xff] %v868
  %v873 = vld.sshfl [vmem:[#allocation1] sm:$0xff pattern:$0x75316420]
  %v874 = vld.sshfl [vmem:[#allocation1 + $0x8] sm:$0xff pattern:$0x75316420]
  %s875 = scalar_lea.vmem [#allocation1], 16
  %876 = vst [vmem:[%s875] ss:$2 sm:$0xff] %v869
  %v877 = vld.sshfl [vmem:[#allocation1 + $0x10] sm:$0xff pattern:$0x75316420]
  %v878 = vld.sshfl [vmem:[#allocation1 + $0x18] sm:$0xff pattern:$0x75316420]
  %v883 = vsel %vm152, %v873, -1e+30
  %v884 = vsel %vm153, %v874, -1e+30
  %v885 = vsel %vm152, %v877, -1e+30
  %v886 = vsel %vm153, %v878, -1e+30
  %891 = vrot.lane.b32.xlu0 %v883, 103
  %v892 = vpop.permute.xlu0 %891
  %893 = vrot.lane.b32.xlu0 %v884, 103
  %v894 = vpop.permute.xlu0 %893
  %895 = vrot.lane.b32.xlu0 %v885, 103
  %v896 = vpop.permute.xlu0 %895
  %897 = vrot.lane.b32.xlu0 %v886, 103
  %v898 = vpop.permute.xlu0 %897
  %vm899 = vcmask 842752
  %v900 = vsel %vm899, %v892, %v894
  %v901 = vsel %vm899, %v896, %v898
  %v906 = vmax.f32 %v796, %v900
  %v907 = vmax.f32 %v797, %v894
  %v908 = vmax.f32 %v798, %v901
  %v909 = vmax.f32 %v799, %v898
  %910 = vrot.lane.b32.xlu0 %v868, 103
  %v911 = vpop.permute.xlu0 %910
  %912 = vrot.lane.b32.xlu0 %v869, 103
  %v913 = vpop.permute.xlu0 %912
  %v914 = vrot.slane %v911, 4
  %v915 = vrot.slane %v913, 4
  %v916 = vsel %vm899, %v911, %v914
  %v917 = vsel %vm899, %v913, %v915
  %v920 = vadd.f32 %v810, %v916
  %v921 = vadd.f32 %v811, %v917
  %922 = vst [vmem:[#allocation1] ss:$2 sm:$0xff] %v868
  %v923 = vld.sshfl [vmem:[#allocation1] sm:$0xff pattern:$0x75316420]
  %v924 = vld.sshfl [vmem:[#allocation1 + $0x8] sm:$0xff pattern:$0x75316420]
  %s925 = scalar_lea.vmem [#allocation1], 16
  %926 = vst [vmem:[%s925] ss:$2 sm:$0xff] %v869
  %v927 = vld.sshfl [vmem:[#allocation1 + $0x10] sm:$0xff pattern:$0x75316420]
  %v928 = vld.sshfl [vmem:[#allocation1 + $0x18] sm:$0xff pattern:$0x75316420]
  %v933 = vpack.c.bf16 %v924, %v923
  %v934 = vpack.c.bf16 %v928, %v927
  %v937 = vrot.slane %v933, 6
  %v938 = vrot.slane %v934, 6
  %939 = vrot.lane.b32.xlu0 %v937, 90
  %v940 = vpop.permute.xlu0 %939
  %941 = vrot.lane.b32.xlu0 %v938, 90
  %v942 = vpop.permute.xlu0 %941
  %v943 = vrot.slane %v940, 4
  %v944 = vrot.slane %v942, 4
  %vm945 = vcmask 736256
  %v946 = vsel %vm945, %v940, %v943
  %v947 = vsel %vm945, %v942, %v944
  %950 = vst.msk [vmem:[#allocation3 + $0x18] sm:$0xcc] %vm307, %v946
  %951 = vst.msk [vmem:[#allocation3 + $0x40] sm:$0xcc] %vm307, %v947
  %952 = vst [vmem:[#allocation1] ss:$2 sm:$0xff] %v868
  %v953 = vld.sshfl [vmem:[#allocation1] sm:$0xff pattern:$0x75316420]
  %v954 = vld.sshfl [vmem:[#allocation1 + $0x8] sm:$0xff pattern:$0x75316420]
  %s955 = scalar_lea.vmem [#allocation1], 16
  %956 = vst [vmem:[%s955] ss:$2 sm:$0xff] %v869
  %v957 = vld.sshfl [vmem:[#allocation1 + $0x10] sm:$0xff pattern:$0x75316420]
  %v958 = vld.sshfl [vmem:[#allocation1 + $0x18] sm:$0xff pattern:$0x75316420]
  %v963 = vpack.c.bf16 %v954, %v953
  %v964 = vpack.c.bf16 %v958, %v957
  %v967 = vrot.slane %v963, 6
  %v968 = vrot.slane %v964, 6
  %969 = vrot.lane.b32.xlu0 %v967, 78
  %v970 = vpop.permute.xlu0 %969
  %971 = vrot.lane.b32.xlu0 %v968, 78
  %v972 = vpop.permute.xlu0 %971
  %v973 = vrot.slane %v970, 4
  %v974 = vrot.slane %v972, 4
  %vm975 = vcmask 637952
  %v976 = vsel %vm975, %v970, %v973
  %v977 = vsel %vm975, %v972, %v974
  %980 = vst.msk [vmem:[#allocation4 + $0x18] sm:$0xcc] %vm307, %v976
  %981 = vst.msk [vmem:[#allocation4 + $0x40] sm:$0xcc] %vm307, %v977
  %v982 = vld [vmem:[#allocation2] sm:$0xff]
  %v983 = vld [vmem:[#allocation2 + $0x8] sm:$0xff]
  %986 = vst [vmem:[#allocation1] ss:$2 sm:$0xff] %v982
  %v987 = vld.sshfl [vmem:[#allocation1] sm:$0xff pattern:$0x75316420]
  %v988 = vld.sshfl [vmem:[#allocation1 + $0x8] sm:$0xff pattern:$0x75316420]
  %s989 = scalar_lea.vmem [#allocation1], 16
  %990 = vst [vmem:[%s989] ss:$2 sm:$0xff] %v983
  %v991 = vld.sshfl [vmem:[#allocation1 + $0x10] sm:$0xff pattern:$0x75316420]
  %v992 = vld.sshfl [vmem:[#allocation1 + $0x18] sm:$0xff pattern:$0x75316420]
  %v997 = vsel %vm152, %v987, -1e+30
  %v998 = vsel %vm153, %v988, -1e+30
  %v999 = vsel %vm152, %v991, -1e+30
  %v1000 = vsel %vm153, %v992, -1e+30
  %1005 = vrot.lane.b32.xlu0 %v997, 102
  %v1006 = vpop.permute.xlu0 %1005
  %1007 = vrot.lane.b32.xlu0 %v998, 102
  %v1008 = vpop.permute.xlu0 %1007
  %1009 = vrot.lane.b32.xlu0 %v999, 102
  %v1010 = vpop.permute.xlu0 %1009
  %1011 = vrot.lane.b32.xlu0 %v1000, 102
  %v1012 = vpop.permute.xlu0 %1011
  %vm1013 = vcmask 834560
  %v1014 = vsel %vm1013, %v1006, %v1008
  %v1015 = vsel %vm1013, %v1010, %v1012
  %v1020 = vmax.f32 %v906, %v1014
  %v1021 = vmax.f32 %v907, %v1008
  %v1022 = vmax.f32 %v908, %v1015
  %v1023 = vmax.f32 %v909, %v1012
  %1024 = vrot.lane.b32.xlu0 %v982, 102
  %v1025 = vpop.permute.xlu0 %1024
  %1026 = vrot.lane.b32.xlu0 %v983, 102
  %v1027 = vpop.permute.xlu0 %1026
  %v1028 = vrot.slane %v1025, 4
  %v1029 = vrot.slane %v1027, 4
  %v1030 = vsel %vm1013, %v1025, %v1028
  %v1031 = vsel %vm1013, %v1027, %v1029
  %v1034 = vadd.f32 %v920, %v1030
  %v1035 = vadd.f32 %v921, %v1031
  %1036 = vst [vmem:[#allocation1] ss:$2 sm:$0xff] %v982
  %v1037 = vld.sshfl [vmem:[#allocation1] sm:$0xff pattern:$0x75316420]
  %v1038 = vld.sshfl [vmem:[#allocation1 + $0x8] sm:$0xff pattern:$0x75316420]
  %s1039 = scalar_lea.vmem [#allocation1], 16
  %1040 = vst [vmem:[%s1039] ss:$2 sm:$0xff] %v983
  %v1041 = vld.sshfl [vmem:[#allocation1 + $0x10] sm:$0xff pattern:$0x75316420]
  %v1042 = vld.sshfl [vmem:[#allocation1 + $0x18] sm:$0xff pattern:$0x75316420]
  %v1047 = vpack.c.bf16 %v1038, %v1037
  %v1048 = vpack.c.bf16 %v1042, %v1041
  %1051 = vrot.lane.b32.xlu0 %v1047, 89
  %v1052 = vpop.permute.xlu0 %1051
  %1053 = vrot.lane.b32.xlu0 %v1048, 89
  %v1054 = vpop.permute.xlu0 %1053
  %v1055 = vrot.slane %v1052, 4
  %v1056 = vrot.slane %v1054, 4
  %vm1057 = vcmask 728064
  %v1058 = vsel %vm1057, %v1052, %v1055
  %v1059 = vsel %vm1057, %v1054, %v1056
  %1062 = vst.msk [vmem:[#allocation3 + $0x20] sm:$0x33] %vm205, %v1058
  %1063 = vst.msk [vmem:[#allocation3 + $0x48] sm:$0x33] %vm205, %v1059
  %1064 = vst [vmem:[#allocation1] ss:$2 sm:$0xff] %v982
  %v1065 = vld.sshfl [vmem:[#allocation1] sm:$0xff pattern:$0x75316420]
  %v1066 = vld.sshfl [vmem:[#allocation1 + $0x8] sm:$0xff pattern:$0x75316420]
  %s1067 = scalar_lea.vmem [#allocation1], 16
  %1068 = vst [vmem:[%s1067] ss:$2 sm:$0xff] %v983
  %v1069 = vld.sshfl [vmem:[#allocation1 + $0x10] sm:$0xff pattern:$0x75316420]
  %v1070 = vld.sshfl [vmem:[#allocation1 + $0x18] sm:$0xff pattern:$0x75316420]
  %v1075 = vpack.c.bf16 %v1066, %v1065
  %v1076 = vpack.c.bf16 %v1070, %v1069
  %1079 = vrot.lane.b32.xlu0 %v1075, 76
  %v1080 = vpop.permute.xlu0 %1079
  %1081 = vrot.lane.b32.xlu0 %v1076, 76
  %v1082 = vpop.permute.xlu0 %1081
  %v1083 = vrot.slane %v1080, 4
  %v1084 = vrot.slane %v1082, 4
  %vm1085 = vcmask 621568
  %v1086 = vsel %vm1085, %v1080, %v1083
  %v1087 = vsel %vm1085, %v1082, %v1084
  %1090 = vst.msk [vmem:[#allocation4 + $0x20] sm:$0x33] %vm205, %v1086
  %1091 = vst.msk [vmem:[#allocation4 + $0x48] sm:$0x33] %vm205, %v1087
  %v1092 = vmul.f32 %v1034, 0.11111111
  %v1093 = vmul.f32 %v1035, 0.11111111
  %v1094 = vld [vmem:[%s2] sm:$0x3]
  %v1095 = vld [vmem:[%s3] sm:$0x3]
  %v1096 = vld [vmem:[%s4] sm:$0x3]
  %v1097 = vld [vmem:[#allocation3] sm:$0xff]
  %v1098 = vld [vmem:[#allocation3 + $0x8] sm:$0xff]
  %v1099 = vld [vmem:[#allocation3 + $0x10] sm:$0xff]
  %v1100 = vld [vmem:[#allocation3 + $0x18] sm:$0xff]
  %v1101 = vld [vmem:[#allocation3 + $0x20] sm:$0x33]
  %v1102 = vld [vmem:[#allocation4] sm:$0xff]
  %v1103 = vld [vmem:[#allocation4 + $0x8] sm:$0xff]
  %v1104 = vld [vmem:[#allocation4 + $0x10] sm:$0xff]
  %v1105 = vld [vmem:[#allocation4 + $0x18] sm:$0xff]
  %v1106 = vld [vmem:[#allocation4 + $0x20] sm:$0x33]
  %v1112 = vunpack.c.l.b16 %v1097
  %v1113 = vunpack.c.h.b16 %v1097
  %v1114 = vunpack.c.l.b16 %v1098
  %v1115 = vunpack.c.h.b16 %v1098
  %v1116 = vunpack.c.l.b16 %v1099
  %v1117 = vunpack.c.h.b16 %v1099
  %v1118 = vunpack.c.l.b16 %v1100
  %v1119 = vunpack.c.h.b16 %v1100
  %v1120 = vunpack.c.l.b16 %v1101
  %v1121 = vunpack.c.h.b16 %v1101
  %v1122 = vpack.c.b16 %v1114, %v1112
  %v1123 = vpack.c.b16 %v1115, %v1113
  %v1124 = vpack.c.b16 %v1118, %v1116
  %v1125 = vpack.c.b16 %v1119, %v1117
  %v1126 = vpack.c.b16 %v1120, %v1120
  %v1127 = vpack.c.b16 %v1121, %v1121
  %vm1132 = vcmask 293888
  %v1134 = vsel %vm1132, %v1095, 0
  %v1137 = vsel %vm203, %v1126, 0
  %v1140 = vsel %vm203, %v1127, 0
  %1142 = vmatpush.bf16.msra.mxu0 0
  %1143 = vmatpush.bf16.msra.mxu0 0
  %1144 = vmatpush.bf16.msra.mxu0 0
  %1145 = vmatpush.bf16.msra.mxu0 0
  %1146 = vmatpush.bf16.msra.mxu0 0
  %1147 = vmatpush.bf16.msra.mxu0 %v1137
  %1148 = vmatpush.bf16.msra.mxu0 %v1124
  %1149 = vmatpush.bf16.msra.mxu0 %v1122
  %1150 = vmatmul.bf16.gmra.mxu0 %v1134
  %v1151 = vpop.f32.mrf.mxu0
  %v1152 = vadd.f32 0.0, %v1151
  %v1153 = vpop.f32.mrf.mxu0
  %1154 = vdwg.mxu0
  %1155 = vmatpush.bf16.msra.mxu0 0
  %1156 = vmatpush.bf16.msra.mxu0 0
  %1157 = vmatpush.bf16.msra.mxu0 0
  %1158 = vmatpush.bf16.msra.mxu0 0
  %1159 = vmatpush.bf16.msra.mxu0 0
  %1160 = vmatpush.bf16.msra.mxu0 %v1140
  %1161 = vmatpush.bf16.msra.mxu0 %v1125
  %1162 = vmatpush.bf16.msra.mxu0 %v1123
  %1163 = vmatmul.bf16.gmra.mxu0 %v1134
  %v1164 = vpop.f32.mrf.mxu0
  %v1165 = vadd.f32 0.0, %v1164
  %v1166 = vpop.f32.mrf.mxu0
  %1167 = vdwg.mxu0
  %v1173 = vunpack.c.l.b16 %v1102
  %v1174 = vunpack.c.h.b16 %v1102
  %v1175 = vunpack.c.l.b16 %v1103
  %v1176 = vunpack.c.h.b16 %v1103
  %v1177 = vunpack.c.l.b16 %v1104
  %v1178 = vunpack.c.h.b16 %v1104
  %v1179 = vunpack.c.l.b16 %v1105
  %v1180 = vunpack.c.h.b16 %v1105
  %v1181 = vunpack.c.l.b16 %v1106
  %v1182 = vunpack.c.h.b16 %v1106
  %v1183 = vpack.c.b16 %v1175, %v1173
  %v1184 = vpack.c.b16 %v1176, %v1174
  %v1185 = vpack.c.b16 %v1179, %v1177
  %v1186 = vpack.c.b16 %v1180, %v1178
  %v1187 = vpack.c.b16 %v1181, %v1181
  %v1188 = vpack.c.b16 %v1182, %v1182
  %v1194 = vsel %vm1132, %v1096, 0
  %v1197 = vsel %vm203, %v1187, 0
  %v1200 = vsel %vm203, %v1188, 0
  %1202 = vmatpush.bf16.msra.mxu0 0
  %1203 = vmatpush.bf16.msra.mxu0 0
  %1204 = vmatpush.bf16.msra.mxu0 0
  %1205 = vmatpush.bf16.msra.mxu0 0
  %1206 = vmatpush.bf16.msra.mxu0 0
  %1207 = vmatpush.bf16.msra.mxu0 %v1197
  %1208 = vmatpush.bf16.msra.mxu0 %v1185
  %1209 = vmatpush.bf16.msra.mxu0 %v1183
  %1210 = vmatmul.bf16.gmra.mxu0 %v1194
  %v1211 = vpop.f32.mrf.mxu0
  %v1212 = vadd.f32 0.0, %v1211
  %v1213 = vpop.f32.mrf.mxu0
  %1214 = vdwg.mxu0
  %1215 = vmatpush.bf16.msra.mxu0 0
  %1216 = vmatpush.bf16.msra.mxu0 0
  %1217 = vmatpush.bf16.msra.mxu0 0
  %1218 = vmatpush.bf16.msra.mxu0 0
  %1219 = vmatpush.bf16.msra.mxu0 0
  %1220 = vmatpush.bf16.msra.mxu0 %v1200
  %1221 = vmatpush.bf16.msra.mxu0 %v1186
  %1222 = vmatpush.bf16.msra.mxu0 %v1184
  %1223 = vmatmul.bf16.gmra.mxu0 %v1194
  %v1224 = vpop.f32.mrf.mxu0
  %v1225 = vadd.f32 0.0, %v1224
  %v1226 = vpop.f32.mrf.mxu0
  %1227 = vdwg.mxu0
  %v1228 = vpack.c.b16 %v1116, %v1116
  %v1229 = vpack.c.b16 %v1117, %v1117
  %vm1230 = vcmask 31744
  %v1232 = vsel %vm1230, %v1094, 0
  %v1235 = vsel %vm203, %v1228, 0
  %v1238 = vsel %vm203, %v1229, 0
  %1240 = vmatpush.bf16.msra.mxu0 0
  %1241 = vmatpush.bf16.msra.mxu0 0
  %1242 = vmatpush.bf16.msra.mxu0 0
  %1243 = vmatpush.bf16.msra.mxu0 0
  %1244 = vmatpush.bf16.msra.mxu0 0
  %1245 = vmatpush.bf16.msra.mxu0 0
  %1246 = vmatpush.bf16.msra.mxu0 0
  %1247 = vmatpush.bf16.msra.mxu0 %v1235
  %1248 = vmatmul.bf16.gmra.mxu0 %v1232
  %v1249 = vpop.f32.mrf.mxu0
  %v1250 = vadd.f32 0.0, %v1249
  %v1251 = vpop.f32.mrf.mxu0
  %1252 = vdwg.mxu0
  %1253 = vmatpush.bf16.msra.mxu0 0
  %1254 = vmatpush.bf16.msra.mxu0 0
  %1255 = vmatpush.bf16.msra.mxu0 0
  %1256 = vmatpush.bf16.msra.mxu0 0
  %1257 = vmatpush.bf16.msra.mxu0 0
  %1258 = vmatpush.bf16.msra.mxu0 0
  %1259 = vmatpush.bf16.msra.mxu0 0
  %1260 = vmatpush.bf16.msra.mxu0 %v1238
  %1261 = vmatmul.bf16.gmra.mxu0 %v1232
  %v1262 = vpop.f32.mrf.mxu0
  %v1263 = vadd.f32 0.0, %v1262
  %v1264 = vpop.f32.mrf.mxu0
  %1265 = vdwg.mxu0
  %s1266 = scalar_lea.vmem [#allocation3], 40
  %v1267 = vld [vmem:[%s1266] sm:$0xff]
  %v1268 = vld [vmem:[%s1266 + $0x8] sm:$0xff]
  %v1269 = vld [vmem:[%s1266 + $0x10] sm:$0xff]
  %v1270 = vld [vmem:[%s1266 + $0x18] sm:$0xff]
  %v1271 = vld [vmem:[%s1266 + $0x20] sm:$0x33]
  %s1272 = scalar_lea.vmem [#allocation4], 40
  %v1273 = vld [vmem:[%s1272] sm:$0xff]
  %v1274 = vld [vmem:[%s1272 + $0x8] sm:$0xff]
  %v1275 = vld [vmem:[%s1272 + $0x10] sm:$0xff]
  %v1276 = vld [vmem:[%s1272 + $0x18] sm:$0xff]
  %v1277 = vld [vmem:[%s1272 + $0x20] sm:$0x33]
  %v1283 = vunpack.c.l.b16 %v1267
  %v1284 = vunpack.c.h.b16 %v1267
  %v1285 = vunpack.c.l.b16 %v1268
  %v1286 = vunpack.c.h.b16 %v1268
  %v1287 = vunpack.c.l.b16 %v1269
  %v1288 = vunpack.c.h.b16 %v1269
  %v1289 = vunpack.c.l.b16 %v1270
  %v1290 = vunpack.c.h.b16 %v1270
  %v1291 = vunpack.c.l.b16 %v1271
  %v1292 = vunpack.c.h.b16 %v1271
  %v1293 = vpack.c.b16 %v1285, %v1283
  %v1294 = vpack.c.b16 %v1286, %v1284
  %v1295 = vpack.c.b16 %v1289, %v1287
  %v1296 = vpack.c.b16 %v1290, %v1288
  %v1297 = vpack.c.b16 %v1291, %v1291
  %v1298 = vpack.c.b16 %v1292, %v1292
  %v1304 = vsel %vm203, %v1297, 0
  %v1307 = vsel %vm203, %v1298, 0
  %1309 = vmatpush.bf16.msra.mxu0 0
  %1310 = vmatpush.bf16.msra.mxu0 0
  %1311 = vmatpush.bf16.msra.mxu0 0
  %1312 = vmatpush.bf16.msra.mxu0 0
  %1313 = vmatpush.bf16.msra.mxu0 0
  %1314 = vmatpush.bf16.msra.mxu0 %v1304
  %1315 = vmatpush.bf16.msra.mxu0 %v1295
  %1316 = vmatpush.bf16.msra.mxu0 %v1293
  %1317 = vmatmul.bf16.gmra.mxu0 %v1134
  %v1318 = vpop.f32.mrf.mxu0
  %v1319 = vadd.f32 0.0, %v1318
  %v1320 = vpop.f32.mrf.mxu0
  %1321 = vdwg.mxu0
  %1322 = vmatpush.bf16.msra.mxu0 0
  %1323 = vmatpush.bf16.msra.mxu0 0
  %1324 = vmatpush.bf16.msra.mxu0 0
  %1325 = vmatpush.bf16.msra.mxu0 0
  %1326 = vmatpush.bf16.msra.mxu0 0
  %1327 = vmatpush.bf16.msra.mxu0 %v1307
  %1328 = vmatpush.bf16.msra.mxu0 %v1296
  %1329 = vmatpush.bf16.msra.mxu0 %v1294
  %1330 = vmatmul.bf16.gmra.mxu0 %v1134
  %v1331 = vpop.f32.mrf.mxu0
  %v1332 = vadd.f32 0.0, %v1331
  %v1333 = vpop.f32.mrf.mxu0
  %1334 = vdwg.mxu0
  %v1340 = vunpack.c.l.b16 %v1273
  %v1341 = vunpack.c.h.b16 %v1273
  %v1342 = vunpack.c.l.b16 %v1274
  %v1343 = vunpack.c.h.b16 %v1274
  %v1344 = vunpack.c.l.b16 %v1275
  %v1345 = vunpack.c.h.b16 %v1275
  %v1346 = vunpack.c.l.b16 %v1276
  %v1347 = vunpack.c.h.b16 %v1276
  %v1348 = vunpack.c.l.b16 %v1277
  %v1349 = vunpack.c.h.b16 %v1277
  %v1350 = vpack.c.b16 %v1342, %v1340
  %v1351 = vpack.c.b16 %v1343, %v1341
  %v1352 = vpack.c.b16 %v1346, %v1344
  %v1353 = vpack.c.b16 %v1347, %v1345
  %v1354 = vpack.c.b16 %v1348, %v1348
  %v1355 = vpack.c.b16 %v1349, %v1349
  %v1361 = vsel %vm203, %v1354, 0
  %v1364 = vsel %vm203, %v1355, 0
  %1366 = vmatpush.bf16.msra.mxu0 0
  %1367 = vmatpush.bf16.msra.mxu0 0
  %1368 = vmatpush.bf16.msra.mxu0 0
  %1369 = vmatpush.bf16.msra.mxu0 0
  %1370 = vmatpush.bf16.msra.mxu0 0
  %1371 = vmatpush.bf16.msra.mxu0 %v1361
  %1372 = vmatpush.bf16.msra.mxu0 %v1352
  %1373 = vmatpush.bf16.msra.mxu0 %v1350
  %1374 = vmatmul.bf16.gmra.mxu0 %v1194
  %v1375 = vpop.f32.mrf.mxu0
  %v1376 = vadd.f32 0.0, %v1375
  %v1377 = vpop.f32.mrf.mxu0
  %1378 = vdwg.mxu0
  %1379 = vmatpush.bf16.msra.mxu0 0
  %1380 = vmatpush.bf16.msra.mxu0 0
  %1381 = vmatpush.bf16.msra.mxu0 0
  %1382 = vmatpush.bf16.msra.mxu0 0
  %1383 = vmatpush.bf16.msra.mxu0 0
  %1384 = vmatpush.bf16.msra.mxu0 %v1364
  %1385 = vmatpush.bf16.msra.mxu0 %v1353
  %1386 = vmatpush.bf16.msra.mxu0 %v1351
  %1387 = vmatmul.bf16.gmra.mxu0 %v1194
  %v1388 = vpop.f32.mrf.mxu0
  %v1389 = vadd.f32 0.0, %v1388
  %v1390 = vpop.f32.mrf.mxu0
  %1391 = vdwg.mxu0
  %v1392 = vpack.c.b16 %v1287, %v1287
  %v1393 = vpack.c.b16 %v1288, %v1288
  %v1395 = vsel %vm203, %v1392, 0
  %v1398 = vsel %vm203, %v1393, 0
  %1400 = vmatpush.bf16.msra.mxu0 0
  %1401 = vmatpush.bf16.msra.mxu0 0
  %1402 = vmatpush.bf16.msra.mxu0 0
  %1403 = vmatpush.bf16.msra.mxu0 0
  %1404 = vmatpush.bf16.msra.mxu0 0
  %1405 = vmatpush.bf16.msra.mxu0 0
  %1406 = vmatpush.bf16.msra.mxu0 0
  %1407 = vmatpush.bf16.msra.mxu0 %v1395
  %1408 = vmatmul.bf16.gmra.mxu0 %v1232
  %v1409 = vpop.f32.mrf.mxu0
  %v1410 = vadd.f32 0.0, %v1409
  %v1411 = vpop.f32.mrf.mxu0
  %1412 = vdwg.mxu0
  %1413 = vmatpush.bf16.msra.mxu0 0
  %1414 = vmatpush.bf16.msra.mxu0 0
  %1415 = vmatpush.bf16.msra.mxu0 0
  %1416 = vmatpush.bf16.msra.mxu0 0
  %1417 = vmatpush.bf16.msra.mxu0 0
  %1418 = vmatpush.bf16.msra.mxu0 0
  %1419 = vmatpush.bf16.msra.mxu0 0
  %1420 = vmatpush.bf16.msra.mxu0 %v1398
  %1421 = vmatmul.bf16.gmra.mxu0 %v1232
  %v1422 = vpop.f32.mrf.mxu0
  %v1423 = vadd.f32 0.0, %v1422
  %v1424 = vpop.f32.mrf.mxu0
  %1425 = vdwg.mxu0
  %v1427 = vperm.slane %v145, 0
  %v1428 = vperm.slane %v145, 1
  %1429 = vrot.lane.b32.xlu0 %v1427, 102
  %v1430 = vpop.permute.xlu0 %1429
  %1431 = vrot.lane.b32.xlu0 %v1428, 102
  %v1432 = vpop.permute.xlu0 %1431
  %v1433 = vsel %vm1013, %v1430, %v1432
  %v1436 = vmul.f32 %v1250, %v1433
  %v1437 = vmul.f32 %v1263, %v1432
  %v1438 = vmul.f32 %v1410, %v1433
  %v1439 = vmul.f32 %v1423, %v1432
  %v1440 = vmul.f32 %v1152, %v1433
  %v1441 = vmul.f32 %v1165, %v1432
  %v1442 = vmul.f32 %v1319, %v1433
  %v1443 = vmul.f32 %v1332, %v1432
  %v1444 = vmul.f32 %v1212, %v1433
  %v1445 = vmul.f32 %v1225, %v1432
  %v1446 = vmul.f32 %v1376, %v1433
  %v1447 = vmul.f32 %v1389, %v1432
  %1448 = vrot.lane.b32.xlu0 %v1427, 115
  %v1449 = vpop.permute.xlu0 %1448
  %1450 = vrot.lane.b32.xlu0 %v1428, 115
  %v1451 = vpop.permute.xlu0 %1450
  %v1452 = vsel %vm591, %v1449, %v1451
  %v1455 = vmul.f32 %v1020, %v1452
  %v1456 = vmul.f32 %v1021, %v1451
  %v1457 = vmul.f32 %v1022, %v1452
  %v1458 = vmul.f32 %v1023, %v1451
  %1463 = vrot.lane.b32.xlu0 %v1455, 115
  %v1464 = vpop.permute.xlu0 %1463
  %1465 = vrot.lane.b32.xlu0 %v1456, 115
  %v1466 = vpop.permute.xlu0 %1465
  %1467 = vrot.lane.b32.xlu0 %v1457, 115
  %v1468 = vpop.permute.xlu0 %1467
  %1469 = vrot.lane.b32.xlu0 %v1458, 115
  %v1470 = vpop.permute.xlu0 %1469
  %v1471 = vsel %vm591, %v1464, %v1466
  %v1472 = vsel %vm591, %v1468, %v1470
  %v1477 = vsel %vm29, %v1471, 0.0
  %vm1478 = vcmask 125952
  %v1479 = vsel %vm1478, %v1466, 0.0
  %v1480 = vadd.f32 %v1477, %v1479
  %v1481 = vsel %vm29, %v1472, 0.0
  %v1482 = vadd.f32 %v1480, %v1481
  %v1483 = vsel %vm1478, %v1470, 0.0
  %v1484 = vadd.f32 %v1482, %v1483
  %1485 = vadd.xlane.f32.xlu0 %v1484
  %v1486 = vpop.xlane.xlu0 %1485
  %v1487 = vmul.f32 %v1455, %v1455
  %v1488 = vmul.f32 %v1456, %v1456
  %v1489 = vmul.f32 %v1457, %v1457
  %v1490 = vmul.f32 %v1458, %v1458
  %1495 = vrot.lane.b32.xlu0 %v1487, 115
  %v1496 = vpop.permute.xlu0 %1495
  %1497 = vrot.lane.b32.xlu0 %v1488, 115
  %v1498 = vpop.permute.xlu0 %1497
  %1499 = vrot.lane.b32.xlu0 %v1489, 115
  %v1500 = vpop.permute.xlu0 %1499
  %1501 = vrot.lane.b32.xlu0 %v1490, 115
  %v1502 = vpop.permute.xlu0 %1501
  %v1503 = vsel %vm591, %v1496, %v1498
  %v1504 = vsel %vm591, %v1500, %v1502
  %v1509 = vsel %vm29, %v1503, 0.0
  %v1510 = vsel %vm1478, %v1498, 0.0
  %v1511 = vadd.f32 %v1509, %v1510
  %v1512 = vsel %vm29, %v1504, 0.0
  %v1513 = vadd.f32 %v1511, %v1512
  %v1514 = vsel %vm1478, %v1502, 0.0
  %v1515 = vadd.f32 %v1513, %v1514
  %1516 = vadd.xlane.f32.xlu0 %v1515
  %v1517 = vpop.xlane.xlu0 %1516
  %v1518 = vmul.f32 %v1486, 0.0078125
  %v1519 = vmul.f32 %v1517, 0.0078125
  %v1520 = vmul.f32 %v1518, %v1518
  %v1521 = vsub.f32 %v1519, %v1520
  %v1522 = vsub.f32 %v1455, %v1518
  %v1523 = vsub.f32 %v1456, %v1518
  %v1524 = vsub.f32 %v1457, %v1518
  %v1525 = vsub.f32 %v1458, %v1518
  %v1526 = vadd.f32 %v1521, 1e-05
  %v1527 = vrsqrt.pop %v1526
  %v1528 = vmul.f32 %v1527, %v1526
  %v1529 = vmul.f32 %v1528, %v1527
  %v1530 = vmul.f32 0.5, %v1529
  %v1531 = vsub.f32 1.5, %v1530
  %v1532 = vmul.f32 %v1527, %v1531
  %vm1533 = vweird.f32 %v1526
  %vm1534 = vweird.f32 %v1527
  %vm1535 = vmor %vm1533, %vm1534
  %v1536 = vsel %vm1535, %v1527, %v1532
  %v1537 = vmul.f32 %v1522, %v1536
  %v1538 = vmul.f32 %v1523, %v1536
  %v1539 = vmul.f32 %v1524, %v1536
  %v1540 = vmul.f32 %v1525, %v1536
  %v1541 = vmul.f32 %v1537, %v1452
  %v1542 = vmul.f32 %v1538, %v1451
  %v1543 = vmul.f32 %v1539, %v1452
  %v1544 = vmul.f32 %v1540, %v1451
  %v1545 = vrot.slane %v1428, 4
  %v1546 = vsel %vm29, %v1427, %v1545
  %1547 = vrot.lane.b32.xlu0 %v1546, 115
  %v1548 = vpop.permute.xlu0 %1547
  %v1549 = vrot.slane %v1548, 4
  %v1550 = vsel %vm591, %v1548, %v1549
  %v1552 = vmul.f32 %v1092, %v1550
  %v1553 = vmul.f32 %v1093, %v1550
  %1556 = vst [vmem:[#allocation1] ss:$2 sm:$0xff] %v1552
  %v1557 = vld.sshfl [vmem:[#allocation1] sm:$0xff pattern:$0x75316420]
  %v1558 = vld.sshfl [vmem:[#allocation1 + $0x8] sm:$0xff pattern:$0x75316420]
  %s1559 = scalar_lea.vmem [#allocation1], 16
  %1560 = vst [vmem:[%s1559] ss:$2 sm:$0xff] %v1553
  %v1561 = vld.sshfl [vmem:[#allocation1 + $0x10] sm:$0xff pattern:$0x75316420]
  %v1562 = vld.sshfl [vmem:[#allocation1 + $0x18] sm:$0xff pattern:$0x75316420]
  %1563 = vrot.lane.b32.xlu0 %v1557, 115
  %v1564 = vpop.permute.xlu0 %1563
  %1565 = vrot.lane.b32.xlu0 %v1558, 115
  %v1566 = vpop.permute.xlu0 %1565
  %1567 = vrot.lane.b32.xlu0 %v1561, 115
  %v1568 = vpop.permute.xlu0 %1567
  %1569 = vrot.lane.b32.xlu0 %v1562, 115
  %v1570 = vpop.permute.xlu0 %1569
  %v1571 = vsel %vm591, %v1564, %v1566
  %v1572 = vsel %vm591, %v1568, %v1570
  %v1577 = vsel %vm29, %v1571, 0.0
  %v1578 = vsel %vm1478, %v1566, 0.0
  %v1579 = vadd.f32 %v1577, %v1578
  %v1580 = vsel %vm29, %v1572, 0.0
  %v1581 = vadd.f32 %v1579, %v1580
  %v1582 = vsel %vm1478, %v1570, 0.0
  %v1583 = vadd.f32 %v1581, %v1582
  %1584 = vadd.xlane.f32.xlu0 %v1583
  %v1585 = vpop.xlane.xlu0 %1584
  %v1586 = vmul.f32 %v1552, %v1552
  %v1587 = vmul.f32 %v1553, %v1553
  %1590 = vst [vmem:[#allocation1] ss:$2 sm:$0xff] %v1586
  %v1591 = vld.sshfl [vmem:[#allocation1] sm:$0xff pattern:$0x75316420]
  %v1592 = vld.sshfl [vmem:[#allocation1 + $0x8] sm:$0xff pattern:$0x75316420]
  %s1593 = scalar_lea.vmem [#allocation1], 16
  %1594 = vst [vmem:[%s1593] ss:$2 sm:$0xff] %v1587
  %v1595 = vld.sshfl [vmem:[#allocation1 + $0x10] sm:$0xff pattern:$0x75316420]
  %v1596 = vld.sshfl [vmem:[#allocation1 + $0x18] sm:$0xff pattern:$0x75316420]
  %1597 = vrot.lane.b32.xlu0 %v1591, 115
  %v1598 = vpop.permute.xlu0 %1597
  %1599 = vrot.lane.b32.xlu0 %v1592, 115
  %v1600 = vpop.permute.xlu0 %1599
  %1601 = vrot.lane.b32.xlu0 %v1595, 115
  %v1602 = vpop.permute.xlu0 %1601
  %1603 = vrot.lane.b32.xlu0 %v1596, 115
  %v1604 = vpop.permute.xlu0 %1603
  %v1605 = vsel %vm591, %v1598, %v1600
  %v1606 = vsel %vm591, %v1602, %v1604
  %v1611 = vsel %vm29, %v1605, 0.0
  %v1612 = vsel %vm1478, %v1600, 0.0
  %v1613 = vadd.f32 %v1611, %v1612
  %v1614 = vsel %vm29, %v1606, 0.0
  %v1615 = vadd.f32 %v1613, %v1614
  %v1616 = vsel %vm1478, %v1604, 0.0
  %v1617 = vadd.f32 %v1615, %v1616
  %1618 = vadd.xlane.f32.xlu0 %v1617
  %v1619 = vpop.xlane.xlu0 %1618
  %v1620 = vmul.f32 %v1585, 0.0078125
  %v1621 = vmul.f32 %v1619, 0.0078125
  %v1622 = vmul.f32 %v1620, %v1620
  %v1623 = vsub.f32 %v1621, %v1622
  %v1626 = vunpack.c.l.s4 839922192
  %v1627 = vunpack.c.0.s8 %v1626
  %v1628 = vperm.slane %v1620, %v1627
  %v1630 = vsub.f32 %v1552, %v1628
  %v1631 = vsub.f32 %v1553, %v1628
  %v1632 = vadd.f32 %v1623, 1e-05
  %v1633 = vrsqrt.pop %v1632
  %v1634 = vmul.f32 %v1633, %v1632
  %v1635 = vmul.f32 %v1634, %v1633
  %v1636 = vmul.f32 0.5, %v1635
  %v1637 = vsub.f32 1.5, %v1636
  %v1638 = vmul.f32 %v1633, %v1637
  %vm1639 = vweird.f32 %v1632
  %vm1640 = vweird.f32 %v1633
  %vm1641 = vmor %vm1639, %vm1640
  %v1642 = vsel %vm1641, %v1633, %v1638
  %v1645 = vunpack.c.l.s4 839922192
  %v1646 = vunpack.c.0.s8 %v1645
  %v1647 = vperm.slane %v1642, %v1646
  %v1649 = vmul.f32 %v1630, %v1647
  %v1650 = vmul.f32 %v1631, %v1647
  %v1651 = vmul.f32 %v1649, %v1550
  %v1652 = vmul.f32 %v1650, %v1550
  %1653 = vst [vmem:[#allocation1] ss:$2 sm:$0xff] %v146
  %v1654 = vld.sshfl [vmem:[#allocation1] sm:$0xff pattern:$0x75316420]
  %v1655 = vld.sshfl [vmem:[#allocation1 + $0x8] sm:$0xff pattern:$0x75316420]
  %s1656 = scalar_lea.vmem [#allocation1], 16
  %1657 = vst [vmem:[%s1656] ss:$2 sm:$0xff] %v147
  %v1658 = vld.sshfl [vmem:[#allocation1 + $0x10] sm:$0xff pattern:$0x75316420]
  %v1659 = vld.sshfl [vmem:[#allocation1 + $0x18] sm:$0xff pattern:$0x75316420]
  %1660 = vrot.lane.b32.xlu0 %v1654, 102
  %v1661 = vpop.permute.xlu0 %1660
  %1662 = vrot.lane.b32.xlu0 %v1655, 102
  %v1663 = vpop.permute.xlu0 %1662
  %1664 = vrot.lane.b32.xlu0 %v1658, 102
  %v1665 = vpop.permute.xlu0 %1664
  %1666 = vrot.lane.b32.xlu0 %v1659, 102
  %v1667 = vpop.permute.xlu0 %1666
  %v1668 = vsel %vm1013, %v1661, %v1663
  %v1669 = vsel %vm1013, %v1665, %v1667
  %v1674 = vsel %vm29, %v1668, 0.0
  %v1675 = vsel %vm1478, %v1663, 0.0
  %v1676 = vadd.f32 %v1674, %v1675
  %1677 = vadd.xlane.f32.xlu0 %v1676
  %v1678 = vpop.xlane.xlu0 %1677
  %v1679 = vsel %vm29, %v1669, 0.0
  %v1680 = vsel %vm1478, %v1667, 0.0
  %v1681 = vadd.f32 %v1679, %v1680
  %1682 = vadd.xlane.f32.xlu0 %v1681
  %v1683 = vpop.xlane.xlu0 %1682
  %v1684 = vmul.f32 %v1678, 0.015625
  %v1685 = vmul.f32 %v1683, 0.015625
  %v1686 = vsel %vm29, %v1436, 0.0
  %v1687 = vsel %vm1478, %v1437, 0.0
  %v1688 = vadd.f32 %v1686, %v1687
  %1689 = vadd.xlane.f32.xlu0 %v1688
  %v1690 = vpop.xlane.xlu0 %1689
  %v1691 = vsel %vm29, %v1438, 0.0
  %v1692 = vsel %vm1478, %v1439, 0.0
  %v1693 = vadd.f32 %v1691, %v1692
  %1694 = vadd.xlane.f32.xlu0 %v1693
  %v1695 = vpop.xlane.xlu0 %1694
  %v1696 = vmul.f32 %v1690, 0.015625
  %v1697 = vmul.f32 %v1695, 0.015625
  %v1698 = vsel %vm29, %v1440, 0.0
  %v1699 = vsel %vm1478, %v1441, 0.0
  %v1700 = vadd.f32 %v1698, %v1699
  %1701 = vadd.xlane.f32.xlu0 %v1700
  %v1702 = vpop.xlane.xlu0 %1701
  %v1703 = vsel %vm29, %v1442, 0.0
  %v1704 = vsel %vm1478, %v1443, 0.0
  %v1705 = vadd.f32 %v1703, %v1704
  %1706 = vadd.xlane.f32.xlu0 %v1705
  %v1707 = vpop.xlane.xlu0 %1706
  %v1708 = vmul.f32 %v1702, 0.015625
  %v1709 = vmul.f32 %v1707, 0.015625
  %v1710 = vsel %vm29, %v1444, 0.0
  %v1711 = vsel %vm1478, %v1445, 0.0
  %v1712 = vadd.f32 %v1710, %v1711
  %1713 = vadd.xlane.f32.xlu0 %v1712
  %v1714 = vpop.xlane.xlu0 %1713
  %v1715 = vsel %vm29, %v1446, 0.0
  %v1716 = vsel %vm1478, %v1447, 0.0
  %v1717 = vadd.f32 %v1715, %v1716
  %1718 = vadd.xlane.f32.xlu0 %v1717
  %v1719 = vpop.xlane.xlu0 %1718
  %v1720 = vmul.f32 %v1714, 0.015625
  %v1721 = vmul.f32 %v1719, 0.015625
  %1726 = vrot.lane.b32.xlu0 %v1541, 115
  %v1727 = vpop.permute.xlu0 %1726
  %1728 = vrot.lane.b32.xlu0 %v1542, 115
  %v1729 = vpop.permute.xlu0 %1728
  %1730 = vrot.lane.b32.xlu0 %v1543, 115
  %v1731 = vpop.permute.xlu0 %1730
  %1732 = vrot.lane.b32.xlu0 %v1544, 115
  %v1733 = vpop.permute.xlu0 %1732
  %v1734 = vsel %vm591, %v1727, %v1729
  %v1735 = vsel %vm591, %v1731, %v1733
  %v1740 = vsel %vm29, %v1734, 0.0
  %v1741 = vsel %vm1478, %v1729, 0.0
  %v1742 = vadd.f32 %v1740, %v1741
  %1743 = vadd.xlane.f32.xlu0 %v1742
  %v1744 = vpop.xlane.xlu0 %1743
  %v1745 = vsel %vm29, %v1735, 0.0
  %v1746 = vsel %vm1478, %v1733, 0.0
  %v1747 = vadd.f32 %v1745, %v1746
  %1748 = vadd.xlane.f32.xlu0 %v1747
  %v1749 = vpop.xlane.xlu0 %1748
  %v1750 = vmul.f32 %v1744, 0.015625
  %v1751 = vmul.f32 %v1749, 0.015625
  %1754 = vst [vmem:[#allocation1] ss:$2 sm:$0xff] %v1651
  %v1755 = vld.sshfl [vmem:[#allocation1] sm:$0xff pattern:$0x75316420]
  %v1756 = vld.sshfl [vmem:[#allocation1 + $0x8] sm:$0xff pattern:$0x75316420]
  %s1757 = scalar_lea.vmem [#allocation1], 16
  %1758 = vst [vmem:[%s1757] ss:$2 sm:$0xff] %v1652
  %v1759 = vld.sshfl [vmem:[#allocation1 + $0x10] sm:$0xff pattern:$0x75316420]
  %v1760 = vld.sshfl [vmem:[#allocation1 + $0x18] sm:$0xff pattern:$0x75316420]
  %1761 = vrot.lane.b32.xlu0 %v1755, 115
  %v1762 = vpop.permute.xlu0 %1761
  %1763 = vrot.lane.b32.xlu0 %v1756, 115
  %v1764 = vpop.permute.xlu0 %1763
  %1765 = vrot.lane.b32.xlu0 %v1759, 115
  %v1766 = vpop.permute.xlu0 %1765
  %1767 = vrot.lane.b32.xlu0 %v1760, 115
  %v1768 = vpop.permute.xlu0 %1767
  %v1769 = vsel %vm591, %v1762, %v1764
  %v1770 = vsel %vm591, %v1766, %v1768
  %v1775 = vsel %vm29, %v1769, 0.0
  %v1776 = vsel %vm1478, %v1764, 0.0
  %v1777 = vadd.f32 %v1775, %v1776
  %1778 = vadd.xlane.f32.xlu0 %v1777
  %v1779 = vpop.xlane.xlu0 %1778
  %v1780 = vsel %vm29, %v1770, 0.0
  %v1781 = vsel %vm1478, %v1768, 0.0
  %v1782 = vadd.f32 %v1780, %v1781
  %1783 = vadd.xlane.f32.xlu0 %v1782
  %v1784 = vpop.xlane.xlu0 %1783
  %v1785 = vmul.f32 %v1779, 0.015625
  %v1786 = vmul.f32 %v1784, 0.015625
  %v1789 = vlaneseq
  %v1790 = vand.u32 %v1789, 127
  %v1791 = vperm.slane %v1684, %v1790
  %v1792 = vperm.slane %v1685, %v1790
  %vm1793 = vcmask 1041409
  %v1794 = vsel %vm1793, %v1792, %v1791
  %v1798 = vadd.s32 %v1790, 4294967292
  %v1799 = vperm.slane %v1696, %v1798
  %v1800 = vperm.slane %v1697, %v1798
  %v1801 = vsel %vm1793, %v1800, %v1799
  %v1805 = vadd.s32 %v1790, 4294967288
  %v1806 = vperm.slane %v1708, %v1805
  %v1807 = vperm.slane %v1709, %v1805
  %v1808 = vsel %vm1793, %v1807, %v1806
  %v1812 = vadd.s32 %v1790, 4294967284
  %v1813 = vperm.slane %v1720, %v1812
  %v1814 = vperm.slane %v1721, %v1812
  %v1815 = vsel %vm1793, %v1814, %v1813
  %v1819 = vadd.s32 %v1790, 4294967280
  %v1820 = vperm.slane %v1750, %v1819
  %v1821 = vperm.slane %v1751, %v1819
  %v1822 = vsel %vm1793, %v1821, %v1820
  %v1826 = vadd.s32 %v1790, 4294967276
  %v1827 = vperm.slane %v1785, %v1826
  %v1828 = vperm.slane %v1786, %v1826
  %v1829 = vsel %vm1793, %v1828, %v1827
  %v1831 = vsel %vm1230, %v1794, %v1801
  %vm1832 = vcmask 64512
  %v1833 = vsel %vm1832, %v1831, %v1808
  %vm1834 = vcmask 97280
  %v1835 = vsel %vm1834, %v1833, %v1815
  %vm1836 = vcmask 130048
  %v1837 = vsel %vm1836, %v1835, %v1822
  %vm1838 = vcmask 162816
  %v1839 = vsel %vm1838, %v1837, %v1829
  %v1840 = vld [vmem:[%s5] sm:$0xff]
  %v1841 = vld [vmem:[%s5 + $0x8] sm:$0xff]
  %v1842 = vld [vmem:[%s5 + $0x10] sm:$0xff]
  %vm1843 = vcmask 195584
  %v1845 = vsel %vm1843, %v1839, 0
  %1847 = vmatpush.msra.mxu0 0.0
  %1848 = vmatpush.msra.mxu0 0.0
  %1849 = vmatpush.msra.mxu0 0.0
  %1850 = vmatpush.msra.mxu0 0.0
  %1851 = vmatpush.msra.mxu0 0.0
  %1852 = vmatpush.msra.mxu0 0.0
  %1853 = vmatpush.msra.mxu0 0.0
  %1854 = vmatpush.msra.mxu0 0.0
  %1855 = vmatpush.msra.mxu0 0.0
  %1856 = vmatpush.msra.mxu0 0.0
  %1857 = vmatpush.msra.mxu0 0.0
  %1858 = vmatpush.msra.mxu0 0.0
  %1859 = vmatpush.msra.mxu0 0.0
  %1860 = vmatpush.msra.mxu0 %v1842
  %1861 = vmatpush.msra.mxu0 %v1841
  %1862 = vmatpush.msra.mxu0 %v1840
  %1863 = vmatmul.f32.gmra.mxu0 %v1845
  %v1864 = vpop.f32.mrf.mxu0
  %v1865 = vadd.f32 0.0, %v1864
  %1866 = vdwg.mxu0
  %v1867 = vmax.f32 %v1865, 0.0
  %v1868 = vld [vmem:[%s6] sm:$0x7]
  %vm1869 = vcmask 23552
  %v1871 = vsel %vm1869, %v1867, 0
  %vm1873 = vcmask 1042432
  %v1875 = vsel %vm1873, %v1868, 0
  %1877 = vmatpush.msra.mxu0 0.0
  %1878 = vmatpush.msra.mxu0 0.0
  %1879 = vmatpush.msra.mxu0 0.0
  %1880 = vmatpush.msra.mxu0 0.0
  %1881 = vmatpush.msra.mxu0 0.0
  %1882 = vmatpush.msra.mxu0 0.0
  %1883 = vmatpush.msra.mxu0 0.0
  %1884 = vmatpush.msra.mxu0 0.0
  %1885 = vmatpush.msra.mxu0 0.0
  %1886 = vmatpush.msra.mxu0 0.0
  %1887 = vmatpush.msra.mxu0 0.0
  %1888 = vmatpush.msra.mxu0 0.0
  %1889 = vmatpush.msra.mxu0 0.0
  %1890 = vmatpush.msra.mxu0 0.0
  %1891 = vmatpush.msra.mxu0 0.0
  %1892 = vmatpush.msra.mxu0 %v1875
  %1893 = vmatmul.f32.gmra.mxu0 %v1871
  %v1894 = vpop.f32.mrf.mxu0
  %v1895 = vadd.f32 0.0, %v1894
  %1896 = vdwg.mxu0
  %v1897 = vxor.u32 %v1895, 2147483648
  %v1898 = vmul.f32 %v1897, 1.442695
  %v1899 = vpow.pop %v1898
  %v1900 = vadd.f32 %v1899, 1.0
  %v1901 = vrcp.pop %v1900
  %v1902 = vmul.f32 %v1900, %v1901
  %v1903 = vsub.f32 1.0, %v1902
  %v1904 = vmul.f32 %v1901, %v1903
  %v1905 = vadd.f32 %v1901, %v1904
  %vm1906 = vweird.f32 %v1900
  %vm1907 = vweird.f32 %v1901
  %vm1908 = vmor %vm1906, %vm1907
  %v1909 = vsel %vm1908, %v1901, %v1905
  %v1910 = vand.u32 2147483647, %v1900
  %vm1911 = vcmp.eq.f32.partialorder %v1910, 8.507059e+37
  %v1912 = vand.u32 %v1900, 2147483648
  %v1913 = vor.u32 1.1754944e-38, %v1912
  %v1914 = vsel %vm1911, %v1913, %v1909
  %v1915 = vmul.f32 1.0, %v1914
  %vm1916 = vcmask 189440
  %1917 = vst.msk [vmem:[%s7] sm:$0x3] %vm1916, %v1915
  %v1918 = vperm.slane %v1915, 0
  %v1919 = vlaneseq
  %v1920 = vshrl.u32 %v1919, 7
  %1922 = vset.pattern.permute.xlu0 %v1920
  %1923 = vperm.xlu0 %1922, %v1918
  %v1924 = vpop.permute.xlu0 %1923
  %v1925 = vperm.slane %v1915, 1
  %v1926 = vlaneseq
  %v1927 = vshrl.u32 %v1926, 7
  %1929 = vset.pattern.permute.xlu0 %v1927
  %1930 = vperm.xlu0 %1929, %v1925
  %v1931 = vpop.permute.xlu0 %1930
  %v1935 = vunpack.c.l.s4 839922192
  %v1936 = vunpack.c.0.s8 %v1935
  %v1937 = vperm.slane %v1924, %v1936
  %v1939 = vunpack.c.l.s4 839922192
  %v1940 = vunpack.c.0.s8 %v1939
  %v1941 = vperm.slane %v1931, %v1940
  %v1944 = vmul.f32 %v146, %v1937
  %v1945 = vmul.f32 %v147, %v1941
  %v1946 = vadd.f32 %v1944, 0.0
  %v1947 = vadd.f32 %v1945, 0.0
  %v1948 = vlaneseq
  %v1949 = vshrl.u32 %v1948, 7
  %v1950 = vadd.s32 %v1949, 4
  %1951 = vset.pattern.permute.xlu0 %v1950
  %1952 = vperm.xlu0 %1951, %v1918
  %v1953 = vpop.permute.xlu0 %1952
  %v1954 = vlaneseq
  %v1955 = vshrl.u32 %v1954, 7
  %v1956 = vadd.s32 %v1955, 4
  %1957 = vset.pattern.permute.xlu0 %v1956
  %1958 = vperm.xlu0 %1957, %v1925
  %v1959 = vpop.permute.xlu0 %1958
  %v1960 = vmul.f32 %v1436, %v1953
  %v1961 = vmul.f32 %v1437, %v1953
  %v1962 = vmul.f32 %v1438, %v1959
  %v1963 = vmul.f32 %v1439, %v1959
  %v1968 = vrot.slane %v1961, 4
  %v1969 = vrot.slane %v1963, 4
  %v1970 = vsel %vm29, %v1960, %v1968
  %v1971 = vsel %vm29, %v1962, %v1969
  %1972 = vrot.lane.b32.xlu0 %v1970, 26
  %v1973 = vpop.permute.xlu0 %1972
  %1974 = vrot.lane.b32.xlu0 %v1971, 26
  %v1975 = vpop.permute.xlu0 %1974
  %v1976 = vrot.slane %v1973, 4
  %v1977 = vrot.slane %v1975, 4
  %vm1978 = vcmask 211968
  %v1979 = vsel %vm1978, %v1976, %v1973
  %v1980 = vsel %vm1978, %v1977, %v1975
  %v1983 = vadd.f32 %v1946, %v1979
  %v1984 = vadd.f32 %v1947, %v1980
  %v1985 = vlaneseq
  %v1986 = vshrl.u32 %v1985, 7
  %v1987 = vadd.s32 %v1986, 8
  %1988 = vset.pattern.permute.xlu0 %v1987
  %1989 = vperm.xlu0 %1988, %v1918
  %v1990 = vpop.permute.xlu0 %1989
  %v1991 = vlaneseq
  %v1992 = vshrl.u32 %v1991, 7
  %v1993 = vadd.s32 %v1992, 8
  %1994 = vset.pattern.permute.xlu0 %v1993
  %1995 = vperm.xlu0 %1994, %v1925
  %v1996 = vpop.permute.xlu0 %1995
  %v1997 = vmul.f32 %v1440, %v1990
  %v1998 = vmul.f32 %v1441, %v1990
  %v1999 = vmul.f32 %v1442, %v1996
  %v2000 = vmul.f32 %v1443, %v1996
  %v2005 = vrot.slane %v1998, 4
  %v2006 = vrot.slane %v2000, 4
  %v2007 = vsel %vm29, %v1997, %v2005
  %v2008 = vsel %vm29, %v1999, %v2006
  %2009 = vrot.lane.b32.xlu0 %v2007, 26
  %v2010 = vpop.permute.xlu0 %2009
  %2011 = vrot.lane.b32.xlu0 %v2008, 26
  %v2012 = vpop.permute.xlu0 %2011
  %v2013 = vrot.slane %v2010, 4
  %v2014 = vrot.slane %v2012, 4
  %v2015 = vsel %vm1978, %v2013, %v2010
  %v2016 = vsel %vm1978, %v2014, %v2012
  %v2019 = vadd.f32 %v1983, %v2015
  %v2020 = vadd.f32 %v1984, %v2016
  %v2021 = vlaneseq
  %v2022 = vshrl.u32 %v2021, 7
  %v2023 = vadd.s32 %v2022, 12
  %2024 = vset.pattern.permute.xlu0 %v2023
  %2025 = vperm.xlu0 %2024, %v1918
  %v2026 = vpop.permute.xlu0 %2025
  %v2027 = vlaneseq
  %v2028 = vshrl.u32 %v2027, 7
  %v2029 = vadd.s32 %v2028, 12
  %2030 = vset.pattern.permute.xlu0 %v2029
  %2031 = vperm.xlu0 %2030, %v1925
  %v2032 = vpop.permute.xlu0 %2031
  %v2033 = vmul.f32 %v1444, %v2026
  %v2034 = vmul.f32 %v1445, %v2026
  %v2035 = vmul.f32 %v1446, %v2032
  %v2036 = vmul.f32 %v1447, %v2032
  %v2041 = vrot.slane %v2034, 4
  %v2042 = vrot.slane %v2036, 4
  %v2043 = vsel %vm29, %v2033, %v2041
  %v2044 = vsel %vm29, %v2035, %v2042
  %2045 = vrot.lane.b32.xlu0 %v2043, 26
  %v2046 = vpop.permute.xlu0 %2045
  %2047 = vrot.lane.b32.xlu0 %v2044, 26
  %v2048 = vpop.permute.xlu0 %2047
  %v2049 = vrot.slane %v2046, 4
  %v2050 = vrot.slane %v2048, 4
  %v2051 = vsel %vm1978, %v2049, %v2046
  %v2052 = vsel %vm1978, %v2050, %v2048
  %v2055 = vadd.f32 %v2019, %v2051
  %v2056 = vadd.f32 %v2020, %v2052
  %v2057 = vlaneseq
  %v2058 = vshrl.u32 %v2057, 7
  %v2059 = vadd.s32 %v2058, 16
  %2060 = vset.pattern.permute.xlu0 %v2059
  %2061 = vperm.xlu0 %2060, %v1918
  %v2062 = vpop.permute.xlu0 %2061
  %v2063 = vlaneseq
  %v2064 = vshrl.u32 %v2063, 7
  %v2065 = vadd.s32 %v2064, 16
  %2066 = vset.pattern.permute.xlu0 %v2065
  %2067 = vperm.xlu0 %2066, %v1925
  %v2068 = vpop.permute.xlu0 %2067
  %v2069 = vmul.f32 %v1541, %v2062
  %v2070 = vmul.f32 %v1542, %v2062
  %v2071 = vmul.f32 %v1543, %v2068
  %v2072 = vmul.f32 %v1544, %v2068
  %v2077 = vrot.slane %v2070, 4
  %v2078 = vrot.slane %v2072, 4
  %v2079 = vsel %vm29, %v2069, %v2077
  %v2080 = vsel %vm29, %v2071, %v2078
  %2081 = vrot.lane.b32.xlu0 %v2079, 13
  %v2082 = vpop.permute.xlu0 %2081
  %2083 = vrot.lane.b32.xlu0 %v2080, 13
  %v2084 = vpop.permute.xlu0 %2083
  %v2085 = vrot.slane %v2082, 4
  %v2086 = vrot.slane %v2084, 4
  %vm2087 = vcmask 105472
  %v2088 = vsel %vm2087, %v2085, %v2082
  %v2089 = vsel %vm2087, %v2086, %v2084
  %v2092 = vadd.f32 %v2055, %v2088
  %v2093 = vadd.f32 %v2056, %v2089
  %v2094 = vlaneseq
  %v2095 = vshrl.u32 %v2094, 7
  %v2096 = vadd.s32 %v2095, 20
  %2097 = vset.pattern.permute.xlu0 %v2096
  %2098 = vperm.xlu0 %2097, %v1918
  %v2099 = vpop.permute.xlu0 %2098
  %v2100 = vlaneseq
  %v2101 = vshrl.u32 %v2100, 7
  %v2102 = vadd.s32 %v2101, 20
  %2103 = vset.pattern.permute.xlu0 %v2102
  %2104 = vperm.xlu0 %2103, %v1925
  %v2105 = vpop.permute.xlu0 %2104
  %v2109 = vunpack.c.l.s4 839922192
  %v2110 = vunpack.c.0.s8 %v2109
  %v2111 = vperm.slane %v2099, %v2110
  %v2113 = vunpack.c.l.s4 839922192
  %v2114 = vunpack.c.0.s8 %v2113
  %v2115 = vperm.slane %v2105, %v2114
  %v2118 = vmul.f32 %v1651, %v2111
  %v2119 = vmul.f32 %v1652, %v2115
  %2122 = vrot.lane.b32.xlu0 %v2118, 13
  %v2123 = vpop.permute.xlu0 %2122
  %2124 = vrot.lane.b32.xlu0 %v2119, 13
  %v2125 = vpop.permute.xlu0 %2124
  %v2126 = vrot.slane %v2123, 4
  %v2127 = vrot.slane %v2125, 4
  %v2128 = vsel %vm2087, %v2126, %v2123
  %v2129 = vsel %vm2087, %v2127, %v2125
  %v2132 = vadd.f32 %v2092, %v2128
  %v2133 = vadd.f32 %v2093, %v2129
  %2136 = vst [vmem:[#allocation1] ss:$2 sm:$0xff] %v2132
  %v2137 = vld.sshfl [vmem:[#allocation1] sm:$0xff pattern:$0x75316420]
  %s2138 = scalar_lea.vmem [#allocation1], 16
  %2139 = vst [vmem:[%s2138] ss:$2 sm:$0xff] %v2133
  %v2140 = vld.sshfl [vmem:[#allocation1 + $0x10] sm:$0xff pattern:$0x75316420]
  %2141 = vrot.lane.b32.xlu0 %v2137, 76
  %v2142 = vpop.permute.xlu0 %2141
  %2143 = vrot.lane.b32.xlu0 %v2140, 76
  %v2144 = vpop.permute.xlu0 %2143
  %vm2147 = vcmask 60416
  %2148 = vst.msk [vmem:[%s8] sm:$0xf] %vm2147, %v2142
  %2149 = vst.msk [vmem:[%s8 + $0x4] sm:$0xf] %vm2147, %v2144
  %2150 = vst [vmem:[#allocation1] ss:$2 sm:$0xff] %v2132
  %v2151 = vld.sshfl [vmem:[#allocation1] sm:$0xff pattern:$0x75316420]
  %s2152 = scalar_lea.vmem [#allocation1], 16
  %2153 = vst [vmem:[%s2152] ss:$2 sm:$0xff] %v2133
  %v2154 = vld.sshfl [vmem:[#allocation1 + $0x10] sm:$0xff pattern:$0x75316420]
  %2155 = vrot.lane.b32.xlu0 %v2151, 72
  %v2156 = vpop.permute.xlu0 %2155
  %2157 = vrot.lane.b32.xlu0 %v2154, 72
  %v2158 = vpop.permute.xlu0 %2157
  %2161 = vst.msk [vmem:[%s8] sm:$0xf] %vm142, %v2156
  %2162 = vst.msk [vmem:[%s8 + $0x4] sm:$0xf] %vm142, %v2158
  %2163 = vst [vmem:[#allocation1] ss:$2 sm:$0xff] %v2132
  %v2164 = vld.sshfl [vmem:[#allocation1] sm:$0xff pattern:$0x75316420]
  %s2165 = scalar_lea.vmem [#allocation1], 16
  %2166 = vst [vmem:[%s2165] ss:$2 sm:$0xff] %v2133
  %v2167 = vld.sshfl [vmem:[#allocation1 + $0x10] sm:$0xff pattern:$0x75316420]
  %2168 = vrot.lane.b32.xlu0 %v2164, 68
  %v2169 = vpop.permute.xlu0 %2168
  %2170 = vrot.lane.b32.xlu0 %v2167, 68
  %v2171 = vpop.permute.xlu0 %2170
  %vm2174 = vcmask 191616
  %2175 = vst.msk [vmem:[%s8] sm:$0xf] %vm2174, %v2169
  %2176 = vst.msk [vmem:[%s8 + $0x4] sm:$0xf] %vm2174, %v2171
  %2177 = vst [vmem:[#allocation1] ss:$2 sm:$0xff] %v2132
  %v2178 = vld.sshfl [vmem:[#allocation1] sm:$0xff pattern:$0x75316420]
  %s2179 = scalar_lea.vmem [#allocation1], 16
  %2180 = vst [vmem:[%s2179] ss:$2 sm:$0xff] %v2133
  %v2181 = vld.sshfl [vmem:[#allocation1 + $0x10] sm:$0xff pattern:$0x75316420]
  %2182 = vrot.lane.b32.xlu0 %v2178, 64
  %v2183 = vpop.permute.xlu0 %2182
  %2184 = vrot.lane.b32.xlu0 %v2181, 64
  %v2185 = vpop.permute.xlu0 %2184
  %vm2188 = vcmask 257216
  %2189 = vst.msk [vmem:[%s8] sm:$0xf] %vm2188, %v2183
  %2190 = vst.msk [vmem:[%s8 + $0x4] sm:$0xf] %vm2188, %v2185
  %2191 = vst [vmem:[#allocation1] ss:$2 sm:$0xff] %v2132
  %v2192 = vld.sshfl [vmem:[#allocation1] sm:$0xff pattern:$0x75316420]
  %s2193 = scalar_lea.vmem [#allocation1], 16
  %2194 = vst [vmem:[%s2193] ss:$2 sm:$0xff] %v2133
  %v2195 = vld.sshfl [vmem:[#allocation1 + $0x10] sm:$0xff pattern:$0x75316420]
  %2196 = vrot.lane.b32.xlu0 %v2192, 60
  %v2197 = vpop.permute.xlu0 %2196
  %2198 = vrot.lane.b32.xlu0 %v2195, 60
  %v2199 = vpop.permute.xlu0 %2198
  %vm2202 = vcmask 322816
  %2203 = vst.msk [vmem:[%s8] sm:$0xf] %vm2202, %v2197
  %2204 = vst.msk [vmem:[%s8 + $0x4] sm:$0xf] %vm2202, %v2199
  %2205 = vst [vmem:[#allocation1] ss:$2 sm:$0xff] %v2132
  %v2206 = vld.sshfl [vmem:[#allocation1] sm:$0xff pattern:$0x75316420]
  %s2207 = scalar_lea.vmem [#allocation1], 16
  %2208 = vst [vmem:[%s2207] ss:$2 sm:$0xff] %v2133
  %v2209 = vld.sshfl [vmem:[#allocation1 + $0x10] sm:$0xff pattern:$0x75316420]
  %2210 = vrot.lane.b32.xlu0 %v2206, 56
  %v2211 = vpop.permute.xlu0 %2210
  %2212 = vrot.lane.b32.xlu0 %v2209, 56
  %v2213 = vpop.permute.xlu0 %2212
  %vm2216 = vcmask 388416
  %2217 = vst.msk [vmem:[%s8] sm:$0xf] %vm2216, %v2211
  %2218 = vst.msk [vmem:[%s8 + $0x4] sm:$0xf] %vm2216, %v2213
  %2219 = vst [vmem:[#allocation1] ss:$2 sm:$0xff] %v2132
  %v2220 = vld.sshfl [vmem:[#allocation1] sm:$0xff pattern:$0x75316420]
  %v2221 = vld.sshfl [vmem:[#allocation1 + $0x8] sm:$0xff pattern:$0x75316420]
  %s2222 = scalar_lea.vmem [#allocation1], 16
  %2223 = vst [vmem:[%s2222] ss:$2 sm:$0xff] %v2133
  %v2224 = vld.sshfl [vmem:[#allocation1 + $0x10] sm:$0xff pattern:$0x75316420]
  %v2225 = vld.sshfl [vmem:[#allocation1 + $0x18] sm:$0xff pattern:$0x75316420]
  %2226 = vrot.lane.b32.xlu0 %v2220, 52
  %v2227 = vpop.permute.xlu0 %2226
  %2228 = vrot.lane.b32.xlu0 %v2221, 52
  %v2229 = vpop.permute.xlu0 %2228
  %2230 = vrot.lane.b32.xlu0 %v2224, 52
  %v2231 = vpop.permute.xlu0 %2230
  %2232 = vrot.lane.b32.xlu0 %v2225, 52
  %v2233 = vpop.permute.xlu0 %2232
  %vm2234 = vcmask 424960
  %v2235 = vsel %vm2234, %v2227, %v2229
  %v2236 = vsel %vm2234, %v2231, %v2233
  %vm2239 = vcmask 454016
  %2240 = vst.msk [vmem:[%s8] sm:$0xf] %vm2239, %v2235
  %2241 = vst.msk [vmem:[%s8 + $0x4] sm:$0xf] %vm2239, %v2236
  %2242 = vst [vmem:[#allocation1] ss:$2 sm:$0xff] %v2132
  %v2243 = vld.sshfl [vmem:[#allocation1 + $0x8] sm:$0xff pattern:$0x75316420]
  %s2244 = scalar_lea.vmem [#allocation1], 16
  %2245 = vst [vmem:[%s2244] ss:$2 sm:$0xff] %v2133
  %v2246 = vld.sshfl [vmem:[#allocation1 + $0x18] sm:$0xff pattern:$0x75316420]
  %2247 = vrot.lane.b32.xlu0 %v2243, 48
  %v2248 = vpop.permute.xlu0 %2247
  %2249 = vrot.lane.b32.xlu0 %v2246, 48
  %v2250 = vpop.permute.xlu0 %2249
  %vm2253 = vcmask 519616
  %2254 = vst.msk [vmem:[%s8] sm:$0xf] %vm2253, %v2248
  %2255 = vst.msk [vmem:[%s8 + $0x4] sm:$0xf] %vm2253, %v2250
  // Predicated region
  $region30: #{mixed_op_forward.3} parent=0 // pred_check
    _
  $region31: #{mixed_op_forward.3} parent=0 // pred_check_branch
    %2257 = sbr.rel (0) target = $region33
  $region32: #{mixed_op_forward.3} parent=0 // pred_region
    _
  $region33: #{mixed_op_forward.3} parent=0 // pred_fallthru
    _
  // Predicated region
  $region34: #{mixed_op_forward.3} parent=0 // pred_check
    _
  $region35: #{mixed_op_forward.3} parent=0 // pred_check_branch
    %2259 = sbr.rel (0) target = $region37
  $region36: #{mixed_op_forward.3} parent=0 // pred_region
    _
  $region37: #{mixed_op_forward.3} parent=0 // pred_fallthru
    _
  // Predicated region
  $region38: #{mixed_op_forward.3} parent=0 // pred_check
    _
  $region39: #{mixed_op_forward.3} parent=0 // pred_check_branch
    %2261 = sbr.rel (0) target = $region41
  $region40: #{mixed_op_forward.3} parent=0 // pred_region
    _
  $region41: #{mixed_op_forward.3} parent=0 // pred_fallthru
    _
  // Predicated region
  $region42: #{mixed_op_forward.3} parent=0 // pred_check
    _
  $region43: #{mixed_op_forward.3} parent=0 // pred_check_branch
    %2263 = sbr.rel (0) target = $region45
  $region44: #{mixed_op_forward.3} parent=0 // pred_region
    _
  $region45: #{mixed_op_forward.3} parent=0 // pred_fallthru
    _

</llo_original>
